<compile_context>
chip_gen: v5e
topology: v5e:2x2
jax: 0.10.0
libtpu: 0.0.40
codegen_flags: <defaults>
</compile_context>

<pallas_src>
import functools
import math

import jax
import jax.numpy as jnp
from jax.experimental import pallas as pl
from jax.experimental.pallas import tpu as pltpu


# ----------------------------------------------------------------------------
# helpers
# ----------------------------------------------------------------------------
def _round_up(x, m):
    return (x + m - 1) // m * m


def _pick_row_tile(rows, row_bytes, budget=2 << 20, max_tile=1024):
    """Pick a sublane(row) tile: multiple of 8, ~`budget` bytes of x-tile, >=2 grid steps
    when there is enough work (so v7x's two TensorCores both get rows)."""
    t = (budget // max(row_bytes, 1)) // 8 * 8
    t = max(8, min(max_tile, t))
    rp = _round_up(rows, 8)
    if t >= rp:
        t = rp
        if rp >= 16:
            t = _round_up(rp // 2, 8)
    return t


def _apply_act(y, act, slope):
    if act == "relu":
        return jnp.maximum(y, 0.0)
    if act == "leaky":
        return jnp.where(y >= 0, y, slope * y)
    return y


# ----------------------------------------------------------------------------
# Pallas kernels
# ----------------------------------------------------------------------------
def _mm_bn_act_kernel(x_ref, w_ref, s_ref, b_ref, o_ref, *, act, slope):
    # act( (X @ W) * scale + bias )   -- conv (im2col) + folded BN + activation
    y = jnp.dot(x_ref[...], w_ref[...], preferred_element_type=jnp.float32)
    y = y * s_ref[...] + b_ref[...]
    o_ref[...] = _apply_act(y, act, slope).astype(o_ref.dtype)


def _mm_bn_res_act_kernel(x_ref, w_ref, s_ref, b_ref, r_ref, o_ref, *, act, slope):
    # act( (X @ W) * scale + bias + residual )  -- last bottleneck conv fused with the
    # residual add and the ResBlock's final ReLU.
    y = jnp.dot(x_ref[...], w_ref[...], preferred_element_type=jnp.float32)
    y = y * s_ref[...] + b_ref[...] + r_ref[...]
    o_ref[...] = _apply_act(y, act, slope).astype(o_ref.dtype)


def _max9_kernel(x_ref, o_ref):
    # max over the 9 (dh, dw) window taps of the 3x3 spatial max-pool
    o_ref[...] = jnp.max(x_ref[...], axis=0)


# ----------------------------------------------------------------------------
# fused matmul (+BN +act [+residual]) wrapper
# ----------------------------------------------------------------------------
def fused_matmul_bn_act(x, w, scale, bias, *, act="none", slope=0.0, residual=None):
    R, K = x.shape
    Kw, C = w.shape
    assert K == Kw

    row_bytes = 4 * (K + C + (C if residual is not None else 0))
    tile_r = _pick_row_tile(R, row_bytes)
    Rp = _round_up(R, tile_r)
    if Rp != R:  # pad rows so the grid divides exactly (no dropped rows, no OOB blocks)
        x = jnp.pad(x, ((0, Rp - R), (0, 0)))
        if residual is not None:
            residual = jnp.pad(residual, ((0, Rp - R), (0, 0)))

    scale2 = scale.reshape(1, C).astype(jnp.float32)
    bias2 = bias.reshape(1, C).astype(jnp.float32)

    in_specs = [
        pl.BlockSpec((tile_r, K), lambda i: (i, 0)),   # x rows
        pl.BlockSpec((K, C), lambda i: (0, 0)),        # full weight, resident
        pl.BlockSpec((1, C), lambda i: (0, 0)),        # folded BN scale
        pl.BlockSpec((1, C), lambda i: (0, 0)),        # folded BN bias
    ]
    args = [x, w.astype(jnp.float32), scale2, bias2]
    if residual is None:
        kern = functools.partial(_mm_bn_act_kernel, act=act, slope=slope)
    else:
        in_specs.append(pl.BlockSpec((tile_r, C), lambda i: (i, 0)))
        args.append(residual.astype(jnp.float32))
        kern = functools.partial(_mm_bn_res_act_kernel, act=act, slope=slope)

    bytes_acc = 4 * (Rp * K + K * C + 2 * C + Rp * C
                     + (Rp * C if residual is not None else 0))
    out = pl.pallas_call(
        kern,
        out_shape=jax.ShapeDtypeStruct((Rp, C), jnp.float32),
        grid=(Rp // tile_r,),
        in_specs=in_specs,
        out_specs=pl.BlockSpec((tile_r, C), lambda i: (i, 0)),
        compiler_params=pltpu.CompilerParams(dimension_semantics=("parallel",)),
        cost_estimate=pl.CostEstimate(flops=2 * Rp * K * C, transcendentals=0,
                                      bytes_accessed=bytes_acc),
    )(*args)
    return out[:R]


# ----------------------------------------------------------------------------
# conv3d (PyTorch NCDHW weight layout) as im2col + fused Pallas matmul
# ----------------------------------------------------------------------------
def conv3d_bn_act(x, w, *, stride, padding, scale, bias, act="none", slope=0.0,
                  residual=None):
    """x: (N, T, H, W, Cin) channels-last.  w: (Cout, Cin, kt, kh, kw).
    Computes act(BN(conv3d(x, w)) [+ residual]) with BN folded into scale/bias."""
    N, T, H, W, Cin = x.shape
    Cout, _, kt, kh, kw = w.shape
    st, sh, sw = stride
    pt, ph, pw = padding
    To = (T + 2 * pt - kt) // st + 1
    Ho = (H + 2 * ph - kh) // sh + 1
    Wo = (W + 2 * pw - kw) // sw + 1

    xp = jnp.pad(x, ((0, 0), (pt, pt), (ph, ph), (pw, pw), (0, 0)))
    slabs = []
    for dt in range(kt):
        for dh in range(kh):
            for dw in range(kw):
                slabs.append(xp[:, dt:dt + st * To:st,
                                dh:dh + sh * Ho:sh,
                                dw:dw + sw * Wo:sw, :])
    patches = slabs[0] if len(slabs) == 1 else jnp.stack(slabs, axis=-2)
    K = kt * kh * kw * Cin
    Xm = patches.reshape(N * To * Ho * Wo, K)
    Wm = jnp.transpose(w, (2, 3, 4, 1, 0)).reshape(K, Cout)  # (dt,dh,dw,ci) -> co
    res_rows = None if residual is None else residual.reshape(N * To * Ho * Wo, Cout)
    out = fused_matmul_bn_act(Xm, Wm, scale, bias, act=act, slope=slope,
                              residual=res_rows)
    return out.reshape(N, To, Ho, Wo, Cout)


# ----------------------------------------------------------------------------
# MaxPool3d(kernel=[1,3,3], stride=[1,2,2], padding=[0,1,1]) as a 9-tap max kernel
# ----------------------------------------------------------------------------
def maxpool_1x3x3_s2(x):
    N, T, H, W, C = x.shape
    Ho = (H + 2 - 3) // 2 + 1
    Wo = (W + 2 - 3) // 2 + 1
    xp = jnp.pad(x, ((0, 0), (0, 0), (1, 1), (1, 1), (0, 0)),
                 constant_values=-jnp.inf)
    views = []
    for dh in range(3):
        for dw in range(3):
            v = xp[:, :, dh:dh + 2 * Ho:2, dw:dw + 2 * Wo:2, :]
            views.append(v.reshape(N * T * Ho, Wo * C))   # lane-dense: Wo*C lanes
    stacked = jnp.stack(views, axis=0)                     # (9, rows, Wo*C)

    rows, lanes = N * T * Ho, Wo * C
    tile_r = _pick_row_tile(rows, 4 * 10 * lanes)
    Rp = _round_up(rows, tile_r)
    if Rp != rows:
        stacked = jnp.pad(stacked, ((0, 0), (0, Rp - rows), (0, 0)))

    out = pl.pallas_call(
        _max9_kernel,
        out_shape=jax.ShapeDtypeStruct((Rp, lanes), jnp.float32),
        grid=(Rp // tile_r,),
        in_specs=[pl.BlockSpec((9, tile_r, lanes), lambda i: (0, i, 0))],
        out_specs=pl.BlockSpec((tile_r, lanes), lambda i: (i, 0)),
        compiler_params=pltpu.CompilerParams(dimension_semantics=("parallel",)),
        cost_estimate=pl.CostEstimate(flops=9 * Rp * lanes, transcendentals=0,
                                      bytes_accessed=4 * 10 * Rp * lanes),
    )(stacked)
    return out[:rows].reshape(N, T, Ho, Wo, C)


# ----------------------------------------------------------------------------
# parameter construction / transforms
# ----------------------------------------------------------------------------
def bn_fold(bn, conv_bias=None, eps=1e-5):
    """Fold eval-mode BatchNorm (and an optional preceding conv bias) into scale/bias."""
    scale = bn["gamma"] / jnp.sqrt(bn["var"] + eps)
    cb = 0.0 if conv_bias is None else conv_bias
    bias = bn["beta"] + scale * (cb - bn["mean"])
    return scale, bias


def symmetric_weightnorm_weight(w_base):
    """SymmetricConv3d: stack 4 rot90 copies along Cout, then the module's weight-norm."""
    rots = [jnp.rot90(w_base, k, axes=(3, 4)) for k in range(4)]
    w = jnp.concatenate(rots, axis=0)                       # (64, 3, 5, 7, 7)
    denom = jnp.sqrt((w ** 2).sum(axis=1, keepdims=True)
                               .sum(axis=2, keepdims=True)
                               .sum(axis=3, keepdims=True))
    return w / denom


def _bn_params(c):
    # fresh-module defaults (eval mode): gamma=1, beta=0, running_mean=0, running_var=1
    return {"gamma": jnp.ones((c,), jnp.float32), "beta": jnp.zeros((c,), jnp.float32),
            "mean": jnp.zeros((c,), jnp.float32), "var": jnp.ones((c,), jnp.float32)}


def init_params(key):
    ks = jax.random.split(key, 10)

    def u(k, shape, fan_in):
        bound = 1.0 / math.sqrt(fan_in)
        return jax.random.uniform(k, shape, jnp.float32, -bound, bound)

    kk = 1.0 / (3 * 5 * 7 * 7)
    p = {
        # SymmetricConv3d base weight (16,3,5,7,7): 2*sqrt(k)*(rand-0.5) as in the module
        "conv1_w_base": 2.0 * math.sqrt(kk)
                        * (jax.random.uniform(ks[0], (16, 3, 5, 7, 7), jnp.float32) - 0.5),
        "skip_w": u(ks[1], (32, 64, 1, 1, 1), 64),
        "skip_b": u(ks[2], (32,), 64),
        "res0": {"branch1_w": u(ks[3], (32, 64, 1, 1, 1), 64),
                 "a_w": u(ks[4], (8, 64, 3, 1, 1), 64 * 3),
                 "b_w": u(ks[5], (8, 8, 1, 3, 3), 8 * 9),
                 "c_w": u(ks[6], (32, 8, 1, 1, 1), 8)},
        "res1": {"a_w": u(ks[7], (8, 32, 3, 1, 1), 32 * 3),
                 "b_w": u(ks[8], (8, 8, 1, 3, 3), 8 * 9),
                 "c_w": u(ks[9], (32, 8, 1, 1, 1), 8)},
        "bn1": _bn_params(64),
        "bn_skip": _bn_params(32),
        "res0_bn": {"branch1": _bn_params(32), "a": _bn_params(8),
                    "b": _bn_params(8), "c": _bn_params(32)},
        "res1_bn": {"a": _bn_params(8), "b": _bn_params(8), "c": _bn_params(32)},
    }
    return p


# ----------------------------------------------------------------------------
# model forward
# ----------------------------------------------------------------------------
def res_block(x, pw, pbn, *, has_branch1):
    """ResBlock with BottleneckTransform (inner dim 8, temporal k=3, stride 1)."""
    if has_branch1:
        s, b = bn_fold(pbn["branch1"])
        shortcut = conv3d_bn_act(x, pw["branch1_w"], stride=(1, 1, 1), padding=(0, 0, 0),
                                 scale=s, bias=b, act="none")
    else:
        shortcut = x
    # a: [3,1,1] temporal conv -> BN -> ReLU
    s, b = bn_fold(pbn["a"])
    h = conv3d_bn_act(x, pw["a_w"], stride=(1, 1, 1),
                      padding=(pw["a_w"].shape[2] // 2, 0, 0),
                      scale=s, bias=b, act="relu")
    # b: [1,3,3] spatial conv -> BN -> ReLU
    s, b = bn_fold(pbn["b"])
    h = conv3d_bn_act(h, pw["b_w"], stride=(1, 1, 1), padding=(0, 1, 1),
                      scale=s, bias=b, act="relu")
    # c: 1x1x1 conv -> BN, fused with residual add + final ReLU
    s, b = bn_fold(pbn["c"])
    return conv3d_bn_act(h, pw["c_w"], stride=(1, 1, 1), padding=(0, 0, 0),
                         scale=s, bias=b, act="relu", residual=shortcut)


def v1net_forward(x_ncthw, params):
    # NCTHW -> NTHWC so channels sit on the lane axis
    x = jnp.transpose(x_ncthw, (0, 2, 3, 4, 1)).astype(jnp.float32)

    # ---- s1: ShallowNet(SymmetricConv3d[5,7,7]/s[1,2,2] + BN + LeakyReLU(0.1) + MaxPool)
    w1 = symmetric_weightnorm_weight(params["conv1_w_base"])       # (64,3,5,7,7)
    s, b = bn_fold(params["bn1"])
    x = conv3d_bn_act(x, w1, stride=(1, 2, 2), padding=(2, 3, 3),
                      scale=s, bias=b, act="leaky", slope=0.1)      # (N,T,H/2,W/2,64)
    x0 = maxpool_1x3x3_s2(x)                                        # (N,T,H/4,W/4,64)
    # ShallowNet dropout_rate=0 -> no dropout

    # ---- skip branch: 1x1x1 conv (+bias) -> BN -> LeakyReLU(0.01)
    s, b = bn_fold(params["bn_skip"], conv_bias=params["skip_b"])
    skipped = conv3d_bn_act(x0, params["skip_w"], stride=(1, 1, 1), padding=(0, 0, 0),
                            scale=s, bias=b, act="leaky", slope=0.01)  # (...,32)

    # ---- residual blocks (drop-connect is training-only -> identity at inference)
    x1 = res_block(x0, params["res0"], params["res0_bn"], has_branch1=True)   # 64->32
    x2 = res_block(x1, params["res1"], params["res1_bn"], has_branch1=False)  # 32->32

    # ---- cat([skipped, x2], channels); Dropout3d(0.1) is identity at inference
    out = jnp.concatenate([skipped, x2], axis=-1)                   # (N,T,h,w,64)
    return jnp.transpose(out, (0, 4, 1, 2, 3))                      # back to (N,C,T,H,W)


if __name__ == "__main__":
    key = jax.random.PRNGKey(0)
    kx, kp = jax.random.split(key)
    # Small video-shaped input, PyTorch Conv3d layout (N, C, T, H, W)
    x = jax.random.normal(kx, (2, 3, 4, 16, 16), dtype=jnp.float32)
    params = init_params(kp)

    fwd = jax.jit(v1net_forward)
    y = jax.block_until_ready(fwd(x, params))

    assert y.shape == (2, 64, 4, 4, 4), f"unexpected output shape {y.shape}"
    assert y.dtype == jnp.float32, f"unexpected dtype {y.dtype}"
    assert bool(jnp.all(jnp.isfinite(y))), "non-finite values in output"
    print("KERNEL_OK")
</pallas_src>

<mosaic_0001>
module attributes {stable_mosaic.version = 11 : i64} {
  func.func @_mm_bn_act_kernel(%arg0: i32, %arg1: memref<256x735xf32, #tpu.memory_space<vmem>>, %arg2: memref<735x64xf32, #tpu.memory_space<vmem>>, %arg3: memref<1x64xf32, #tpu.memory_space<vmem>>, %arg4: memref<1x64xf32, #tpu.memory_space<vmem>>, %arg5: memref<256x64xf32, #tpu.memory_space<vmem>>) attributes {dimension_semantics = [#tpu.dimension_semantics<parallel>], iteration_bounds = array<i64: 2>, scalar_prefetch = 0 : i64, scratch_operands = 0 : i64, tpu.core_type = #tpu.core_type<tc>, window_params = [{transform_indices = @transform_0, window_bounds = array<i64: 256, 735>}, {pipeline_mode = #tpu.pipeline_mode<synchronous>, transform_indices = @transform_1, window_bounds = array<i64: 735, 64>}, {pipeline_mode = #tpu.pipeline_mode<synchronous>, transform_indices = @transform_2, window_bounds = array<i64: 1, 64>}, {pipeline_mode = #tpu.pipeline_mode<synchronous>, transform_indices = @transform_3, window_bounds = array<i64: 1, 64>}, {transform_indices = @transform_4, window_bounds = array<i64: 256, 64>}]} {
    %c0 = arith.constant 0 : index
    %c0_0 = arith.constant 0 : index
    %0 = vector.load %arg1[%c0, %c0_0] : memref<256x735xf32, #tpu.memory_space<vmem>>, vector<256x735xf32>
    %c0_1 = arith.constant 0 : index
    %c0_2 = arith.constant 0 : index
    %1 = vector.load %arg2[%c0_1, %c0_2] : memref<735x64xf32, #tpu.memory_space<vmem>>, vector<735x64xf32>
    %cst = arith.constant dense<0.000000e+00> : vector<256x64xf32>
    %2 = tpu.matmul %0, %1, %cst {dimension_numbers = #tpu.dot_dimension_numbers<[1], [0], [0], [1], [0, 0, 1, 1], [], []>} : vector<256x735xf32>, vector<735x64xf32>, vector<256x64xf32> -> vector<256x64xf32>
    %c0_3 = arith.constant 0 : index
    %c0_4 = arith.constant 0 : index
    %3 = vector.load %arg3[%c0_3, %c0_4] : memref<1x64xf32, #tpu.memory_space<vmem>>, vector<1x64xf32>
    %4 = vector.broadcast %3 : vector<1x64xf32> to vector<256x64xf32>
    %5 = arith.mulf %2, %4 : vector<256x64xf32>
    %c0_5 = arith.constant 0 : index
    %c0_6 = arith.constant 0 : index
    %6 = vector.load %arg4[%c0_5, %c0_6] : memref<1x64xf32, #tpu.memory_space<vmem>>, vector<1x64xf32>
    %7 = vector.broadcast %6 : vector<1x64xf32> to vector<256x64xf32>
    %8 = arith.addf %5, %7 : vector<256x64xf32>
    %cst_7 = arith.constant 0.000000e+00 : f32
    %9 = vector.broadcast %cst_7 : f32 to vector<256x64xf32>
    %10 = arith.cmpf oge, %8, %9 : vector<256x64xf32>
    %cst_8 = arith.constant 1.000000e-01 : f32
    %11 = vector.broadcast %cst_8 : f32 to vector<256x64xf32>
    %12 = arith.mulf %11, %8 : vector<256x64xf32>
    %13 = arith.select %10, %8, %12 : vector<256x64xi1>, vector<256x64xf32>
    %c0_9 = arith.constant 0 : index
    %c0_10 = arith.constant 0 : index
    %14 = vector.load %arg5[%c0_9, %c0_10] : memref<256x64xf32, #tpu.memory_space<vmem>>, vector<256x64xf32>
    tpu.vector_store %arg5[%c0_9, %c0_10], %13 {strides = array<i32>} : memref<256x64xf32, #tpu.memory_space<vmem>>, vector<256x64xf32>,
    return
  }
  func.func @transform_0(%arg0: i32) -> (i32, i32) {
    %c0_i32 = arith.constant 0 : i32
    %c0_i32_0 = arith.constant 0 : i32
    return %arg0, %c0_i32 : i32, i32
  }
  func.func @transform_1(%arg0: i32) -> (i32, i32) {
    %c0_i32 = arith.constant 0 : i32
    %c0_i32_0 = arith.constant 0 : i32
    %c0_i32_1 = arith.constant 0 : i32
    return %c0_i32, %c0_i32_0 : i32, i32
  }
  func.func @transform_2(%arg0: i32) -> (i32, i32) {
    %c0_i32 = arith.constant 0 : i32
    %c0_i32_0 = arith.constant 0 : i32
    %c0_i32_1 = arith.constant 0 : i32
    return %c0_i32, %c0_i32_0 : i32, i32
  }
  func.func @transform_3(%arg0: i32) -> (i32, i32) {
    %c0_i32 = arith.constant 0 : i32
    %c0_i32_0 = arith.constant 0 : i32
    %c0_i32_1 = arith.constant 0 : i32
    return %c0_i32, %c0_i32_0 : i32, i32
  }
  func.func @transform_4(%arg0: i32) -> (i32, i32) {
    %c0_i32 = arith.constant 0 : i32
    %c0_i32_0 = arith.constant 0 : i32
    return %arg0, %c0_i32 : i32, i32
  }
}

module attributes {stable_mosaic.version = 11 : i64} {
  func.func @_max9_kernel(%arg0: i32, %arg1: memref<9x16x256xf32, #tpu.memory_space<vmem>>, %arg2: memref<16x256xf32, #tpu.memory_space<vmem>>) attributes {dimension_semantics = [#tpu.dimension_semantics<parallel>], iteration_bounds = array<i64: 2>, scalar_prefetch = 0 : i64, scratch_operands = 0 : i64, tpu.core_type = #tpu.core_type<tc>, window_params = [{transform_indices = @transform_0, window_bounds = array<i64: 9, 16, 256>}, {transform_indices = @transform_1, window_bounds = array<i64: 16, 256>}]} {
    %c0 = arith.constant 0 : index
    %c0_0 = arith.constant 0 : index
    %c0_1 = arith.constant 0 : index
    %0 = vector.load %arg1[%c0, %c0_0, %c0_1] : memref<9x16x256xf32, #tpu.memory_space<vmem>>, vector<9x16x256xf32>
    %cst = arith.constant dense<0xFF800000> : vector<16x256xf32>
    %1 = vector.multi_reduction <maximumf>, %0, %cst [0] : vector<9x16x256xf32> to vector<16x256xf32>
    %c0_2 = arith.constant 0 : index
    %c0_3 = arith.constant 0 : index
    %2 = vector.load %arg2[%c0_2, %c0_3] : memref<16x256xf32, #tpu.memory_space<vmem>>, vector<16x256xf32>
    tpu.vector_store %arg2[%c0_2, %c0_3], %1 {strides = array<i32>} : memref<16x256xf32, #tpu.memory_space<vmem>>, vector<16x256xf32>,
    return
  }
  func.func @transform_0(%arg0: i32) -> (i32, i32, i32) {
    %c0_i32 = arith.constant 0 : i32
    %c0_i32_0 = arith.constant 0 : i32
    %c0_i32_1 = arith.constant 0 : i32
    return %c0_i32, %arg0, %c0_i32_0 : i32, i32, i32
  }
  func.func @transform_1(%arg0: i32) -> (i32, i32) {
    %c0_i32 = arith.constant 0 : i32
    %c0_i32_0 = arith.constant 0 : i32
    return %arg0, %c0_i32 : i32, i32
  }
}

module attributes {stable_mosaic.version = 11 : i64} {
  func.func @_mm_bn_act_kernel(%arg0: i32, %arg1: memref<64x192xf32, #tpu.memory_space<vmem>>, %arg2: memref<192x8xf32, #tpu.memory_space<vmem>>, %arg3: memref<1x8xf32, #tpu.memory_space<vmem>>, %arg4: memref<1x8xf32, #tpu.memory_space<vmem>>, %arg5: memref<64x8xf32, #tpu.memory_space<vmem>>) attributes {dimension_semantics = [#tpu.dimension_semantics<parallel>], iteration_bounds = array<i64: 2>, scalar_prefetch = 0 : i64, scratch_operands = 0 : i64, tpu.core_type = #tpu.core_type<tc>, window_params = [{transform_indices = @transform_0, window_bounds = array<i64: 64, 192>}, {pipeline_mode = #tpu.pipeline_mode<synchronous>, transform_indices = @transform_1, window_bounds = array<i64: 192, 8>}, {pipeline_mode = #tpu.pipeline_mode<synchronous>, transform_indices = @transform_2, window_bounds = array<i64: 1, 8>}, {pipeline_mode = #tpu.pipeline_mode<synchronous>, transform_indices = @transform_3, window_bounds = array<i64: 1, 8>}, {transform_indices = @transform_4, window_bounds = array<i64: 64, 8>}]} {
    %c0 = arith.constant 0 : index
    %c0_0 = arith.constant 0 : index
    %0 = vector.load %arg1[%c0, %c0_0] : memref<64x192xf32, #tpu.memory_space<vmem>>, vector<64x192xf32>
    %c0_1 = arith.constant 0 : index
    %c0_2 = arith.constant 0 : index
    %1 = vector.load %arg2[%c0_1, %c0_2] : memref<192x8xf32, #tpu.memory_space<vmem>>, vector<192x8xf32>
    %cst = arith.constant dense<0.000000e+00> : vector<64x8xf32>
    %2 = tpu.matmul %0, %1, %cst {dimension_numbers = #tpu.dot_dimension_numbers<[1], [0], [0], [1], [0, 0, 1, 1], [], []>} : vector<64x192xf32>, vector<192x8xf32>, vector<64x8xf32> -> vector<64x8xf32>
    %c0_3 = arith.constant 0 : index
    %c0_4 = arith.constant 0 : index
    %3 = vector.load %arg3[%c0_3, %c0_4] : memref<1x8xf32, #tpu.memory_space<vmem>>, vector<1x8xf32>
    %4 = vector.broadcast %3 : vector<1x8xf32> to vector<64x8xf32>
    %5 = arith.mulf %2, %4 : vector<64x8xf32>
    %c0_5 = arith.constant 0 : index
    %c0_6 = arith.constant 0 : index
    %6 = vector.load %arg4[%c0_5, %c0_6] : memref<1x8xf32, #tpu.memory_space<vmem>>, vector<1x8xf32>
    %7 = vector.broadcast %6 : vector<1x8xf32> to vector<64x8xf32>
    %8 = arith.addf %5, %7 : vector<64x8xf32>
    %cst_7 = arith.constant 0.000000e+00 : f32
    %9 = vector.broadcast %cst_7 : f32 to vector<64x8xf32>
    %10 = arith.maximumf %8, %9 : vector<64x8xf32>
    %c0_8 = arith.constant 0 : index
    %c0_9 = arith.constant 0 : index
    %11 = vector.load %arg5[%c0_8, %c0_9] : memref<64x8xf32, #tpu.memory_space<vmem>>, vector<64x8xf32>
    tpu.vector_store %arg5[%c0_8, %c0_9], %10 {strides = array<i32>} : memref<64x8xf32, #tpu.memory_space<vmem>>, vector<64x8xf32>,
    return
  }
  func.func @transform_0(%arg0: i32) -> (i32, i32) {
    %c0_i32 = arith.constant 0 : i32
    %c0_i32_0 = arith.constant 0 : i32
    return %arg0, %c0_i32 : i32, i32
  }
  func.func @transform_1(%arg0: i32) -> (i32, i32) {
    %c0_i32 = arith.constant 0 : i32
    %c0_i32_0 = arith.constant 0 : i32
    %c0_i32_1 = arith.constant 0 : i32
    return %c0_i32, %c0_i32_0 : i32, i32
  }
  func.func @transform_2(%arg0: i32) -> (i32, i32) {
    %c0_i32 = arith.constant 0 : i32
    %c0_i32_0 = arith.constant 0 : i32
    %c0_i32_1 = arith.constant 0 : i32
    return %c0_i32, %c0_i32_0 : i32, i32
  }
  func.func @transform_3(%arg0: i32) -> (i32, i32) {
    %c0_i32 = arith.constant 0 : i32
    %c0_i32_0 = arith.constant 0 : i32
    %c0_i32_1 = arith.constant 0 : i32
    return %c0_i32, %c0_i32_0 : i32, i32
  }
  func.func @transform_4(%arg0: i32) -> (i32, i32) {
    %c0_i32 = arith.constant 0 : i32
    %c0_i32_0 = arith.constant 0 : i32
    return %arg0, %c0_i32 : i32, i32
  }
}

module attributes {stable_mosaic.version = 11 : i64} {
  func.func @_mm_bn_act_kernel(%arg0: i32, %arg1: memref<64x72xf32, #tpu.memory_space<vmem>>, %arg2: memref<72x8xf32, #tpu.memory_space<vmem>>, %arg3: memref<1x8xf32, #tpu.memory_space<vmem>>, %arg4: memref<1x8xf32, #tpu.memory_space<vmem>>, %arg5: memref<64x8xf32, #tpu.memory_space<vmem>>) attributes {dimension_semantics = [#tpu.dimension_semantics<parallel>], iteration_bounds = array<i64: 2>, scalar_prefetch = 0 : i64, scratch_operands = 0 : i64, tpu.core_type = #tpu.core_type<tc>, window_params = [{transform_indices = @transform_0, window_bounds = array<i64: 64, 72>}, {pipeline_mode = #tpu.pipeline_mode<synchronous>, transform_indices = @transform_1, window_bounds = array<i64: 72, 8>}, {pipeline_mode = #tpu.pipeline_mode<synchronous>, transform_indices = @transform_2, window_bounds = array<i64: 1, 8>}, {pipeline_mode = #tpu.pipeline_mode<synchronous>, transform_indices = @transform_3, window_bounds = array<i64: 1, 8>}, {transform_indices = @transform_4, window_bounds = array<i64: 64, 8>}]} {
    %c0 = arith.constant 0 : index
    %c0_0 = arith.constant 0 : index
    %0 = vector.load %arg1[%c0, %c0_0] : memref<64x72xf32, #tpu.memory_space<vmem>>, vector<64x72xf32>
    %c0_1 = arith.constant 0 : index
    %c0_2 = arith.constant 0 : index
    %1 = vector.load %arg2[%c0_1, %c0_2] : memref<72x8xf32, #tpu.memory_space<vmem>>, vector<72x8xf32>
    %cst = arith.constant dense<0.000000e+00> : vector<64x8xf32>
    %2 = tpu.matmul %0, %1, %cst {dimension_numbers = #tpu.dot_dimension_numbers<[1], [0], [0], [1], [0, 0, 1, 1], [], []>} : vector<64x72xf32>, vector<72x8xf32>, vector<64x8xf32> -> vector<64x8xf32>
    %c0_3 = arith.constant 0 : index
    %c0_4 = arith.constant 0 : index
    %3 = vector.load %arg3[%c0_3, %c0_4] : memref<1x8xf32, #tpu.memory_space<vmem>>, vector<1x8xf32>
    %4 = vector.broadcast %3 : vector<1x8xf32> to vector<64x8xf32>
    %5 = arith.mulf %2, %4 : vector<64x8xf32>
    %c0_5 = arith.constant 0 : index
    %c0_6 = arith.constant 0 : index
    %6 = vector.load %arg4[%c0_5, %c0_6] : memref<1x8xf32, #tpu.memory_space<vmem>>, vector<1x8xf32>
    %7 = vector.broadcast %6 : vector<1x8xf32> to vector<64x8xf32>
    %8 = arith.addf %5, %7 : vector<64x8xf32>
    %cst_7 = arith.constant 0.000000e+00 : f32
    %9 = vector.broadcast %cst_7 : f32 to vector<64x8xf32>
    %10 = arith.maximumf %8, %9 : vector<64x8xf32>
    %c0_8 = arith.constant 0 : index
    %c0_9 = arith.constant 0 : index
    %11 = vector.load %arg5[%c0_8, %c0_9] : memref<64x8xf32, #tpu.memory_space<vmem>>, vector<64x8xf32>
    tpu.vector_store %arg5[%c0_8, %c0_9], %10 {strides = array<i32>} : memref<64x8xf32, #tpu.memory_space<vmem>>, vector<64x8xf32>,
    return
  }
  func.func @transform_0(%arg0: i32) -> (i32, i32) {
    %c0_i32 = arith.constant 0 : i32
    %c0_i32_0 = arith.constant 0 : i32
    return %arg0, %c0_i32 : i32, i32
  }
  func.func @transform_1(%arg0: i32) -> (i32, i32) {
    %c0_i32 = arith.constant 0 : i32
    %c0_i32_0 = arith.constant 0 : i32
    %c0_i32_1 = arith.constant 0 : i32
    return %c0_i32, %c0_i32_0 : i32, i32
  }
  func.func @transform_2(%arg0: i32) -> (i32, i32) {
    %c0_i32 = arith.constant 0 : i32
    %c0_i32_0 = arith.constant 0 : i32
    %c0_i32_1 = arith.constant 0 : i32
    return %c0_i32, %c0_i32_0 : i32, i32
  }
  func.func @transform_3(%arg0: i32) -> (i32, i32) {
    %c0_i32 = arith.constant 0 : i32
    %c0_i32_0 = arith.constant 0 : i32
    %c0_i32_1 = arith.constant 0 : i32
    return %c0_i32, %c0_i32_0 : i32, i32
  }
  func.func @transform_4(%arg0: i32) -> (i32, i32) {
    %c0_i32 = arith.constant 0 : i32
    %c0_i32_0 = arith.constant 0 : i32
    return %arg0, %c0_i32 : i32, i32
  }
}

module attributes {stable_mosaic.version = 11 : i64} {
  func.func @_mm_bn_act_kernel(%arg0: i32, %arg1: memref<64x64xf32, #tpu.memory_space<vmem>>, %arg2: memref<64x32xf32, #tpu.memory_space<vmem>>, %arg3: memref<1x32xf32, #tpu.memory_space<vmem>>, %arg4: memref<1x32xf32, #tpu.memory_space<vmem>>, %arg5: memref<64x32xf32, #tpu.memory_space<vmem>>) attributes {dimension_semantics = [#tpu.dimension_semantics<parallel>], iteration_bounds = array<i64: 2>, scalar_prefetch = 0 : i64, scratch_operands = 0 : i64, tpu.core_type = #tpu.core_type<tc>, window_params = [{transform_indices = @transform_0, window_bounds = array<i64: 64, 64>}, {pipeline_mode = #tpu.pipeline_mode<synchronous>, transform_indices = @transform_1, window_bounds = array<i64: 64, 32>}, {pipeline_mode = #tpu.pipeline_mode<synchronous>, transform_indices = @transform_2, window_bounds = array<i64: 1, 32>}, {pipeline_mode = #tpu.pipeline_mode<synchronous>, transform_indices = @transform_3, window_bounds = array<i64: 1, 32>}, {transform_indices = @transform_4, window_bounds = array<i64: 64, 32>}]} {
    %c0 = arith.constant 0 : index
    %c0_0 = arith.constant 0 : index
    %0 = vector.load %arg1[%c0, %c0_0] : memref<64x64xf32, #tpu.memory_space<vmem>>, vector<64x64xf32>
    %c0_1 = arith.constant 0 : index
    %c0_2 = arith.constant 0 : index
    %1 = vector.load %arg2[%c0_1, %c0_2] : memref<64x32xf32, #tpu.memory_space<vmem>>, vector<64x32xf32>
    %cst = arith.constant dense<0.000000e+00> : vector<64x32xf32>
    %2 = tpu.matmul %0, %1, %cst {dimension_numbers = #tpu.dot_dimension_numbers<[1], [0], [0], [1], [0, 0, 1, 1], [], []>} : vector<64x64xf32>, vector<64x32xf32>, vector<64x32xf32> -> vector<64x32xf32>
    %c0_3 = arith.constant 0 : index
    %c0_4 = arith.constant 0 : index
    %3 = vector.load %arg3[%c0_3, %c0_4] : memref<1x32xf32, #tpu.memory_space<vmem>>, vector<1x32xf32>
    %4 = vector.broadcast %3 : vector<1x32xf32> to vector<64x32xf32>
    %5 = arith.mulf %2, %4 : vector<64x32xf32>
    %c0_5 = arith.constant 0 : index
    %c0_6 = arith.constant 0 : index
    %6 = vector.load %arg4[%c0_5, %c0_6] : memref<1x32xf32, #tpu.memory_space<vmem>>, vector<1x32xf32>
    %7 = vector.broadcast %6 : vector<1x32xf32> to vector<64x32xf32>
    %8 = arith.addf %5, %7 : vector<64x32xf32>
    %c0_7 = arith.constant 0 : index
    %c0_8 = arith.constant 0 : index
    %9 = vector.load %arg5[%c0_7, %c0_8] : memref<64x32xf32, #tpu.memory_space<vmem>>, vector<64x32xf32>
    tpu.vector_store %arg5[%c0_7, %c0_8], %8 {strides = array<i32>} : memref<64x32xf32, #tpu.memory_space<vmem>>, vector<64x32xf32>,
    return
  }
  func.func @transform_0(%arg0: i32) -> (i32, i32) {
    %c0_i32 = arith.constant 0 : i32
    %c0_i32_0 = arith.constant 0 : i32
    return %arg0, %c0_i32 : i32, i32
  }
  func.func @transform_1(%arg0: i32) -> (i32, i32) {
    %c0_i32 = arith.constant 0 : i32
    %c0_i32_0 = arith.constant 0 : i32
    %c0_i32_1 = arith.constant 0 : i32
    return %c0_i32, %c0_i32_0 : i32, i32
  }
  func.func @transform_2(%arg0: i32) -> (i32, i32) {
    %c0_i32 = arith.constant 0 : i32
    %c0_i32_0 = arith.constant 0 : i32
    %c0_i32_1 = arith.constant 0 : i32
    return %c0_i32, %c0_i32_0 : i32, i32
  }
  func.func @transform_3(%arg0: i32) -> (i32, i32) {
    %c0_i32 = arith.constant 0 : i32
    %c0_i32_0 = arith.constant 0 : i32
    %c0_i32_1 = arith.constant 0 : i32
    return %c0_i32, %c0_i32_0 : i32, i32
  }
  func.func @transform_4(%arg0: i32) -> (i32, i32) {
    %c0_i32 = arith.constant 0 : i32
    %c0_i32_0 = arith.constant 0 : i32
    return %arg0, %c0_i32 : i32, i32
  }
}

module attributes {stable_mosaic.version = 11 : i64} {
  func.func @_mm_bn_res_act_kernel(%arg0: i32, %arg1: memref<64x8xf32, #tpu.memory_space<vmem>>, %arg2: memref<8x32xf32, #tpu.memory_space<vmem>>, %arg3: memref<1x32xf32, #tpu.memory_space<vmem>>, %arg4: memref<1x32xf32, #tpu.memory_space<vmem>>, %arg5: memref<64x32xf32, #tpu.memory_space<vmem>>, %arg6: memref<64x32xf32, #tpu.memory_space<vmem>>) attributes {dimension_semantics = [#tpu.dimension_semantics<parallel>], iteration_bounds = array<i64: 2>, scalar_prefetch = 0 : i64, scratch_operands = 0 : i64, tpu.core_type = #tpu.core_type<tc>, window_params = [{transform_indices = @transform_0, window_bounds = array<i64: 64, 8>}, {pipeline_mode = #tpu.pipeline_mode<synchronous>, transform_indices = @transform_1, window_bounds = array<i64: 8, 32>}, {pipeline_mode = #tpu.pipeline_mode<synchronous>, transform_indices = @transform_2, window_bounds = array<i64: 1, 32>}, {pipeline_mode = #tpu.pipeline_mode<synchronous>, transform_indices = @transform_3, window_bounds = array<i64: 1, 32>}, {transform_indices = @transform_4, window_bounds = array<i64: 64, 32>}, {transform_indices = @transform_5, window_bounds = array<i64: 64, 32>}]} {
    %c0 = arith.constant 0 : index
    %c0_0 = arith.constant 0 : index
    %0 = vector.load %arg1[%c0, %c0_0] : memref<64x8xf32, #tpu.memory_space<vmem>>, vector<64x8xf32>
    %c0_1 = arith.constant 0 : index
    %c0_2 = arith.constant 0 : index
    %1 = vector.load %arg2[%c0_1, %c0_2] : memref<8x32xf32, #tpu.memory_space<vmem>>, vector<8x32xf32>
    %cst = arith.constant dense<0.000000e+00> : vector<64x32xf32>
    %2 = tpu.matmul %0, %1, %cst {dimension_numbers = #tpu.dot_dimension_numbers<[1], [0], [0], [1], [0, 0, 1, 1], [], []>} : vector<64x8xf32>, vector<8x32xf32>, vector<64x32xf32> -> vector<64x32xf32>
    %c0_3 = arith.constant 0 : index
    %c0_4 = arith.constant 0 : index
    %3 = vector.load %arg3[%c0_3, %c0_4] : memref<1x32xf32, #tpu.memory_space<vmem>>, vector<1x32xf32>
    %4 = vector.broadcast %3 : vector<1x32xf32> to vector<64x32xf32>
    %5 = arith.mulf %2, %4 : vector<64x32xf32>
    %c0_5 = arith.constant 0 : index
    %c0_6 = arith.constant 0 : index
    %6 = vector.load %arg4[%c0_5, %c0_6] : memref<1x32xf32, #tpu.memory_space<vmem>>, vector<1x32xf32>
    %7 = vector.broadcast %6 : vector<1x32xf32> to vector<64x32xf32>
    %8 = arith.addf %5, %7 : vector<64x32xf32>
    %c0_7 = arith.constant 0 : index
    %c0_8 = arith.constant 0 : index
    %9 = vector.load %arg5[%c0_7, %c0_8] : memref<64x32xf32, #tpu.memory_space<vmem>>, vector<64x32xf32>
    %10 = arith.addf %8, %9 : vector<64x32xf32>
    %cst_9 = arith.constant 0.000000e+00 : f32
    %11 = vector.broadcast %cst_9 : f32 to vector<64x32xf32>
    %12 = arith.maximumf %10, %11 : vector<64x32xf32>
    %c0_10 = arith.constant 0 : index
    %c0_11 = arith.constant 0 : index
    %13 = vector.load %arg6[%c0_10, %c0_11] : memref<64x32xf32, #tpu.memory_space<vmem>>, vector<64x32xf32>
    tpu.vector_store %arg6[%c0_10, %c0_11], %12 {strides = array<i32>} : memref<64x32xf32, #tpu.memory_space<vmem>>, vector<64x32xf32>,
    return
  }
  func.func @transform_0(%arg0: i32) -> (i32, i32) {
    %c0_i32 = arith.constant 0 : i32
    %c0_i32_0 = arith.constant 0 : i32
    return %arg0, %c0_i32 : i32, i32
  }
  func.func @transform_1(%arg0: i32) -> (i32, i32) {
    %c0_i32 = arith.constant 0 : i32
    %c0_i32_0 = arith.constant 0 : i32
    %c0_i32_1 = arith.constant 0 : i32
    return %c0_i32, %c0_i32_0 : i32, i32
  }
  func.func @transform_2(%arg0: i32) -> (i32, i32) {
    %c0_i32 = arith.constant 0 : i32
    %c0_i32_0 = arith.constant 0 : i32
    %c0_i32_1 = arith.constant 0 : i32
    return %c0_i32, %c0_i32_0 : i32, i32
  }
  func.func @transform_3(%arg0: i32) -> (i32, i32) {
    %c0_i32 = arith.constant 0 : i32
    %c0_i32_0 = arith.constant 0 : i32
    %c0_i32_1 = arith.constant 0 : i32
    return %c0_i32, %c0_i32_0 : i32, i32
  }
  func.func @transform_4(%arg0: i32) -> (i32, i32) {
    %c0_i32 = arith.constant 0 : i32
    %c0_i32_0 = arith.constant 0 : i32
    return %arg0, %c0_i32 : i32, i32
  }
  func.func @transform_5(%arg0: i32) -> (i32, i32) {
    %c0_i32 = arith.constant 0 : i32
    %c0_i32_0 = arith.constant 0 : i32
    return %arg0, %c0_i32 : i32, i32
  }
}

module attributes {stable_mosaic.version = 11 : i64} {
  func.func @_mm_bn_act_kernel(%arg0: i32, %arg1: memref<64x96xf32, #tpu.memory_space<vmem>>, %arg2: memref<96x8xf32, #tpu.memory_space<vmem>>, %arg3: memref<1x8xf32, #tpu.memory_space<vmem>>, %arg4: memref<1x8xf32, #tpu.memory_space<vmem>>, %arg5: memref<64x8xf32, #tpu.memory_space<vmem>>) attributes {dimension_semantics = [#tpu.dimension_semantics<parallel>], iteration_bounds = array<i64: 2>, scalar_prefetch = 0 : i64, scratch_operands = 0 : i64, tpu.core_type = #tpu.core_type<tc>, window_params = [{transform_indices = @transform_0, window_bounds = array<i64: 64, 96>}, {pipeline_mode = #tpu.pipeline_mode<synchronous>, transform_indices = @transform_1, window_bounds = array<i64: 96, 8>}, {pipeline_mode = #tpu.pipeline_mode<synchronous>, transform_indices = @transform_2, window_bounds = array<i64: 1, 8>}, {pipeline_mode = #tpu.pipeline_mode<synchronous>, transform_indices = @transform_3, window_bounds = array<i64: 1, 8>}, {transform_indices = @transform_4, window_bounds = array<i64: 64, 8>}]} {
    %c0 = arith.constant 0 : index
    %c0_0 = arith.constant 0 : index
    %0 = vector.load %arg1[%c0, %c0_0] : memref<64x96xf32, #tpu.memory_space<vmem>>, vector<64x96xf32>
    %c0_1 = arith.constant 0 : index
    %c0_2 = arith.constant 0 : index
    %1 = vector.load %arg2[%c0_1, %c0_2] : memref<96x8xf32, #tpu.memory_space<vmem>>, vector<96x8xf32>
    %cst = arith.constant dense<0.000000e+00> : vector<64x8xf32>
    %2 = tpu.matmul %0, %1, %cst {dimension_numbers = #tpu.dot_dimension_numbers<[1], [0], [0], [1], [0, 0, 1, 1], [], []>} : vector<64x96xf32>, vector<96x8xf32>, vector<64x8xf32> -> vector<64x8xf32>
    %c0_3 = arith.constant 0 : index
    %c0_4 = arith.constant 0 : index
    %3 = vector.load %arg3[%c0_3, %c0_4] : memref<1x8xf32, #tpu.memory_space<vmem>>, vector<1x8xf32>
    %4 = vector.broadcast %3 : vector<1x8xf32> to vector<64x8xf32>
    %5 = arith.mulf %2, %4 : vector<64x8xf32>
    %c0_5 = arith.constant 0 : index
    %c0_6 = arith.constant 0 : index
    %6 = vector.load %arg4[%c0_5, %c0_6] : memref<1x8xf32, #tpu.memory_space<vmem>>, vector<1x8xf32>
    %7 = vector.broadcast %6 : vector<1x8xf32> to vector<64x8xf32>
    %8 = arith.addf %5, %7 : vector<64x8xf32>
    %cst_7 = arith.constant 0.000000e+00 : f32
    %9 = vector.broadcast %cst_7 : f32 to vector<64x8xf32>
    %10 = arith.maximumf %8, %9 : vector<64x8xf32>
    %c0_8 = arith.constant 0 : index
    %c0_9 = arith.constant 0 : index
    %11 = vector.load %arg5[%c0_8, %c0_9] : memref<64x8xf32, #tpu.memory_space<vmem>>, vector<64x8xf32>
    tpu.vector_store %arg5[%c0_8, %c0_9], %10 {strides = array<i32>} : memref<64x8xf32, #tpu.memory_space<vmem>>, vector<64x8xf32>,
    return
  }
  func.func @transform_0(%arg0: i32) -> (i32, i32) {
    %c0_i32 = arith.constant 0 : i32
    %c0_i32_0 = arith.constant 0 : i32
    return %arg0, %c0_i32 : i32, i32
  }
  func.func @transform_1(%arg0: i32) -> (i32, i32) {
    %c0_i32 = arith.constant 0 : i32
    %c0_i32_0 = arith.constant 0 : i32
    %c0_i32_1 = arith.constant 0 : i32
    return %c0_i32, %c0_i32_0 : i32, i32
  }
  func.func @transform_2(%arg0: i32) -> (i32, i32) {
    %c0_i32 = arith.constant 0 : i32
    %c0_i32_0 = arith.constant 0 : i32
    %c0_i32_1 = arith.constant 0 : i32
    return %c0_i32, %c0_i32_0 : i32, i32
  }
  func.func @transform_3(%arg0: i32) -> (i32, i32) {
    %c0_i32 = arith.constant 0 : i32
    %c0_i32_0 = arith.constant 0 : i32
    %c0_i32_1 = arith.constant 0 : i32
    return %c0_i32, %c0_i32_0 : i32, i32
  }
  func.func @transform_4(%arg0: i32) -> (i32, i32) {
    %c0_i32 = arith.constant 0 : i32
    %c0_i32_0 = arith.constant 0 : i32
    return %arg0, %c0_i32 : i32, i32
  }
}

module attributes {stable_mosaic.version = 11 : i64} {
  func.func @_mm_bn_act_kernel(%arg0: i32, %arg1: memref<64x64xf32, #tpu.memory_space<vmem>>, %arg2: memref<64x32xf32, #tpu.memory_space<vmem>>, %arg3: memref<1x32xf32, #tpu.memory_space<vmem>>, %arg4: memref<1x32xf32, #tpu.memory_space<vmem>>, %arg5: memref<64x32xf32, #tpu.memory_space<vmem>>) attributes {dimension_semantics = [#tpu.dimension_semantics<parallel>], iteration_bounds = array<i64: 2>, scalar_prefetch = 0 : i64, scratch_operands = 0 : i64, tpu.core_type = #tpu.core_type<tc>, window_params = [{transform_indices = @transform_0, window_bounds = array<i64: 64, 64>}, {pipeline_mode = #tpu.pipeline_mode<synchronous>, transform_indices = @transform_1, window_bounds = array<i64: 64, 32>}, {pipeline_mode = #tpu.pipeline_mode<synchronous>, transform_indices = @transform_2, window_bounds = array<i64: 1, 32>}, {pipeline_mode = #tpu.pipeline_mode<synchronous>, transform_indices = @transform_3, window_bounds = array<i64: 1, 32>}, {transform_indices = @transform_4, window_bounds = array<i64: 64, 32>}]} {
    %c0 = arith.constant 0 : index
    %c0_0 = arith.constant 0 : index
    %0 = vector.load %arg1[%c0, %c0_0] : memref<64x64xf32, #tpu.memory_space<vmem>>, vector<64x64xf32>
    %c0_1 = arith.constant 0 : index
    %c0_2 = arith.constant 0 : index
    %1 = vector.load %arg2[%c0_1, %c0_2] : memref<64x32xf32, #tpu.memory_space<vmem>>, vector<64x32xf32>
    %cst = arith.constant dense<0.000000e+00> : vector<64x32xf32>
    %2 = tpu.matmul %0, %1, %cst {dimension_numbers = #tpu.dot_dimension_numbers<[1], [0], [0], [1], [0, 0, 1, 1], [], []>} : vector<64x64xf32>, vector<64x32xf32>, vector<64x32xf32> -> vector<64x32xf32>
    %c0_3 = arith.constant 0 : index
    %c0_4 = arith.constant 0 : index
    %3 = vector.load %arg3[%c0_3, %c0_4] : memref<1x32xf32, #tpu.memory_space<vmem>>, vector<1x32xf32>
    %4 = vector.broadcast %3 : vector<1x32xf32> to vector<64x32xf32>
    %5 = arith.mulf %2, %4 : vector<64x32xf32>
    %c0_5 = arith.constant 0 : index
    %c0_6 = arith.constant 0 : index
    %6 = vector.load %arg4[%c0_5, %c0_6] : memref<1x32xf32, #tpu.memory_space<vmem>>, vector<1x32xf32>
    %7 = vector.broadcast %6 : vector<1x32xf32> to vector<64x32xf32>
    %8 = arith.addf %5, %7 : vector<64x32xf32>
    %cst_7 = arith.constant 0.000000e+00 : f32
    %9 = vector.broadcast %cst_7 : f32 to vector<64x32xf32>
    %10 = arith.cmpf oge, %8, %9 : vector<64x32xf32>
    %cst_8 = arith.constant 0.00999999977 : f32
    %11 = vector.broadcast %cst_8 : f32 to vector<64x32xf32>
    %12 = arith.mulf %11, %8 : vector<64x32xf32>
    %13 = arith.select %10, %8, %12 : vector<64x32xi1>, vector<64x32xf32>
    %c0_9 = arith.constant 0 : index
    %c0_10 = arith.constant 0 : index
    %14 = vector.load %arg5[%c0_9, %c0_10] : memref<64x32xf32, #tpu.memory_space<vmem>>, vector<64x32xf32>
    tpu.vector_store %arg5[%c0_9, %c0_10], %13 {strides = array<i32>} : memref<64x32xf32, #tpu.memory_space<vmem>>, vector<64x32xf32>,
    return
  }
  func.func @transform_0(%arg0: i32) -> (i32, i32) {
    %c0_i32 = arith.constant 0 : i32
    %c0_i32_0 = arith.constant 0 : i32
    return %arg0, %c0_i32 : i32, i32
  }
  func.func @transform_1(%arg0: i32) -> (i32, i32) {
    %c0_i32 = arith.constant 0 : i32
    %c0_i32_0 = arith.constant 0 : i32
    %c0_i32_1 = arith.constant 0 : i32
    return %c0_i32, %c0_i32_0 : i32, i32
  }
  func.func @transform_2(%arg0: i32) -> (i32, i32) {
    %c0_i32 = arith.constant 0 : i32
    %c0_i32_0 = arith.constant 0 : i32
    %c0_i32_1 = arith.constant 0 : i32
    return %c0_i32, %c0_i32_0 : i32, i32
  }
  func.func @transform_3(%arg0: i32) -> (i32, i32) {
    %c0_i32 = arith.constant 0 : i32
    %c0_i32_0 = arith.constant 0 : i32
    %c0_i32_1 = arith.constant 0 : i32
    return %c0_i32, %c0_i32_0 : i32, i32
  }
  func.func @transform_4(%arg0: i32) -> (i32, i32) {
    %c0_i32 = arith.constant 0 : i32
    %c0_i32_0 = arith.constant 0 : i32
    return %arg0, %c0_i32 : i32, i32
  }
}

</mosaic_0001>

<llo_original>
// kernel: v1net_forward.10
$region0: #{v1net_forward.10}
  #allocation0 [shape = 'u32[]', space=smem, size = 0x4, offset = 0x4, fixed_abs, tag = 'smem constant byte address 0x4 - core index']
  #allocation1 [shape = 'u32[72,128]{1,0:T(1,128)}', space=vmem, size = 0x9000, scoped, tag = 'internal scratch']
  %s0 = inlined_call_operand.vmem [shape: f32[512,735], index: 0, kind: input, shape index: {}]
  %s1 = inlined_call_operand.vmem [shape: f32[735,64], index: 1, kind: input, shape index: {}]
  %s2 = inlined_call_operand.vmem [shape: f32[1,64], index: 2, kind: input, shape index: {}]
  %s3 = inlined_call_operand.vmem [shape: f32[1,64], index: 3, kind: input, shape index: {}]
  %s4 = inlined_call_operand.vmem [shape: f32[512,64], index: 4, kind: output, shape index: {}]
  %s5 = sld [smem:[#allocation0]]
  $region49: #{v1net_forward.10} parent=0
    _
  %s7 = ssub.s32 1, %s5
  %s8 = scalar_select 0, %s7, %s5
  loop: start=0, step=1, limit=4
  $region2: #{v1net_forward.10} parent=0 // loop_pre_header
    _
  $region3: #{v1net_forward.10} parent=0 // loop_header
    %s10 = sphi 0, %s14
    %p11 = scmp.ge.s32.totalorder %s10, 4
    %s20 = sphi 0, %s22
    %s23 = sphi 0, %s20
    %s24 = sphi 0, %s23
    %s40 = sphi 0, %s24
    %s44 = sphi 0, %s44
    %s46 = sphi 0, %s44
    %s47 = sphi 0, %s46
    %s61 = sphi 0, %s47
    %s65 = sphi 0, %s65
    %s67 = sphi 0, %s65
    %s68 = sphi 0, %s67
    %s82 = sphi 0, %s68
    %s86 = sphi 0, %s86
    %s88 = sphi 0, %s86
    %s89 = sphi 0, %s88
    %s103 = sphi 0, %s89
    %s109 = sphi 0, %s111
    %s112 = sphi 0, %s109
    %s113 = sphi 0, %s112
    %s129 = sphi 0, %s113
  $region4: #{v1net_forward.10} parent=0 // loop_header_branch
    %13 = sbr.rel (%p11) target = $region8
  $region5: #{v1net_forward.10} parent=0 // loop_body
    %s15 = ssub.s32 %s10, 1
    %s16 = ssub.s32 %s10, 2
    %s17 = sadd.s32 %s10, 1
    %s18 = ssub.s32 %s10, %s17
    %p19 = scmp.eq.s32.totalorder %s18, 0
    %s21 = sadd.s32 %s20, 1
    %s22 = scalar_select %p19, %s20, %s21
    %p25 = pneg %p19
    %p26 = scmp.eq.s32.totalorder %s10, 1
    %p27 = por %p25, %p26
    %p28 = scmp.ne.s32.totalorder %s20, %s23
    %p29 = scmp.eq.s32.totalorder %s10, 0
    %p30 = por %p28, %p29
    %p31 = scmp.ne.s32.totalorder %s20, %s23
    %p32 = scmp.eq.s32.totalorder %s15, 1
    %p33 = por %p31, %p32
    %p34 = scmp.ne.s32.totalorder %s23, %s24
    %p35 = scmp.eq.s32.totalorder %s15, 0
    %p36 = por %p34, %p35
    %p37 = scmp.ne.s32.totalorder %s23, %s24
    %p38 = scmp.eq.s32.totalorder %s16, 1
    %p39 = por %p37, %p38
    %p41 = scmp.ne.s32.totalorder %s24, %s40
    %p42 = scmp.eq.s32.totalorder %s16, 0
    %p43 = por %p41, %p42
    %s45 = sadd.s32 %s44, 1
    %p48 = scmp.eq.s32.totalorder %s10, 1
    %p49 = scmp.ne.s32.totalorder %s44, %s46
    %p50 = scmp.eq.s32.totalorder %s10, 0
    %p51 = por %p49, %p50
    %p52 = scmp.ne.s32.totalorder %s44, %s46
    %p53 = scmp.eq.s32.totalorder %s15, 1
    %p54 = por %p52, %p53
    %p55 = scmp.ne.s32.totalorder %s46, %s47
    %p56 = scmp.eq.s32.totalorder %s15, 0
    %p57 = por %p55, %p56
    %p58 = scmp.ne.s32.totalorder %s46, %s47
    %p59 = scmp.eq.s32.totalorder %s16, 1
    %p60 = por %p58, %p59
    %p62 = scmp.ne.s32.totalorder %s47, %s61
    %p63 = scmp.eq.s32.totalorder %s16, 0
    %p64 = por %p62, %p63
    %s66 = sadd.s32 %s65, 1
    %p69 = scmp.eq.s32.totalorder %s10, 1
    %p70 = scmp.ne.s32.totalorder %s65, %s67
    %p71 = scmp.eq.s32.totalorder %s10, 0
    %p72 = por %p70, %p71
    %p73 = scmp.ne.s32.totalorder %s65, %s67
    %p74 = scmp.eq.s32.totalorder %s15, 1
    %p75 = por %p73, %p74
    %p76 = scmp.ne.s32.totalorder %s67, %s68
    %p77 = scmp.eq.s32.totalorder %s15, 0
    %p78 = por %p76, %p77
    %p79 = scmp.ne.s32.totalorder %s67, %s68
    %p80 = scmp.eq.s32.totalorder %s16, 1
    %p81 = por %p79, %p80
    %p83 = scmp.ne.s32.totalorder %s68, %s82
    %p84 = scmp.eq.s32.totalorder %s16, 0
    %p85 = por %p83, %p84
    %s87 = sadd.s32 %s86, 1
    %p90 = scmp.eq.s32.totalorder %s10, 1
    %p91 = scmp.ne.s32.totalorder %s86, %s88
    %p92 = scmp.eq.s32.totalorder %s10, 0
    %p93 = por %p91, %p92
    %p94 = scmp.ne.s32.totalorder %s86, %s88
    %p95 = scmp.eq.s32.totalorder %s15, 1
    %p96 = por %p94, %p95
    %p97 = scmp.ne.s32.totalorder %s88, %s89
    %p98 = scmp.eq.s32.totalorder %s15, 0
    %p99 = por %p97, %p98
    %p100 = scmp.ne.s32.totalorder %s88, %s89
    %p101 = scmp.eq.s32.totalorder %s16, 1
    %p102 = por %p100, %p101
    %p104 = scmp.ne.s32.totalorder %s89, %s103
    %p105 = scmp.eq.s32.totalorder %s16, 0
    %p106 = por %p104, %p105
    %s107 = ssub.s32 %s10, %s17
    %p108 = scmp.eq.s32.totalorder %s107, 0
    %s110 = sadd.s32 %s109, 1
    %s111 = scalar_select %p108, %s109, %s110
    %p114 = pneg %p108
    %p115 = scmp.eq.s32.totalorder %s10, 1
    %p116 = por %p114, %p115
    %p117 = scmp.ne.s32.totalorder %s109, %s112
    %p118 = scmp.eq.s32.totalorder %s10, 0
    %p119 = por %p117, %p118
    %p120 = scmp.ne.s32.totalorder %s109, %s112
    %p121 = scmp.eq.s32.totalorder %s15, 1
    %p122 = por %p120, %p121
    %p123 = scmp.ne.s32.totalorder %s112, %s113
    %p124 = scmp.eq.s32.totalorder %s15, 0
    %p125 = por %p123, %p124
    %p126 = scmp.ne.s32.totalorder %s112, %s113
    %p127 = scmp.eq.s32.totalorder %s16, 1
    %p128 = por %p126, %p127
    %p130 = scmp.ne.s32.totalorder %s113, %s129
    %p131 = scmp.eq.s32.totalorder %s16, 0
    %p132 = por %p130, %p131
    %p133 = scmp.le.s32.totalorder 1, %s10
    %p134 = scmp.lt.s32.totalorder %s10, 3
    %p135 = pnand %p133, %p134
    %p136 = pneg %p135
    // Predicated region
    $region9: #{v1net_forward.10} parent=5 // pred_check
      _
    $region10: #{v1net_forward.10} parent=5 // pred_check_branch
      %138 = sbr.rel (%p135) target = $region12
    $region11: #{v1net_forward.10} parent=5 // pred_region
      %s139 = ssub.s32 %s10, 1
      // Predicated region
      $region13: #{v1net_forward.10} parent=11 // pred_check
        %p140 = pneg %p57
      $region14: #{v1net_forward.10} parent=11 // pred_check_branch
        %142 = sbr.rel (%p140) target = $region16
      $region15: #{v1net_forward.10} parent=11 // pred_region
        _
      $region16: #{v1net_forward.10} parent=11 // pred_fallthru
        _
      // Predicated region
      $region17: #{v1net_forward.10} parent=11 // pred_check
        %p143 = pneg %p78
      $region18: #{v1net_forward.10} parent=11 // pred_check_branch
        %145 = sbr.rel (%p143) target = $region20
      $region19: #{v1net_forward.10} parent=11 // pred_region
        _
      $region20: #{v1net_forward.10} parent=11 // pred_fallthru
        _
      // Predicated region
      $region21: #{v1net_forward.10} parent=11 // pred_check
        %p146 = pneg %p99
      $region22: #{v1net_forward.10} parent=11 // pred_check_branch
        %148 = sbr.rel (%p146) target = $region24
      $region23: #{v1net_forward.10} parent=11 // pred_region
        _
      $region24: #{v1net_forward.10} parent=11 // pred_fallthru
        _
    $region12: #{v1net_forward.10} parent=5 // pred_fallthru
      _
    %p149 = scmp.lt.s32.totalorder %s10, 2
    // Predicated region
    $region25: #{v1net_forward.10} parent=5 // pred_check
      %p150 = pneg %p149
    $region26: #{v1net_forward.10} parent=5 // pred_check_branch
      %152 = sbr.rel (%p150) target = $region28
    $region27: #{v1net_forward.10} parent=5 // pred_region
      // Predicated region
      $region29: #{v1net_forward.10} parent=27 // pred_check
        %p153 = pneg %p30
      $region30: #{v1net_forward.10} parent=27 // pred_check_branch
        %155 = sbr.rel (%p153) target = $region32
      $region31: #{v1net_forward.10} parent=27 // pred_region
        %s156 = smul.u32 32, %s10
        %p157 = scmp.lt.s32.totalorder %s156, 63
        %s158 = scalar_select %p157, %s156, 63
        %s159 = smul.addr %s158, 6
        %s160 = smul.addr %s159, 8
        %s161 = scalar_lea.vmem %s0, %s160
        %s162 = smul.u32 32, %s10
      $region32: #{v1net_forward.10} parent=27 // pred_fallthru
        _
    $region28: #{v1net_forward.10} parent=5 // pred_fallthru
      _
    %p163 = scmp.le.s32.totalorder 1, %s10
    %p164 = scmp.lt.s32.totalorder %s10, 3
    %p165 = pnand %p163, %p164
    %p166 = pneg %p165
    // Predicated region
    $region33: #{v1net_forward.10} parent=5 // pred_check
      _
    $region34: #{v1net_forward.10} parent=5 // pred_check_branch
      %168 = sbr.rel (%p165) target = $region36
    $region35: #{v1net_forward.10} parent=5 // pred_region
      %s169 = ssub.s32 %s10, 1
      %s170 = smul.u32 32, %s15
      %p171 = scmp.lt.s32.totalorder %s170, 63
      %s172 = scalar_select %p171, %s170, 63
      %s173 = smul.addr %s172, 6
      %s174 = smul.addr %s173, 8
      %s175 = scalar_lea.vmem %s0, %s174
      %p176 = pneg %p36
      %p177 = pneg %p33
      %p178 = pneg %p57
      %p179 = pneg %p54
      %p180 = pneg %p78
      %p181 = pneg %p75
      %p182 = pneg %p99
      %p183 = pneg %p96
      %p184 = pneg %p125
      %p185 = pneg %p122
      %s186 = smul.u32 32, %s15
      %p187 = scmp.lt.s32.totalorder %s186, 63
      %s188 = scalar_select %p187, %s186, 63
      %s189 = smul.addr %s188, 8
      %s190 = scalar_lea.vmem %s4, %s189
      %s191 = smul.u32 32, %s15
      %p192 = scmp.lt.s32.totalorder %s191, 63
      %s193 = scalar_select %p192, %s191, 63
      %s194 = smul.addr %s193, 6
      %s195 = smul.addr %s194, 8
      %s196 = scalar_lea.vmem %s0, %s195
      %s197 = smul.u32 32, %s15
      %s198 = smul.u32 32, %s15
      %p199 = scmp.lt.s32.totalorder %s198, 63
      %s200 = scalar_select %p199, %s198, 63
      %s201 = smul.addr %s200, 8
      %s202 = scalar_lea.vmem %s4, %s201
      %s203 = smul.u32 32, %s15
      %v204 = vld [vmem:[%s196] sm:$0xff]
      %v205 = vld [vmem:[%s196 + $0x8] sm:$0xff]
      %v206 = vld [vmem:[%s196 + $0x10] sm:$0xff]
      %v207 = vld [vmem:[%s196 + $0x18] sm:$0xff]
      %v208 = vld [vmem:[%s196 + $0x20] sm:$0xff]
      %v209 = vld [vmem:[%s196 + $0x28] sm:$0xff]
      %v210 = vld [vmem:[%s196 + $0x30] sm:$0xff]
      %v211 = vld [vmem:[%s196 + $0x38] sm:$0xff]
      %v212 = vld [vmem:[%s196 + $0x40] sm:$0xff]
      %v213 = vld [vmem:[%s196 + $0x48] sm:$0xff]
      %v214 = vld [vmem:[%s196 + $0x50] sm:$0xff]
      %v215 = vld [vmem:[%s196 + $0x58] sm:$0xff]
      %v216 = vld [vmem:[%s196 + $0x60] sm:$0xff]
      %v217 = vld [vmem:[%s196 + $0x68] sm:$0xff]
      %v218 = vld [vmem:[%s196 + $0x70] sm:$0xff]
      %v219 = vld [vmem:[%s196 + $0x78] sm:$0xff]
      %v220 = vld [vmem:[%s196 + $0x80] sm:$0xff]
      %v221 = vld [vmem:[%s196 + $0x88] sm:$0xff]
      %v222 = vld [vmem:[%s196 + $0x90] sm:$0xff]
      %v223 = vld [vmem:[%s196 + $0x98] sm:$0xff]
      %v224 = vld [vmem:[%s196 + $0xa0] sm:$0xff]
      %v225 = vld [vmem:[%s196 + $0xa8] sm:$0xff]
      %v226 = vld [vmem:[%s196 + $0xb0] sm:$0xff]
      %v227 = vld [vmem:[%s196 + $0xb8] sm:$0xff]
      %v228 = vld [vmem:[%s196 + $0xc0] sm:$0xff]
      %v229 = vld [vmem:[%s196 + $0xc8] sm:$0xff]
      %v230 = vld [vmem:[%s196 + $0xd0] sm:$0xff]
      %v231 = vld [vmem:[%s196 + $0xd8] sm:$0xff]
      %v232 = vld [vmem:[%s196 + $0xe0] sm:$0xff]
      %v233 = vld [vmem:[%s196 + $0xe8] sm:$0xff]
      %v234 = vld [vmem:[%s196 + $0xf0] sm:$0xff]
      %v235 = vld [vmem:[%s196 + $0xf8] sm:$0xff]
      %v236 = vld [vmem:[%s196 + $0x100] sm:$0xff]
      %v237 = vld [vmem:[%s196 + $0x108] sm:$0xff]
      %v238 = vld [vmem:[%s196 + $0x110] sm:$0xff]
      %v239 = vld [vmem:[%s196 + $0x118] sm:$0xff]
      %v240 = vld [vmem:[%s196 + $0x120] sm:$0xff]
      %v241 = vld [vmem:[%s196 + $0x128] sm:$0xff]
      %v242 = vld [vmem:[%s196 + $0x130] sm:$0xff]
      %v243 = vld [vmem:[%s196 + $0x138] sm:$0xff]
      %v244 = vld [vmem:[%s196 + $0x140] sm:$0xff]
      %v245 = vld [vmem:[%s196 + $0x148] sm:$0xff]
      %v246 = vld [vmem:[%s196 + $0x150] sm:$0xff]
      %v247 = vld [vmem:[%s196 + $0x158] sm:$0xff]
      %v248 = vld [vmem:[%s196 + $0x160] sm:$0xff]
      %v249 = vld [vmem:[%s196 + $0x168] sm:$0xff]
      %v250 = vld [vmem:[%s196 + $0x170] sm:$0xff]
      %v251 = vld [vmem:[%s196 + $0x178] sm:$0xff]
      %v252 = vld [vmem:[%s196 + $0x180] sm:$0xff]
      %v253 = vld [vmem:[%s196 + $0x188] sm:$0xff]
      %v254 = vld [vmem:[%s196 + $0x190] sm:$0xff]
      %v255 = vld [vmem:[%s196 + $0x198] sm:$0xff]
      %v256 = vld [vmem:[%s196 + $0x1a0] sm:$0xff]
      %v257 = vld [vmem:[%s196 + $0x1a8] sm:$0xff]
      %v258 = vld [vmem:[%s196 + $0x1b0] sm:$0xff]
      %v259 = vld [vmem:[%s196 + $0x1b8] sm:$0xff]
      %v260 = vld [vmem:[%s196 + $0x1c0] sm:$0xff]
      %v261 = vld [vmem:[%s196 + $0x1c8] sm:$0xff]
      %v262 = vld [vmem:[%s196 + $0x1d0] sm:$0xff]
      %v263 = vld [vmem:[%s196 + $0x1d8] sm:$0xff]
      %v264 = vld [vmem:[%s196 + $0x1e0] sm:$0xff]
      %v265 = vld [vmem:[%s196 + $0x1e8] sm:$0xff]
      %v266 = vld [vmem:[%s196 + $0x1f0] sm:$0xff]
      %v267 = vld [vmem:[%s196 + $0x1f8] sm:$0xff]
      %v268 = vld [vmem:[%s196 + $0x200] sm:$0xff]
      %v269 = vld [vmem:[%s196 + $0x208] sm:$0xff]
      %v270 = vld [vmem:[%s196 + $0x210] sm:$0xff]
      %v271 = vld [vmem:[%s196 + $0x218] sm:$0xff]
      %v272 = vld [vmem:[%s196 + $0x220] sm:$0xff]
      %v273 = vld [vmem:[%s196 + $0x228] sm:$0xff]
      %v274 = vld [vmem:[%s196 + $0x230] sm:$0xff]
      %v275 = vld [vmem:[%s196 + $0x238] sm:$0xff]
      %v276 = vld [vmem:[%s196 + $0x240] sm:$0xff]
      %v277 = vld [vmem:[%s196 + $0x248] sm:$0xff]
      %v278 = vld [vmem:[%s196 + $0x250] sm:$0xff]
      %v279 = vld [vmem:[%s196 + $0x258] sm:$0xff]
      %v280 = vld [vmem:[%s196 + $0x260] sm:$0xff]
      %v281 = vld [vmem:[%s196 + $0x268] sm:$0xff]
      %v282 = vld [vmem:[%s196 + $0x270] sm:$0xff]
      %v283 = vld [vmem:[%s196 + $0x278] sm:$0xff]
      %v284 = vld [vmem:[%s196 + $0x280] sm:$0xff]
      %v285 = vld [vmem:[%s196 + $0x288] sm:$0xff]
      %v286 = vld [vmem:[%s196 + $0x290] sm:$0xff]
      %v287 = vld [vmem:[%s196 + $0x298] sm:$0xff]
      %v288 = vld [vmem:[%s196 + $0x2a0] sm:$0xff]
      %v289 = vld [vmem:[%s196 + $0x2a8] sm:$0xff]
      %v290 = vld [vmem:[%s196 + $0x2b0] sm:$0xff]
      %v291 = vld [vmem:[%s196 + $0x2b8] sm:$0xff]
      %v292 = vld [vmem:[%s196 + $0x2c0] sm:$0xff]
      %v293 = vld [vmem:[%s196 + $0x2c8] sm:$0xff]
      %v294 = vld [vmem:[%s196 + $0x2d0] sm:$0xff]
      %v295 = vld [vmem:[%s196 + $0x2d8] sm:$0xff]
      %v296 = vld [vmem:[%s196 + $0x2e0] sm:$0xff]
      %v297 = vld [vmem:[%s196 + $0x2e8] sm:$0xff]
      %v298 = vld [vmem:[%s196 + $0x2f0] sm:$0xff]
      %v299 = vld [vmem:[%s196 + $0x2f8] sm:$0xff]
      %v300 = vld [vmem:[%s196 + $0x300] sm:$0xff]
      %v301 = vld [vmem:[%s196 + $0x308] sm:$0xff]
      %v302 = vld [vmem:[%s196 + $0x310] sm:$0xff]
      %v303 = vld [vmem:[%s196 + $0x318] sm:$0xff]
      %v304 = vld [vmem:[%s196 + $0x320] sm:$0xff]
      %v305 = vld [vmem:[%s196 + $0x328] sm:$0xff]
      %v306 = vld [vmem:[%s196 + $0x330] sm:$0xff]
      %v307 = vld [vmem:[%s196 + $0x338] sm:$0xff]
      %v308 = vld [vmem:[%s196 + $0x340] sm:$0xff]
      %v309 = vld [vmem:[%s196 + $0x348] sm:$0xff]
      %v310 = vld [vmem:[%s196 + $0x350] sm:$0xff]
      %v311 = vld [vmem:[%s196 + $0x358] sm:$0xff]
      %v312 = vld [vmem:[%s196 + $0x360] sm:$0xff]
      %v313 = vld [vmem:[%s196 + $0x368] sm:$0xff]
      %v314 = vld [vmem:[%s196 + $0x370] sm:$0xff]
      %v315 = vld [vmem:[%s196 + $0x378] sm:$0xff]
      %v316 = vld [vmem:[%s196 + $0x380] sm:$0xff]
      %v317 = vld [vmem:[%s196 + $0x388] sm:$0xff]
      %v318 = vld [vmem:[%s196 + $0x390] sm:$0xff]
      %v319 = vld [vmem:[%s196 + $0x398] sm:$0xff]
      %v320 = vld [vmem:[%s196 + $0x3a0] sm:$0xff]
      %v321 = vld [vmem:[%s196 + $0x3a8] sm:$0xff]
      %v322 = vld [vmem:[%s196 + $0x3b0] sm:$0xff]
      %v323 = vld [vmem:[%s196 + $0x3b8] sm:$0xff]
      %v324 = vld [vmem:[%s196 + $0x3c0] sm:$0xff]
      %v325 = vld [vmem:[%s196 + $0x3c8] sm:$0xff]
      %v326 = vld [vmem:[%s196 + $0x3d0] sm:$0xff]
      %v327 = vld [vmem:[%s196 + $0x3d8] sm:$0xff]
      %v328 = vld [vmem:[%s196 + $0x3e0] sm:$0xff]
      %v329 = vld [vmem:[%s196 + $0x3e8] sm:$0xff]
      %v330 = vld [vmem:[%s196 + $0x3f0] sm:$0xff]
      %v331 = vld [vmem:[%s196 + $0x3f8] sm:$0xff]
      %v332 = vld [vmem:[%s196 + $0x400] sm:$0xff]
      %v333 = vld [vmem:[%s196 + $0x408] sm:$0xff]
      %v334 = vld [vmem:[%s196 + $0x410] sm:$0xff]
      %v335 = vld [vmem:[%s196 + $0x418] sm:$0xff]
      %v336 = vld [vmem:[%s196 + $0x420] sm:$0xff]
      %v337 = vld [vmem:[%s196 + $0x428] sm:$0xff]
      %v338 = vld [vmem:[%s196 + $0x430] sm:$0xff]
      %v339 = vld [vmem:[%s196 + $0x438] sm:$0xff]
      %v340 = vld [vmem:[%s196 + $0x440] sm:$0xff]
      %v341 = vld [vmem:[%s196 + $0x448] sm:$0xff]
      %v342 = vld [vmem:[%s196 + $0x450] sm:$0xff]
      %v343 = vld [vmem:[%s196 + $0x458] sm:$0xff]
      %v344 = vld [vmem:[%s196 + $0x460] sm:$0xff]
      %v345 = vld [vmem:[%s196 + $0x468] sm:$0xff]
      %v346 = vld [vmem:[%s196 + $0x470] sm:$0xff]
      %v347 = vld [vmem:[%s196 + $0x478] sm:$0xff]
      %v348 = vld [vmem:[%s196 + $0x480] sm:$0xff]
      %v349 = vld [vmem:[%s196 + $0x488] sm:$0xff]
      %v350 = vld [vmem:[%s196 + $0x490] sm:$0xff]
      %v351 = vld [vmem:[%s196 + $0x498] sm:$0xff]
      %v352 = vld [vmem:[%s196 + $0x4a0] sm:$0xff]
      %v353 = vld [vmem:[%s196 + $0x4a8] sm:$0xff]
      %v354 = vld [vmem:[%s196 + $0x4b0] sm:$0xff]
      %v355 = vld [vmem:[%s196 + $0x4b8] sm:$0xff]
      %v356 = vld [vmem:[%s196 + $0x4c0] sm:$0xff]
      %v357 = vld [vmem:[%s196 + $0x4c8] sm:$0xff]
      %v358 = vld [vmem:[%s196 + $0x4d0] sm:$0xff]
      %v359 = vld [vmem:[%s196 + $0x4d8] sm:$0xff]
      %v360 = vld [vmem:[%s196 + $0x4e0] sm:$0xff]
      %v361 = vld [vmem:[%s196 + $0x4e8] sm:$0xff]
      %v362 = vld [vmem:[%s196 + $0x4f0] sm:$0xff]
      %v363 = vld [vmem:[%s196 + $0x4f8] sm:$0xff]
      %v364 = vld [vmem:[%s196 + $0x500] sm:$0xff]
      %v365 = vld [vmem:[%s196 + $0x508] sm:$0xff]
      %v366 = vld [vmem:[%s196 + $0x510] sm:$0xff]
      %v367 = vld [vmem:[%s196 + $0x518] sm:$0xff]
      %v368 = vld [vmem:[%s196 + $0x520] sm:$0xff]
      %v369 = vld [vmem:[%s196 + $0x528] sm:$0xff]
      %v370 = vld [vmem:[%s196 + $0x530] sm:$0xff]
      %v371 = vld [vmem:[%s196 + $0x538] sm:$0xff]
      %v372 = vld [vmem:[%s196 + $0x540] sm:$0xff]
      %v373 = vld [vmem:[%s196 + $0x548] sm:$0xff]
      %v374 = vld [vmem:[%s196 + $0x550] sm:$0xff]
      %v375 = vld [vmem:[%s196 + $0x558] sm:$0xff]
      %v376 = vld [vmem:[%s196 + $0x560] sm:$0xff]
      %v377 = vld [vmem:[%s196 + $0x568] sm:$0xff]
      %v378 = vld [vmem:[%s196 + $0x570] sm:$0xff]
      %v379 = vld [vmem:[%s196 + $0x578] sm:$0xff]
      %v380 = vld [vmem:[%s196 + $0x580] sm:$0xff]
      %v381 = vld [vmem:[%s196 + $0x588] sm:$0xff]
      %v382 = vld [vmem:[%s196 + $0x590] sm:$0xff]
      %v383 = vld [vmem:[%s196 + $0x598] sm:$0xff]
      %v384 = vld [vmem:[%s196 + $0x5a0] sm:$0xff]
      %v385 = vld [vmem:[%s196 + $0x5a8] sm:$0xff]
      %v386 = vld [vmem:[%s196 + $0x5b0] sm:$0xff]
      %v387 = vld [vmem:[%s196 + $0x5b8] sm:$0xff]
      %v388 = vld [vmem:[%s196 + $0x5c0] sm:$0xff]
      %v389 = vld [vmem:[%s196 + $0x5c8] sm:$0xff]
      %v390 = vld [vmem:[%s196 + $0x5d0] sm:$0xff]
      %v391 = vld [vmem:[%s196 + $0x5d8] sm:$0xff]
      %v392 = vld [vmem:[%s196 + $0x5e0] sm:$0xff]
      %v393 = vld [vmem:[%s196 + $0x5e8] sm:$0xff]
      %v394 = vld [vmem:[%s196 + $0x5f0] sm:$0xff]
      %v395 = vld [vmem:[%s196 + $0x5f8] sm:$0xff]
      %v396 = vld [vmem:[%s1] sm:$0xff]
      %v397 = vld [vmem:[%s1 + $0x8] sm:$0xff]
      %v398 = vld [vmem:[%s1 + $0x10] sm:$0xff]
      %v399 = vld [vmem:[%s1 + $0x18] sm:$0xff]
      %v400 = vld [vmem:[%s1 + $0x20] sm:$0xff]
      %v401 = vld [vmem:[%s1 + $0x28] sm:$0xff]
      %v402 = vld [vmem:[%s1 + $0x30] sm:$0xff]
      %v403 = vld [vmem:[%s1 + $0x38] sm:$0xff]
      %v404 = vld [vmem:[%s1 + $0x40] sm:$0xff]
      %v405 = vld [vmem:[%s1 + $0x48] sm:$0xff]
      %v406 = vld [vmem:[%s1 + $0x50] sm:$0xff]
      %v407 = vld [vmem:[%s1 + $0x58] sm:$0xff]
      %v408 = vld [vmem:[%s1 + $0x60] sm:$0xff]
      %v409 = vld [vmem:[%s1 + $0x68] sm:$0xff]
      %v410 = vld [vmem:[%s1 + $0x70] sm:$0xff]
      %v411 = vld [vmem:[%s1 + $0x78] sm:$0xff]
      %v412 = vld [vmem:[%s1 + $0x80] sm:$0xff]
      %v413 = vld [vmem:[%s1 + $0x88] sm:$0xff]
      %v414 = vld [vmem:[%s1 + $0x90] sm:$0xff]
      %v415 = vld [vmem:[%s1 + $0x98] sm:$0xff]
      %v416 = vld [vmem:[%s1 + $0xa0] sm:$0xff]
      %v417 = vld [vmem:[%s1 + $0xa8] sm:$0xff]
      %v418 = vld [vmem:[%s1 + $0xb0] sm:$0xff]
      %v419 = vld [vmem:[%s1 + $0xb8] sm:$0xff]
      %v420 = vld [vmem:[%s1 + $0xc0] sm:$0xff]
      %v421 = vld [vmem:[%s1 + $0xc8] sm:$0xff]
      %v422 = vld [vmem:[%s1 + $0xd0] sm:$0xff]
      %v423 = vld [vmem:[%s1 + $0xd8] sm:$0xff]
      %v424 = vld [vmem:[%s1 + $0xe0] sm:$0xff]
      %v425 = vld [vmem:[%s1 + $0xe8] sm:$0xff]
      %v426 = vld [vmem:[%s1 + $0xf0] sm:$0xff]
      %v427 = vld [vmem:[%s1 + $0xf8] sm:$0xff]
      %v428 = vld [vmem:[%s1 + $0x100] sm:$0xff]
      %v429 = vld [vmem:[%s1 + $0x108] sm:$0xff]
      %v430 = vld [vmem:[%s1 + $0x110] sm:$0xff]
      %v431 = vld [vmem:[%s1 + $0x118] sm:$0xff]
      %v432 = vld [vmem:[%s1 + $0x120] sm:$0xff]
      %v433 = vld [vmem:[%s1 + $0x128] sm:$0xff]
      %v434 = vld [vmem:[%s1 + $0x130] sm:$0xff]
      %v435 = vld [vmem:[%s1 + $0x138] sm:$0xff]
      %v436 = vld [vmem:[%s1 + $0x140] sm:$0xff]
      %v437 = vld [vmem:[%s1 + $0x148] sm:$0xff]
      %v438 = vld [vmem:[%s1 + $0x150] sm:$0xff]
      %v439 = vld [vmem:[%s1 + $0x158] sm:$0xff]
      %v440 = vld [vmem:[%s1 + $0x160] sm:$0xff]
      %v441 = vld [vmem:[%s1 + $0x168] sm:$0xff]
      %v442 = vld [vmem:[%s1 + $0x170] sm:$0xff]
      %v443 = vld [vmem:[%s1 + $0x178] sm:$0xff]
      %v444 = vld [vmem:[%s1 + $0x180] sm:$0xff]
      %v445 = vld [vmem:[%s1 + $0x188] sm:$0xff]
      %v446 = vld [vmem:[%s1 + $0x190] sm:$0xff]
      %v447 = vld [vmem:[%s1 + $0x198] sm:$0xff]
      %v448 = vld [vmem:[%s1 + $0x1a0] sm:$0xff]
      %v449 = vld [vmem:[%s1 + $0x1a8] sm:$0xff]
      %v450 = vld [vmem:[%s1 + $0x1b0] sm:$0xff]
      %v451 = vld [vmem:[%s1 + $0x1b8] sm:$0xff]
      %v452 = vld [vmem:[%s1 + $0x1c0] sm:$0xff]
      %v453 = vld [vmem:[%s1 + $0x1c8] sm:$0xff]
      %v454 = vld [vmem:[%s1 + $0x1d0] sm:$0xff]
      %v455 = vld [vmem:[%s1 + $0x1d8] sm:$0xff]
      %v456 = vld [vmem:[%s1 + $0x1e0] sm:$0xff]
      %v457 = vld [vmem:[%s1 + $0x1e8] sm:$0xff]
      %v458 = vld [vmem:[%s1 + $0x1f0] sm:$0xff]
      %v459 = vld [vmem:[%s1 + $0x1f8] sm:$0xff]
      %v460 = vld [vmem:[%s1 + $0x200] sm:$0xff]
      %v461 = vld [vmem:[%s1 + $0x208] sm:$0xff]
      %v462 = vld [vmem:[%s1 + $0x210] sm:$0xff]
      %v463 = vld [vmem:[%s1 + $0x218] sm:$0xff]
      %v464 = vld [vmem:[%s1 + $0x220] sm:$0xff]
      %v465 = vld [vmem:[%s1 + $0x228] sm:$0xff]
      %v466 = vld [vmem:[%s1 + $0x230] sm:$0xff]
      %v467 = vld [vmem:[%s1 + $0x238] sm:$0xff]
      %v468 = vld [vmem:[%s1 + $0x240] sm:$0xff]
      %v469 = vld [vmem:[%s1 + $0x248] sm:$0xff]
      %v470 = vld [vmem:[%s1 + $0x250] sm:$0xff]
      %v471 = vld [vmem:[%s1 + $0x258] sm:$0xff]
      %v472 = vld [vmem:[%s1 + $0x260] sm:$0xff]
      %v473 = vld [vmem:[%s1 + $0x268] sm:$0xff]
      %v474 = vld [vmem:[%s1 + $0x270] sm:$0xff]
      %v475 = vld [vmem:[%s1 + $0x278] sm:$0xff]
      %v476 = vld [vmem:[%s1 + $0x280] sm:$0xff]
      %v477 = vld [vmem:[%s1 + $0x288] sm:$0xff]
      %v478 = vld [vmem:[%s1 + $0x290] sm:$0xff]
      %v479 = vld [vmem:[%s1 + $0x298] sm:$0xff]
      %v480 = vld [vmem:[%s1 + $0x2a0] sm:$0xff]
      %v481 = vld [vmem:[%s1 + $0x2a8] sm:$0xff]
      %v482 = vld [vmem:[%s1 + $0x2b0] sm:$0xff]
      %v483 = vld [vmem:[%s1 + $0x2b8] sm:$0xff]
      %v484 = vld [vmem:[%s1 + $0x2c0] sm:$0xff]
      %v485 = vld [vmem:[%s1 + $0x2c8] sm:$0xff]
      %v486 = vld [vmem:[%s1 + $0x2d0] sm:$0xff]
      %v487 = vld [vmem:[%s1 + $0x2d8] sm:$0x7f]
      %vm488 = vcmask 777216
      %v490 = vsel %vm488, %v209, 0
      %v493 = vsel %vm488, %v215, 0
      %v496 = vsel %vm488, %v221, 0
      %v499 = vsel %vm488, %v227, 0
      %v502 = vsel %vm488, %v233, 0
      %v505 = vsel %vm488, %v239, 0
      %v508 = vsel %vm488, %v245, 0
      %v511 = vsel %vm488, %v251, 0
      %v514 = vsel %vm488, %v257, 0
      %v517 = vsel %vm488, %v263, 0
      %v520 = vsel %vm488, %v269, 0
      %v523 = vsel %vm488, %v275, 0
      %v526 = vsel %vm488, %v281, 0
      %v529 = vsel %vm488, %v287, 0
      %v532 = vsel %vm488, %v293, 0
      %v535 = vsel %vm488, %v299, 0
      %v538 = vsel %vm488, %v305, 0
      %v541 = vsel %vm488, %v311, 0
      %v544 = vsel %vm488, %v317, 0
      %v547 = vsel %vm488, %v323, 0
      %v550 = vsel %vm488, %v329, 0
      %v553 = vsel %vm488, %v335, 0
      %v556 = vsel %vm488, %v341, 0
      %v559 = vsel %vm488, %v347, 0
      %v562 = vsel %vm488, %v353, 0
      %v565 = vsel %vm488, %v359, 0
      %v568 = vsel %vm488, %v365, 0
      %v571 = vsel %vm488, %v371, 0
      %v574 = vsel %vm488, %v377, 0
      %v577 = vsel %vm488, %v383, 0
      %v580 = vsel %vm488, %v389, 0
      %v583 = vsel %vm488, %v395, 0
      %vm585 = vcmask 1046528
      %v587 = vsel %vm585, %v487, 0
      %589 = vmatpush.msra.mxu0 %v411
      %590 = vmatpush.msra.mxu0 %v410
      %591 = vmatpush.msra.mxu0 %v409
      %592 = vmatpush.msra.mxu0 %v408
      %593 = vmatpush.msra.mxu0 %v407
      %594 = vmatpush.msra.mxu0 %v406
      %595 = vmatpush.msra.mxu0 %v405
      %596 = vmatpush.msra.mxu0 %v404
      %597 = vmatpush.msra.mxu0 %v403
      %598 = vmatpush.msra.mxu0 %v402
      %599 = vmatpush.msra.mxu0 %v401
      %600 = vmatpush.msra.mxu0 %v400
      %601 = vmatpush.msra.mxu0 %v399
      %602 = vmatpush.msra.mxu0 %v398
      %603 = vmatpush.msra.mxu0 %v397
      %604 = vmatpush.msra.mxu0 %v396
      %605 = vmatmul.f32.gmra.mxu0 %v204
      %v606 = vpop.f32.mrf.mxu0
      %v607 = vadd.f32 0.0, %v606
      %608 = vmatmul.f32.gmra.mxu0 %v210
      %v609 = vpop.f32.mrf.mxu0
      %v610 = vadd.f32 0.0, %v609
      %611 = vmatmul.f32.gmra.mxu0 %v216
      %v612 = vpop.f32.mrf.mxu0
      %v613 = vadd.f32 0.0, %v612
      %614 = vmatmul.f32.gmra.mxu0 %v222
      %v615 = vpop.f32.mrf.mxu0
      %v616 = vadd.f32 0.0, %v615
      %617 = vmatmul.f32.gmra.mxu0 %v228
      %v618 = vpop.f32.mrf.mxu0
      %v619 = vadd.f32 0.0, %v618
      %620 = vmatmul.f32.gmra.mxu0 %v234
      %v621 = vpop.f32.mrf.mxu0
      %v622 = vadd.f32 0.0, %v621
      %623 = vmatmul.f32.gmra.mxu0 %v240
      %v624 = vpop.f32.mrf.mxu0
      %v625 = vadd.f32 0.0, %v624
      %626 = vmatmul.f32.gmra.mxu0 %v246
      %v627 = vpop.f32.mrf.mxu0
      %v628 = vadd.f32 0.0, %v627
      %629 = vmatmul.f32.gmra.mxu0 %v252
      %v630 = vpop.f32.mrf.mxu0
      %v631 = vadd.f32 0.0, %v630
      %632 = vmatmul.f32.gmra.mxu0 %v258
      %v633 = vpop.f32.mrf.mxu0
      %v634 = vadd.f32 0.0, %v633
      %635 = vmatmul.f32.gmra.mxu0 %v264
      %v636 = vpop.f32.mrf.mxu0
      %v637 = vadd.f32 0.0, %v636
      %638 = vmatmul.f32.gmra.mxu0 %v270
      %v639 = vpop.f32.mrf.mxu0
      %v640 = vadd.f32 0.0, %v639
      %641 = vmatmul.f32.gmra.mxu0 %v276
      %v642 = vpop.f32.mrf.mxu0
      %v643 = vadd.f32 0.0, %v642
      %644 = vmatmul.f32.gmra.mxu0 %v282
      %v645 = vpop.f32.mrf.mxu0
      %v646 = vadd.f32 0.0, %v645
      %647 = vmatmul.f32.gmra.mxu0 %v288
      %v648 = vpop.f32.mrf.mxu0
      %v649 = vadd.f32 0.0, %v648
      %650 = vmatmul.f32.gmra.mxu0 %v294
      %v651 = vpop.f32.mrf.mxu0
      %v652 = vadd.f32 0.0, %v651
      %653 = vmatmul.f32.gmra.mxu0 %v300
      %v654 = vpop.f32.mrf.mxu0
      %v655 = vadd.f32 0.0, %v654
      %656 = vmatmul.f32.gmra.mxu0 %v306
      %v657 = vpop.f32.mrf.mxu0
      %v658 = vadd.f32 0.0, %v657
      %659 = vmatmul.f32.gmra.mxu0 %v312
      %v660 = vpop.f32.mrf.mxu0
      %v661 = vadd.f32 0.0, %v660
      %662 = vmatmul.f32.gmra.mxu0 %v318
      %v663 = vpop.f32.mrf.mxu0
      %v664 = vadd.f32 0.0, %v663
      %665 = vmatmul.f32.gmra.mxu0 %v324
      %v666 = vpop.f32.mrf.mxu0
      %v667 = vadd.f32 0.0, %v666
      %668 = vmatmul.f32.gmra.mxu0 %v330
      %v669 = vpop.f32.mrf.mxu0
      %v670 = vadd.f32 0.0, %v669
      %671 = vmatmul.f32.gmra.mxu0 %v336
      %v672 = vpop.f32.mrf.mxu0
      %v673 = vadd.f32 0.0, %v672
      %674 = vmatmul.f32.gmra.mxu0 %v342
      %v675 = vpop.f32.mrf.mxu0
      %v676 = vadd.f32 0.0, %v675
      %677 = vmatmul.f32.gmra.mxu0 %v348
      %v678 = vpop.f32.mrf.mxu0
      %v679 = vadd.f32 0.0, %v678
      %680 = vmatmul.f32.gmra.mxu0 %v354
      %v681 = vpop.f32.mrf.mxu0
      %v682 = vadd.f32 0.0, %v681
      %683 = vmatmul.f32.gmra.mxu0 %v360
      %v684 = vpop.f32.mrf.mxu0
      %v685 = vadd.f32 0.0, %v684
      %686 = vmatmul.f32.gmra.mxu0 %v366
      %v687 = vpop.f32.mrf.mxu0
      %v688 = vadd.f32 0.0, %v687
      %689 = vmatmul.f32.gmra.mxu0 %v372
      %v690 = vpop.f32.mrf.mxu0
      %v691 = vadd.f32 0.0, %v690
      %692 = vmatmul.f32.gmra.mxu0 %v378
      %v693 = vpop.f32.mrf.mxu0
      %v694 = vadd.f32 0.0, %v693
      %695 = vmatmul.f32.gmra.mxu0 %v384
      %v696 = vpop.f32.mrf.mxu0
      %v697 = vadd.f32 0.0, %v696
      %698 = vmatmul.f32.gmra.mxu0 %v390
      %v699 = vpop.f32.mrf.mxu0
      %v700 = vadd.f32 0.0, %v699
      %701 = vdwg.mxu0
      %702 = vmatpush.msra.mxu0 %v427
      %703 = vmatpush.msra.mxu0 %v426
      %704 = vmatpush.msra.mxu0 %v425
      %705 = vmatpush.msra.mxu0 %v424
      %706 = vmatpush.msra.mxu0 %v423
      %707 = vmatpush.msra.mxu0 %v422
      %708 = vmatpush.msra.mxu0 %v421
      %709 = vmatpush.msra.mxu0 %v420
      %710 = vmatpush.msra.mxu0 %v419
      %711 = vmatpush.msra.mxu0 %v418
      %712 = vmatpush.msra.mxu0 %v417
      %713 = vmatpush.msra.mxu0 %v416
      %714 = vmatpush.msra.mxu0 %v415
      %715 = vmatpush.msra.mxu0 %v414
      %716 = vmatpush.msra.mxu0 %v413
      %717 = vmatpush.msra.mxu0 %v412
      %718 = vmatmul.f32.gmra.mxu0 %v205
      %v719 = vpop.f32.mrf.mxu0
      %v720 = vadd.f32 %v607, %v719
      %721 = vmatmul.f32.gmra.mxu0 %v211
      %v722 = vpop.f32.mrf.mxu0
      %v723 = vadd.f32 %v610, %v722
      %724 = vmatmul.f32.gmra.mxu0 %v217
      %v725 = vpop.f32.mrf.mxu0
      %v726 = vadd.f32 %v613, %v725
      %727 = vmatmul.f32.gmra.mxu0 %v223
      %v728 = vpop.f32.mrf.mxu0
      %v729 = vadd.f32 %v616, %v728
      %730 = vmatmul.f32.gmra.mxu0 %v229
      %v731 = vpop.f32.mrf.mxu0
      %v732 = vadd.f32 %v619, %v731
      %733 = vmatmul.f32.gmra.mxu0 %v235
      %v734 = vpop.f32.mrf.mxu0
      %v735 = vadd.f32 %v622, %v734
      %736 = vmatmul.f32.gmra.mxu0 %v241
      %v737 = vpop.f32.mrf.mxu0
      %v738 = vadd.f32 %v625, %v737
      %739 = vmatmul.f32.gmra.mxu0 %v247
      %v740 = vpop.f32.mrf.mxu0
      %v741 = vadd.f32 %v628, %v740
      %742 = vmatmul.f32.gmra.mxu0 %v253
      %v743 = vpop.f32.mrf.mxu0
      %v744 = vadd.f32 %v631, %v743
      %745 = vmatmul.f32.gmra.mxu0 %v259
      %v746 = vpop.f32.mrf.mxu0
      %v747 = vadd.f32 %v634, %v746
      %748 = vmatmul.f32.gmra.mxu0 %v265
      %v749 = vpop.f32.mrf.mxu0
      %v750 = vadd.f32 %v637, %v749
      %751 = vmatmul.f32.gmra.mxu0 %v271
      %v752 = vpop.f32.mrf.mxu0
      %v753 = vadd.f32 %v640, %v752
      %754 = vmatmul.f32.gmra.mxu0 %v277
      %v755 = vpop.f32.mrf.mxu0
      %v756 = vadd.f32 %v643, %v755
      %757 = vmatmul.f32.gmra.mxu0 %v283
      %v758 = vpop.f32.mrf.mxu0
      %v759 = vadd.f32 %v646, %v758
      %760 = vmatmul.f32.gmra.mxu0 %v289
      %v761 = vpop.f32.mrf.mxu0
      %v762 = vadd.f32 %v649, %v761
      %763 = vmatmul.f32.gmra.mxu0 %v295
      %v764 = vpop.f32.mrf.mxu0
      %v765 = vadd.f32 %v652, %v764
      %766 = vmatmul.f32.gmra.mxu0 %v301
      %v767 = vpop.f32.mrf.mxu0
      %v768 = vadd.f32 %v655, %v767
      %769 = vmatmul.f32.gmra.mxu0 %v307
      %v770 = vpop.f32.mrf.mxu0
      %v771 = vadd.f32 %v658, %v770
      %772 = vmatmul.f32.gmra.mxu0 %v313
      %v773 = vpop.f32.mrf.mxu0
      %v774 = vadd.f32 %v661, %v773
      %775 = vmatmul.f32.gmra.mxu0 %v319
      %v776 = vpop.f32.mrf.mxu0
      %v777 = vadd.f32 %v664, %v776
      %778 = vmatmul.f32.gmra.mxu0 %v325
      %v779 = vpop.f32.mrf.mxu0
      %v780 = vadd.f32 %v667, %v779
      %781 = vmatmul.f32.gmra.mxu0 %v331
      %v782 = vpop.f32.mrf.mxu0
      %v783 = vadd.f32 %v670, %v782
      %784 = vmatmul.f32.gmra.mxu0 %v337
      %v785 = vpop.f32.mrf.mxu0
      %v786 = vadd.f32 %v673, %v785
      %787 = vmatmul.f32.gmra.mxu0 %v343
      %v788 = vpop.f32.mrf.mxu0
      %v789 = vadd.f32 %v676, %v788
      %790 = vmatmul.f32.gmra.mxu0 %v349
      %v791 = vpop.f32.mrf.mxu0
      %v792 = vadd.f32 %v679, %v791
      %793 = vmatmul.f32.gmra.mxu0 %v355
      %v794 = vpop.f32.mrf.mxu0
      %v795 = vadd.f32 %v682, %v794
      %796 = vmatmul.f32.gmra.mxu0 %v361
      %v797 = vpop.f32.mrf.mxu0
      %v798 = vadd.f32 %v685, %v797
      %799 = vmatmul.f32.gmra.mxu0 %v367
      %v800 = vpop.f32.mrf.mxu0
      %v801 = vadd.f32 %v688, %v800
      %802 = vmatmul.f32.gmra.mxu0 %v373
      %v803 = vpop.f32.mrf.mxu0
      %v804 = vadd.f32 %v691, %v803
      %805 = vmatmul.f32.gmra.mxu0 %v379
      %v806 = vpop.f32.mrf.mxu0
      %v807 = vadd.f32 %v694, %v806
      %808 = vmatmul.f32.gmra.mxu0 %v385
      %v809 = vpop.f32.mrf.mxu0
      %v810 = vadd.f32 %v697, %v809
      %811 = vmatmul.f32.gmra.mxu0 %v391
      %v812 = vpop.f32.mrf.mxu0
      %v813 = vadd.f32 %v700, %v812
      %814 = vdwg.mxu0
      %815 = vmatpush.msra.mxu0 %v443
      %816 = vmatpush.msra.mxu0 %v442
      %817 = vmatpush.msra.mxu0 %v441
      %818 = vmatpush.msra.mxu0 %v440
      %819 = vmatpush.msra.mxu0 %v439
      %820 = vmatpush.msra.mxu0 %v438
      %821 = vmatpush.msra.mxu0 %v437
      %822 = vmatpush.msra.mxu0 %v436
      %823 = vmatpush.msra.mxu0 %v435
      %824 = vmatpush.msra.mxu0 %v434
      %825 = vmatpush.msra.mxu0 %v433
      %826 = vmatpush.msra.mxu0 %v432
      %827 = vmatpush.msra.mxu0 %v431
      %828 = vmatpush.msra.mxu0 %v430
      %829 = vmatpush.msra.mxu0 %v429
      %830 = vmatpush.msra.mxu0 %v428
      %831 = vmatmul.f32.gmra.mxu0 %v206
      %v832 = vpop.f32.mrf.mxu0
      %v833 = vadd.f32 %v720, %v832
      %834 = vmatmul.f32.gmra.mxu0 %v212
      %v835 = vpop.f32.mrf.mxu0
      %v836 = vadd.f32 %v723, %v835
      %837 = vmatmul.f32.gmra.mxu0 %v218
      %v838 = vpop.f32.mrf.mxu0
      %v839 = vadd.f32 %v726, %v838
      %840 = vmatmul.f32.gmra.mxu0 %v224
      %v841 = vpop.f32.mrf.mxu0
      %v842 = vadd.f32 %v729, %v841
      %843 = vmatmul.f32.gmra.mxu0 %v230
      %v844 = vpop.f32.mrf.mxu0
      %v845 = vadd.f32 %v732, %v844
      %846 = vmatmul.f32.gmra.mxu0 %v236
      %v847 = vpop.f32.mrf.mxu0
      %v848 = vadd.f32 %v735, %v847
      %849 = vmatmul.f32.gmra.mxu0 %v242
      %v850 = vpop.f32.mrf.mxu0
      %v851 = vadd.f32 %v738, %v850
      %852 = vmatmul.f32.gmra.mxu0 %v248
      %v853 = vpop.f32.mrf.mxu0
      %v854 = vadd.f32 %v741, %v853
      %855 = vmatmul.f32.gmra.mxu0 %v254
      %v856 = vpop.f32.mrf.mxu0
      %v857 = vadd.f32 %v744, %v856
      %858 = vmatmul.f32.gmra.mxu0 %v260
      %v859 = vpop.f32.mrf.mxu0
      %v860 = vadd.f32 %v747, %v859
      %861 = vmatmul.f32.gmra.mxu0 %v266
      %v862 = vpop.f32.mrf.mxu0
      %v863 = vadd.f32 %v750, %v862
      %864 = vmatmul.f32.gmra.mxu0 %v272
      %v865 = vpop.f32.mrf.mxu0
      %v866 = vadd.f32 %v753, %v865
      %867 = vmatmul.f32.gmra.mxu0 %v278
      %v868 = vpop.f32.mrf.mxu0
      %v869 = vadd.f32 %v756, %v868
      %870 = vmatmul.f32.gmra.mxu0 %v284
      %v871 = vpop.f32.mrf.mxu0
      %v872 = vadd.f32 %v759, %v871
      %873 = vmatmul.f32.gmra.mxu0 %v290
      %v874 = vpop.f32.mrf.mxu0
      %v875 = vadd.f32 %v762, %v874
      %876 = vmatmul.f32.gmra.mxu0 %v296
      %v877 = vpop.f32.mrf.mxu0
      %v878 = vadd.f32 %v765, %v877
      %879 = vmatmul.f32.gmra.mxu0 %v302
      %v880 = vpop.f32.mrf.mxu0
      %v881 = vadd.f32 %v768, %v880
      %882 = vmatmul.f32.gmra.mxu0 %v308
      %v883 = vpop.f32.mrf.mxu0
      %v884 = vadd.f32 %v771, %v883
      %885 = vmatmul.f32.gmra.mxu0 %v314
      %v886 = vpop.f32.mrf.mxu0
      %v887 = vadd.f32 %v774, %v886
      %888 = vmatmul.f32.gmra.mxu0 %v320
      %v889 = vpop.f32.mrf.mxu0
      %v890 = vadd.f32 %v777, %v889
      %891 = vmatmul.f32.gmra.mxu0 %v326
      %v892 = vpop.f32.mrf.mxu0
      %v893 = vadd.f32 %v780, %v892
      %894 = vmatmul.f32.gmra.mxu0 %v332
      %v895 = vpop.f32.mrf.mxu0
      %v896 = vadd.f32 %v783, %v895
      %897 = vmatmul.f32.gmra.mxu0 %v338
      %v898 = vpop.f32.mrf.mxu0
      %v899 = vadd.f32 %v786, %v898
      %900 = vmatmul.f32.gmra.mxu0 %v344
      %v901 = vpop.f32.mrf.mxu0
      %v902 = vadd.f32 %v789, %v901
      %903 = vmatmul.f32.gmra.mxu0 %v350
      %v904 = vpop.f32.mrf.mxu0
      %v905 = vadd.f32 %v792, %v904
      %906 = vmatmul.f32.gmra.mxu0 %v356
      %v907 = vpop.f32.mrf.mxu0
      %v908 = vadd.f32 %v795, %v907
      %909 = vmatmul.f32.gmra.mxu0 %v362
      %v910 = vpop.f32.mrf.mxu0
      %v911 = vadd.f32 %v798, %v910
      %912 = vmatmul.f32.gmra.mxu0 %v368
      %v913 = vpop.f32.mrf.mxu0
      %v914 = vadd.f32 %v801, %v913
      %915 = vmatmul.f32.gmra.mxu0 %v374
      %v916 = vpop.f32.mrf.mxu0
      %v917 = vadd.f32 %v804, %v916
      %918 = vmatmul.f32.gmra.mxu0 %v380
      %v919 = vpop.f32.mrf.mxu0
      %v920 = vadd.f32 %v807, %v919
      %921 = vmatmul.f32.gmra.mxu0 %v386
      %v922 = vpop.f32.mrf.mxu0
      %v923 = vadd.f32 %v810, %v922
      %924 = vmatmul.f32.gmra.mxu0 %v392
      %v925 = vpop.f32.mrf.mxu0
      %v926 = vadd.f32 %v813, %v925
      %927 = vdwg.mxu0
      %928 = vmatpush.msra.mxu0 %v459
      %929 = vmatpush.msra.mxu0 %v458
      %930 = vmatpush.msra.mxu0 %v457
      %931 = vmatpush.msra.mxu0 %v456
      %932 = vmatpush.msra.mxu0 %v455
      %933 = vmatpush.msra.mxu0 %v454
      %934 = vmatpush.msra.mxu0 %v453
      %935 = vmatpush.msra.mxu0 %v452
      %936 = vmatpush.msra.mxu0 %v451
      %937 = vmatpush.msra.mxu0 %v450
      %938 = vmatpush.msra.mxu0 %v449
      %939 = vmatpush.msra.mxu0 %v448
      %940 = vmatpush.msra.mxu0 %v447
      %941 = vmatpush.msra.mxu0 %v446
      %942 = vmatpush.msra.mxu0 %v445
      %943 = vmatpush.msra.mxu0 %v444
      %944 = vmatmul.f32.gmra.mxu0 %v207
      %v945 = vpop.f32.mrf.mxu0
      %v946 = vadd.f32 %v833, %v945
      %947 = vmatmul.f32.gmra.mxu0 %v213
      %v948 = vpop.f32.mrf.mxu0
      %v949 = vadd.f32 %v836, %v948
      %950 = vmatmul.f32.gmra.mxu0 %v219
      %v951 = vpop.f32.mrf.mxu0
      %v952 = vadd.f32 %v839, %v951
      %953 = vmatmul.f32.gmra.mxu0 %v225
      %v954 = vpop.f32.mrf.mxu0
      %v955 = vadd.f32 %v842, %v954
      %956 = vmatmul.f32.gmra.mxu0 %v231
      %v957 = vpop.f32.mrf.mxu0
      %v958 = vadd.f32 %v845, %v957
      %959 = vmatmul.f32.gmra.mxu0 %v237
      %v960 = vpop.f32.mrf.mxu0
      %v961 = vadd.f32 %v848, %v960
      %962 = vmatmul.f32.gmra.mxu0 %v243
      %v963 = vpop.f32.mrf.mxu0
      %v964 = vadd.f32 %v851, %v963
      %965 = vmatmul.f32.gmra.mxu0 %v249
      %v966 = vpop.f32.mrf.mxu0
      %v967 = vadd.f32 %v854, %v966
      %968 = vmatmul.f32.gmra.mxu0 %v255
      %v969 = vpop.f32.mrf.mxu0
      %v970 = vadd.f32 %v857, %v969
      %971 = vmatmul.f32.gmra.mxu0 %v261
      %v972 = vpop.f32.mrf.mxu0
      %v973 = vadd.f32 %v860, %v972
      %974 = vmatmul.f32.gmra.mxu0 %v267
      %v975 = vpop.f32.mrf.mxu0
      %v976 = vadd.f32 %v863, %v975
      %977 = vmatmul.f32.gmra.mxu0 %v273
      %v978 = vpop.f32.mrf.mxu0
      %v979 = vadd.f32 %v866, %v978
      %980 = vmatmul.f32.gmra.mxu0 %v279
      %v981 = vpop.f32.mrf.mxu0
      %v982 = vadd.f32 %v869, %v981
      %983 = vmatmul.f32.gmra.mxu0 %v285
      %v984 = vpop.f32.mrf.mxu0
      %v985 = vadd.f32 %v872, %v984
      %986 = vmatmul.f32.gmra.mxu0 %v291
      %v987 = vpop.f32.mrf.mxu0
      %v988 = vadd.f32 %v875, %v987
      %989 = vmatmul.f32.gmra.mxu0 %v297
      %v990 = vpop.f32.mrf.mxu0
      %v991 = vadd.f32 %v878, %v990
      %992 = vmatmul.f32.gmra.mxu0 %v303
      %v993 = vpop.f32.mrf.mxu0
      %v994 = vadd.f32 %v881, %v993
      %995 = vmatmul.f32.gmra.mxu0 %v309
      %v996 = vpop.f32.mrf.mxu0
      %v997 = vadd.f32 %v884, %v996
      %998 = vmatmul.f32.gmra.mxu0 %v315
      %v999 = vpop.f32.mrf.mxu0
      %v1000 = vadd.f32 %v887, %v999
      %1001 = vmatmul.f32.gmra.mxu0 %v321
      %v1002 = vpop.f32.mrf.mxu0
      %v1003 = vadd.f32 %v890, %v1002
      %1004 = vmatmul.f32.gmra.mxu0 %v327
      %v1005 = vpop.f32.mrf.mxu0
      %v1006 = vadd.f32 %v893, %v1005
      %1007 = vmatmul.f32.gmra.mxu0 %v333
      %v1008 = vpop.f32.mrf.mxu0
      %v1009 = vadd.f32 %v896, %v1008
      %1010 = vmatmul.f32.gmra.mxu0 %v339
      %v1011 = vpop.f32.mrf.mxu0
      %v1012 = vadd.f32 %v899, %v1011
      %1013 = vmatmul.f32.gmra.mxu0 %v345
      %v1014 = vpop.f32.mrf.mxu0
      %v1015 = vadd.f32 %v902, %v1014
      %1016 = vmatmul.f32.gmra.mxu0 %v351
      %v1017 = vpop.f32.mrf.mxu0
      %v1018 = vadd.f32 %v905, %v1017
      %1019 = vmatmul.f32.gmra.mxu0 %v357
      %v1020 = vpop.f32.mrf.mxu0
      %v1021 = vadd.f32 %v908, %v1020
      %1022 = vmatmul.f32.gmra.mxu0 %v363
      %v1023 = vpop.f32.mrf.mxu0
      %v1024 = vadd.f32 %v911, %v1023
      %1025 = vmatmul.f32.gmra.mxu0 %v369
      %v1026 = vpop.f32.mrf.mxu0
      %v1027 = vadd.f32 %v914, %v1026
      %1028 = vmatmul.f32.gmra.mxu0 %v375
      %v1029 = vpop.f32.mrf.mxu0
      %v1030 = vadd.f32 %v917, %v1029
      %1031 = vmatmul.f32.gmra.mxu0 %v381
      %v1032 = vpop.f32.mrf.mxu0
      %v1033 = vadd.f32 %v920, %v1032
      %1034 = vmatmul.f32.gmra.mxu0 %v387
      %v1035 = vpop.f32.mrf.mxu0
      %v1036 = vadd.f32 %v923, %v1035
      %1037 = vmatmul.f32.gmra.mxu0 %v393
      %v1038 = vpop.f32.mrf.mxu0
      %v1039 = vadd.f32 %v926, %v1038
      %1040 = vdwg.mxu0
      %1041 = vmatpush.msra.mxu0 %v475
      %1042 = vmatpush.msra.mxu0 %v474
      %1043 = vmatpush.msra.mxu0 %v473
      %1044 = vmatpush.msra.mxu0 %v472
      %1045 = vmatpush.msra.mxu0 %v471
      %1046 = vmatpush.msra.mxu0 %v470
      %1047 = vmatpush.msra.mxu0 %v469
      %1048 = vmatpush.msra.mxu0 %v468
      %1049 = vmatpush.msra.mxu0 %v467
      %1050 = vmatpush.msra.mxu0 %v466
      %1051 = vmatpush.msra.mxu0 %v465
      %1052 = vmatpush.msra.mxu0 %v464
      %1053 = vmatpush.msra.mxu0 %v463
      %1054 = vmatpush.msra.mxu0 %v462
      %1055 = vmatpush.msra.mxu0 %v461
      %1056 = vmatpush.msra.mxu0 %v460
      %1057 = vmatmul.f32.gmra.mxu0 %v208
      %v1058 = vpop.f32.mrf.mxu0
      %v1059 = vadd.f32 %v946, %v1058
      %1060 = vmatmul.f32.gmra.mxu0 %v214
      %v1061 = vpop.f32.mrf.mxu0
      %v1062 = vadd.f32 %v949, %v1061
      %1063 = vmatmul.f32.gmra.mxu0 %v220
      %v1064 = vpop.f32.mrf.mxu0
      %v1065 = vadd.f32 %v952, %v1064
      %1066 = vmatmul.f32.gmra.mxu0 %v226
      %v1067 = vpop.f32.mrf.mxu0
      %v1068 = vadd.f32 %v955, %v1067
      %1069 = vmatmul.f32.gmra.mxu0 %v232
      %v1070 = vpop.f32.mrf.mxu0
      %v1071 = vadd.f32 %v958, %v1070
      %1072 = vmatmul.f32.gmra.mxu0 %v238
      %v1073 = vpop.f32.mrf.mxu0
      %v1074 = vadd.f32 %v961, %v1073
      %1075 = vmatmul.f32.gmra.mxu0 %v244
      %v1076 = vpop.f32.mrf.mxu0
      %v1077 = vadd.f32 %v964, %v1076
      %1078 = vmatmul.f32.gmra.mxu0 %v250
      %v1079 = vpop.f32.mrf.mxu0
      %v1080 = vadd.f32 %v967, %v1079
      %1081 = vmatmul.f32.gmra.mxu0 %v256
      %v1082 = vpop.f32.mrf.mxu0
      %v1083 = vadd.f32 %v970, %v1082
      %1084 = vmatmul.f32.gmra.mxu0 %v262
      %v1085 = vpop.f32.mrf.mxu0
      %v1086 = vadd.f32 %v973, %v1085
      %1087 = vmatmul.f32.gmra.mxu0 %v268
      %v1088 = vpop.f32.mrf.mxu0
      %v1089 = vadd.f32 %v976, %v1088
      %1090 = vmatmul.f32.gmra.mxu0 %v274
      %v1091 = vpop.f32.mrf.mxu0
      %v1092 = vadd.f32 %v979, %v1091
      %1093 = vmatmul.f32.gmra.mxu0 %v280
      %v1094 = vpop.f32.mrf.mxu0
      %v1095 = vadd.f32 %v982, %v1094
      %1096 = vmatmul.f32.gmra.mxu0 %v286
      %v1097 = vpop.f32.mrf.mxu0
      %v1098 = vadd.f32 %v985, %v1097
      %1099 = vmatmul.f32.gmra.mxu0 %v292
      %v1100 = vpop.f32.mrf.mxu0
      %v1101 = vadd.f32 %v988, %v1100
      %1102 = vmatmul.f32.gmra.mxu0 %v298
      %v1103 = vpop.f32.mrf.mxu0
      %v1104 = vadd.f32 %v991, %v1103
      %1105 = vmatmul.f32.gmra.mxu0 %v304
      %v1106 = vpop.f32.mrf.mxu0
      %v1107 = vadd.f32 %v994, %v1106
      %1108 = vmatmul.f32.gmra.mxu0 %v310
      %v1109 = vpop.f32.mrf.mxu0
      %v1110 = vadd.f32 %v997, %v1109
      %1111 = vmatmul.f32.gmra.mxu0 %v316
      %v1112 = vpop.f32.mrf.mxu0
      %v1113 = vadd.f32 %v1000, %v1112
      %1114 = vmatmul.f32.gmra.mxu0 %v322
      %v1115 = vpop.f32.mrf.mxu0
      %v1116 = vadd.f32 %v1003, %v1115
      %1117 = vmatmul.f32.gmra.mxu0 %v328
      %v1118 = vpop.f32.mrf.mxu0
      %v1119 = vadd.f32 %v1006, %v1118
      %1120 = vmatmul.f32.gmra.mxu0 %v334
      %v1121 = vpop.f32.mrf.mxu0
      %v1122 = vadd.f32 %v1009, %v1121
      %1123 = vmatmul.f32.gmra.mxu0 %v340
      %v1124 = vpop.f32.mrf.mxu0
      %v1125 = vadd.f32 %v1012, %v1124
      %1126 = vmatmul.f32.gmra.mxu0 %v346
      %v1127 = vpop.f32.mrf.mxu0
      %v1128 = vadd.f32 %v1015, %v1127
      %1129 = vmatmul.f32.gmra.mxu0 %v352
      %v1130 = vpop.f32.mrf.mxu0
      %v1131 = vadd.f32 %v1018, %v1130
      %1132 = vmatmul.f32.gmra.mxu0 %v358
      %v1133 = vpop.f32.mrf.mxu0
      %v1134 = vadd.f32 %v1021, %v1133
      %1135 = vmatmul.f32.gmra.mxu0 %v364
      %v1136 = vpop.f32.mrf.mxu0
      %v1137 = vadd.f32 %v1024, %v1136
      %1138 = vmatmul.f32.gmra.mxu0 %v370
      %v1139 = vpop.f32.mrf.mxu0
      %v1140 = vadd.f32 %v1027, %v1139
      %1141 = vmatmul.f32.gmra.mxu0 %v376
      %v1142 = vpop.f32.mrf.mxu0
      %v1143 = vadd.f32 %v1030, %v1142
      %1144 = vmatmul.f32.gmra.mxu0 %v382
      %v1145 = vpop.f32.mrf.mxu0
      %v1146 = vadd.f32 %v1033, %v1145
      %1147 = vmatmul.f32.gmra.mxu0 %v388
      %v1148 = vpop.f32.mrf.mxu0
      %v1149 = vadd.f32 %v1036, %v1148
      %1150 = vmatmul.f32.gmra.mxu0 %v394
      %v1151 = vpop.f32.mrf.mxu0
      %v1152 = vadd.f32 %v1039, %v1151
      %1153 = vdwg.mxu0
      %1154 = vmatpush.msra.mxu0 0.0
      %1155 = vmatpush.msra.mxu0 0.0
      %1156 = vmatpush.msra.mxu0 0.0
      %1157 = vmatpush.msra.mxu0 0.0
      %1158 = vmatpush.msra.mxu0 %v587
      %1159 = vmatpush.msra.mxu0 %v486
      %1160 = vmatpush.msra.mxu0 %v485
      %1161 = vmatpush.msra.mxu0 %v484
      %1162 = vmatpush.msra.mxu0 %v483
      %1163 = vmatpush.msra.mxu0 %v482
      %1164 = vmatpush.msra.mxu0 %v481
      %1165 = vmatpush.msra.mxu0 %v480
      %1166 = vmatpush.msra.mxu0 %v479
      %1167 = vmatpush.msra.mxu0 %v478
      %1168 = vmatpush.msra.mxu0 %v477
      %1169 = vmatpush.msra.mxu0 %v476
      %1170 = vmatmul.f32.gmra.mxu0 %v490
      %v1171 = vpop.f32.mrf.mxu0
      %v1172 = vadd.f32 %v1059, %v1171
      %1173 = vmatmul.f32.gmra.mxu0 %v493
      %v1174 = vpop.f32.mrf.mxu0
      %v1175 = vadd.f32 %v1062, %v1174
      %1176 = vmatmul.f32.gmra.mxu0 %v496
      %v1177 = vpop.f32.mrf.mxu0
      %v1178 = vadd.f32 %v1065, %v1177
      %1179 = vmatmul.f32.gmra.mxu0 %v499
      %v1180 = vpop.f32.mrf.mxu0
      %v1181 = vadd.f32 %v1068, %v1180
      %1182 = vmatmul.f32.gmra.mxu0 %v502
      %v1183 = vpop.f32.mrf.mxu0
      %v1184 = vadd.f32 %v1071, %v1183
      %1185 = vmatmul.f32.gmra.mxu0 %v505
      %v1186 = vpop.f32.mrf.mxu0
      %v1187 = vadd.f32 %v1074, %v1186
      %1188 = vmatmul.f32.gmra.mxu0 %v508
      %v1189 = vpop.f32.mrf.mxu0
      %v1190 = vadd.f32 %v1077, %v1189
      %1191 = vmatmul.f32.gmra.mxu0 %v511
      %v1192 = vpop.f32.mrf.mxu0
      %v1193 = vadd.f32 %v1080, %v1192
      %1194 = vmatmul.f32.gmra.mxu0 %v514
      %v1195 = vpop.f32.mrf.mxu0
      %v1196 = vadd.f32 %v1083, %v1195
      %1197 = vmatmul.f32.gmra.mxu0 %v517
      %v1198 = vpop.f32.mrf.mxu0
      %v1199 = vadd.f32 %v1086, %v1198
      %1200 = vmatmul.f32.gmra.mxu0 %v520
      %v1201 = vpop.f32.mrf.mxu0
      %v1202 = vadd.f32 %v1089, %v1201
      %1203 = vmatmul.f32.gmra.mxu0 %v523
      %v1204 = vpop.f32.mrf.mxu0
      %v1205 = vadd.f32 %v1092, %v1204
      %1206 = vmatmul.f32.gmra.mxu0 %v526
      %v1207 = vpop.f32.mrf.mxu0
      %v1208 = vadd.f32 %v1095, %v1207
      %1209 = vmatmul.f32.gmra.mxu0 %v529
      %v1210 = vpop.f32.mrf.mxu0
      %v1211 = vadd.f32 %v1098, %v1210
      %1212 = vmatmul.f32.gmra.mxu0 %v532
      %v1213 = vpop.f32.mrf.mxu0
      %v1214 = vadd.f32 %v1101, %v1213
      %1215 = vmatmul.f32.gmra.mxu0 %v535
      %v1216 = vpop.f32.mrf.mxu0
      %v1217 = vadd.f32 %v1104, %v1216
      %1218 = vmatmul.f32.gmra.mxu0 %v538
      %v1219 = vpop.f32.mrf.mxu0
      %v1220 = vadd.f32 %v1107, %v1219
      %1221 = vmatmul.f32.gmra.mxu0 %v541
      %v1222 = vpop.f32.mrf.mxu0
      %v1223 = vadd.f32 %v1110, %v1222
      %1224 = vmatmul.f32.gmra.mxu0 %v544
      %v1225 = vpop.f32.mrf.mxu0
      %v1226 = vadd.f32 %v1113, %v1225
      %1227 = vmatmul.f32.gmra.mxu0 %v547
      %v1228 = vpop.f32.mrf.mxu0
      %v1229 = vadd.f32 %v1116, %v1228
      %1230 = vmatmul.f32.gmra.mxu0 %v550
      %v1231 = vpop.f32.mrf.mxu0
      %v1232 = vadd.f32 %v1119, %v1231
      %1233 = vmatmul.f32.gmra.mxu0 %v553
      %v1234 = vpop.f32.mrf.mxu0
      %v1235 = vadd.f32 %v1122, %v1234
      %1236 = vmatmul.f32.gmra.mxu0 %v556
      %v1237 = vpop.f32.mrf.mxu0
      %v1238 = vadd.f32 %v1125, %v1237
      %1239 = vmatmul.f32.gmra.mxu0 %v559
      %v1240 = vpop.f32.mrf.mxu0
      %v1241 = vadd.f32 %v1128, %v1240
      %1242 = vmatmul.f32.gmra.mxu0 %v562
      %v1243 = vpop.f32.mrf.mxu0
      %v1244 = vadd.f32 %v1131, %v1243
      %1245 = vmatmul.f32.gmra.mxu0 %v565
      %v1246 = vpop.f32.mrf.mxu0
      %v1247 = vadd.f32 %v1134, %v1246
      %1248 = vmatmul.f32.gmra.mxu0 %v568
      %v1249 = vpop.f32.mrf.mxu0
      %v1250 = vadd.f32 %v1137, %v1249
      %1251 = vmatmul.f32.gmra.mxu0 %v571
      %v1252 = vpop.f32.mrf.mxu0
      %v1253 = vadd.f32 %v1140, %v1252
      %1254 = vmatmul.f32.gmra.mxu0 %v574
      %v1255 = vpop.f32.mrf.mxu0
      %v1256 = vadd.f32 %v1143, %v1255
      %1257 = vmatmul.f32.gmra.mxu0 %v577
      %v1258 = vpop.f32.mrf.mxu0
      %v1259 = vadd.f32 %v1146, %v1258
      %1260 = vmatmul.f32.gmra.mxu0 %v580
      %v1261 = vpop.f32.mrf.mxu0
      %v1262 = vadd.f32 %v1149, %v1261
      %1263 = vmatmul.f32.gmra.mxu0 %v583
      %v1264 = vpop.f32.mrf.mxu0
      %v1265 = vadd.f32 %v1152, %v1264
      %1266 = vdwg.mxu0
      %v1267 = vld [vmem:[%s2] sm:$0x1]
      %v1269 = vperm.slane %v1267, 0
      %v1271 = vmul.f32 %v1172, %v1269
      %v1272 = vmul.f32 %v1175, %v1269
      %v1273 = vmul.f32 %v1178, %v1269
      %v1274 = vmul.f32 %v1181, %v1269
      %v1275 = vmul.f32 %v1184, %v1269
      %v1276 = vmul.f32 %v1187, %v1269
      %v1277 = vmul.f32 %v1190, %v1269
      %v1278 = vmul.f32 %v1193, %v1269
      %v1279 = vmul.f32 %v1196, %v1269
      %v1280 = vmul.f32 %v1199, %v1269
      %v1281 = vmul.f32 %v1202, %v1269
      %v1282 = vmul.f32 %v1205, %v1269
      %v1283 = vmul.f32 %v1208, %v1269
      %v1284 = vmul.f32 %v1211, %v1269
      %v1285 = vmul.f32 %v1214, %v1269
      %v1286 = vmul.f32 %v1217, %v1269
      %v1287 = vmul.f32 %v1220, %v1269
      %v1288 = vmul.f32 %v1223, %v1269
      %v1289 = vmul.f32 %v1226, %v1269
      %v1290 = vmul.f32 %v1229, %v1269
      %v1291 = vmul.f32 %v1232, %v1269
      %v1292 = vmul.f32 %v1235, %v1269
      %v1293 = vmul.f32 %v1238, %v1269
      %v1294 = vmul.f32 %v1241, %v1269
      %v1295 = vmul.f32 %v1244, %v1269
      %v1296 = vmul.f32 %v1247, %v1269
      %v1297 = vmul.f32 %v1250, %v1269
      %v1298 = vmul.f32 %v1253, %v1269
      %v1299 = vmul.f32 %v1256, %v1269
      %v1300 = vmul.f32 %v1259, %v1269
      %v1301 = vmul.f32 %v1262, %v1269
      %v1302 = vmul.f32 %v1265, %v1269
      %v1303 = vld [vmem:[%s3] sm:$0x1]
      %v1305 = vperm.slane %v1303, 0
      %v1307 = vadd.f32 %v1271, %v1305
      %v1308 = vadd.f32 %v1272, %v1305
      %v1309 = vadd.f32 %v1273, %v1305
      %v1310 = vadd.f32 %v1274, %v1305
      %v1311 = vadd.f32 %v1275, %v1305
      %v1312 = vadd.f32 %v1276, %v1305
      %v1313 = vadd.f32 %v1277, %v1305
      %v1314 = vadd.f32 %v1278, %v1305
      %v1315 = vadd.f32 %v1279, %v1305
      %v1316 = vadd.f32 %v1280, %v1305
      %v1317 = vadd.f32 %v1281, %v1305
      %v1318 = vadd.f32 %v1282, %v1305
      %v1319 = vadd.f32 %v1283, %v1305
      %v1320 = vadd.f32 %v1284, %v1305
      %v1321 = vadd.f32 %v1285, %v1305
      %v1322 = vadd.f32 %v1286, %v1305
      %v1323 = vadd.f32 %v1287, %v1305
      %v1324 = vadd.f32 %v1288, %v1305
      %v1325 = vadd.f32 %v1289, %v1305
      %v1326 = vadd.f32 %v1290, %v1305
      %v1327 = vadd.f32 %v1291, %v1305
      %v1328 = vadd.f32 %v1292, %v1305
      %v1329 = vadd.f32 %v1293, %v1305
      %v1330 = vadd.f32 %v1294, %v1305
      %v1331 = vadd.f32 %v1295, %v1305
      %v1332 = vadd.f32 %v1296, %v1305
      %v1333 = vadd.f32 %v1297, %v1305
      %v1334 = vadd.f32 %v1298, %v1305
      %v1335 = vadd.f32 %v1299, %v1305
      %v1336 = vadd.f32 %v1300, %v1305
      %v1337 = vadd.f32 %v1301, %v1305
      %v1338 = vadd.f32 %v1302, %v1305
      %vm1339 = vcmp.ge.f32.partialorder %v1307, 0.0
      %vm1340 = vcmp.ge.f32.partialorder %v1308, 0.0
      %vm1341 = vcmp.ge.f32.partialorder %v1309, 0.0
      %vm1342 = vcmp.ge.f32.partialorder %v1310, 0.0
      %vm1343 = vcmp.ge.f32.partialorder %v1311, 0.0
      %vm1344 = vcmp.ge.f32.partialorder %v1312, 0.0
      %vm1345 = vcmp.ge.f32.partialorder %v1313, 0.0
      %vm1346 = vcmp.ge.f32.partialorder %v1314, 0.0
      %vm1347 = vcmp.ge.f32.partialorder %v1315, 0.0
      %vm1348 = vcmp.ge.f32.partialorder %v1316, 0.0
      %vm1349 = vcmp.ge.f32.partialorder %v1317, 0.0
      %vm1350 = vcmp.ge.f32.partialorder %v1318, 0.0
      %vm1351 = vcmp.ge.f32.partialorder %v1319, 0.0
      %vm1352 = vcmp.ge.f32.partialorder %v1320, 0.0
      %vm1353 = vcmp.ge.f32.partialorder %v1321, 0.0
      %vm1354 = vcmp.ge.f32.partialorder %v1322, 0.0
      %vm1355 = vcmp.ge.f32.partialorder %v1323, 0.0
      %vm1356 = vcmp.ge.f32.partialorder %v1324, 0.0
      %vm1357 = vcmp.ge.f32.partialorder %v1325, 0.0
      %vm1358 = vcmp.ge.f32.partialorder %v1326, 0.0
      %vm1359 = vcmp.ge.f32.partialorder %v1327, 0.0
      %vm1360 = vcmp.ge.f32.partialorder %v1328, 0.0
      %vm1361 = vcmp.ge.f32.partialorder %v1329, 0.0
      %vm1362 = vcmp.ge.f32.partialorder %v1330, 0.0
      %vm1363 = vcmp.ge.f32.partialorder %v1331, 0.0
      %vm1364 = vcmp.ge.f32.partialorder %v1332, 0.0
      %vm1365 = vcmp.ge.f32.partialorder %v1333, 0.0
      %vm1366 = vcmp.ge.f32.partialorder %v1334, 0.0
      %vm1367 = vcmp.ge.f32.partialorder %v1335, 0.0
      %vm1368 = vcmp.ge.f32.partialorder %v1336, 0.0
      %vm1369 = vcmp.ge.f32.partialorder %v1337, 0.0
      %vm1370 = vcmp.ge.f32.partialorder %v1338, 0.0
      %v1371 = vmul.f32 %v1307, 0.1
      %v1372 = vmul.f32 %v1308, 0.1
      %v1373 = vmul.f32 %v1309, 0.1
      %v1374 = vmul.f32 %v1310, 0.1
      %v1375 = vmul.f32 %v1311, 0.1
      %v1376 = vmul.f32 %v1312, 0.1
      %v1377 = vmul.f32 %v1313, 0.1
      %v1378 = vmul.f32 %v1314, 0.1
      %v1379 = vmul.f32 %v1315, 0.1
      %v1380 = vmul.f32 %v1316, 0.1
      %v1381 = vmul.f32 %v1317, 0.1
      %v1382 = vmul.f32 %v1318, 0.1
      %v1383 = vmul.f32 %v1319, 0.1
      %v1384 = vmul.f32 %v1320, 0.1
      %v1385 = vmul.f32 %v1321, 0.1
      %v1386 = vmul.f32 %v1322, 0.1
      %v1387 = vmul.f32 %v1323, 0.1
      %v1388 = vmul.f32 %v1324, 0.1
      %v1389 = vmul.f32 %v1325, 0.1
      %v1390 = vmul.f32 %v1326, 0.1
      %v1391 = vmul.f32 %v1327, 0.1
      %v1392 = vmul.f32 %v1328, 0.1
      %v1393 = vmul.f32 %v1329, 0.1
      %v1394 = vmul.f32 %v1330, 0.1
      %v1395 = vmul.f32 %v1331, 0.1
      %v1396 = vmul.f32 %v1332, 0.1
      %v1397 = vmul.f32 %v1333, 0.1
      %v1398 = vmul.f32 %v1334, 0.1
      %v1399 = vmul.f32 %v1335, 0.1
      %v1400 = vmul.f32 %v1336, 0.1
      %v1401 = vmul.f32 %v1337, 0.1
      %v1402 = vmul.f32 %v1338, 0.1
      %v1403 = vsel %vm1339, %v1307, %v1371
      %v1404 = vsel %vm1340, %v1308, %v1372
      %v1405 = vsel %vm1341, %v1309, %v1373
      %v1406 = vsel %vm1342, %v1310, %v1374
      %v1407 = vsel %vm1343, %v1311, %v1375
      %v1408 = vsel %vm1344, %v1312, %v1376
      %v1409 = vsel %vm1345, %v1313, %v1377
      %v1410 = vsel %vm1346, %v1314, %v1378
      %v1411 = vsel %vm1347, %v1315, %v1379
      %v1412 = vsel %vm1348, %v1316, %v1380
      %v1413 = vsel %vm1349, %v1317, %v1381
      %v1414 = vsel %vm1350, %v1318, %v1382
      %v1415 = vsel %vm1351, %v1319, %v1383
      %v1416 = vsel %vm1352, %v1320, %v1384
      %v1417 = vsel %vm1353, %v1321, %v1385
      %v1418 = vsel %vm1354, %v1322, %v1386
      %v1419 = vsel %vm1355, %v1323, %v1387
      %v1420 = vsel %vm1356, %v1324, %v1388
      %v1421 = vsel %vm1357, %v1325, %v1389
      %v1422 = vsel %vm1358, %v1326, %v1390
      %v1423 = vsel %vm1359, %v1327, %v1391
      %v1424 = vsel %vm1360, %v1328, %v1392
      %v1425 = vsel %vm1361, %v1329, %v1393
      %v1426 = vsel %vm1362, %v1330, %v1394
      %v1427 = vsel %vm1363, %v1331, %v1395
      %v1428 = vsel %vm1364, %v1332, %v1396
      %v1429 = vsel %vm1365, %v1333, %v1397
      %v1430 = vsel %vm1366, %v1334, %v1398
      %v1431 = vsel %vm1367, %v1335, %v1399
      %v1432 = vsel %vm1368, %v1336, %v1400
      %v1433 = vsel %vm1369, %v1337, %v1401
      %v1434 = vsel %vm1370, %v1338, %v1402
      %vm1435 = vcmask 523264
      %1436 = vst.msk [vmem:[%s202] sm:$0xff] %vm1435, %v1403
      %1437 = vst.msk [vmem:[%s202 + $0x8] sm:$0xff] %vm1435, %v1404
      %1438 = vst.msk [vmem:[%s202 + $0x10] sm:$0xff] %vm1435, %v1405
      %1439 = vst.msk [vmem:[%s202 + $0x18] sm:$0xff] %vm1435, %v1406
      %1440 = vst.msk [vmem:[%s202 + $0x20] sm:$0xff] %vm1435, %v1407
      %1441 = vst.msk [vmem:[%s202 + $0x28] sm:$0xff] %vm1435, %v1408
      %1442 = vst.msk [vmem:[%s202 + $0x30] sm:$0xff] %vm1435, %v1409
      %1443 = vst.msk [vmem:[%s202 + $0x38] sm:$0xff] %vm1435, %v1410
      %1444 = vst.msk [vmem:[%s202 + $0x40] sm:$0xff] %vm1435, %v1411
      %1445 = vst.msk [vmem:[%s202 + $0x48] sm:$0xff] %vm1435, %v1412
      %1446 = vst.msk [vmem:[%s202 + $0x50] sm:$0xff] %vm1435, %v1413
      %1447 = vst.msk [vmem:[%s202 + $0x58] sm:$0xff] %vm1435, %v1414
      %1448 = vst.msk [vmem:[%s202 + $0x60] sm:$0xff] %vm1435, %v1415
      %1449 = vst.msk [vmem:[%s202 + $0x68] sm:$0xff] %vm1435, %v1416
      %1450 = vst.msk [vmem:[%s202 + $0x70] sm:$0xff] %vm1435, %v1417
      %1451 = vst.msk [vmem:[%s202 + $0x78] sm:$0xff] %vm1435, %v1418
      %1452 = vst.msk [vmem:[%s202 + $0x80] sm:$0xff] %vm1435, %v1419
      %1453 = vst.msk [vmem:[%s202 + $0x88] sm:$0xff] %vm1435, %v1420
      %1454 = vst.msk [vmem:[%s202 + $0x90] sm:$0xff] %vm1435, %v1421
      %1455 = vst.msk [vmem:[%s202 + $0x98] sm:$0xff] %vm1435, %v1422
      %1456 = vst.msk [vmem:[%s202 + $0xa0] sm:$0xff] %vm1435, %v1423
      %1457 = vst.msk [vmem:[%s202 + $0xa8] sm:$0xff] %vm1435, %v1424
      %1458 = vst.msk [vmem:[%s202 + $0xb0] sm:$0xff] %vm1435, %v1425
      %1459 = vst.msk [vmem:[%s202 + $0xb8] sm:$0xff] %vm1435, %v1426
      %1460 = vst.msk [vmem:[%s202 + $0xc0] sm:$0xff] %vm1435, %v1427
      %1461 = vst.msk [vmem:[%s202 + $0xc8] sm:$0xff] %vm1435, %v1428
      %1462 = vst.msk [vmem:[%s202 + $0xd0] sm:$0xff] %vm1435, %v1429
      %1463 = vst.msk [vmem:[%s202 + $0xd8] sm:$0xff] %vm1435, %v1430
      %1464 = vst.msk [vmem:[%s202 + $0xe0] sm:$0xff] %vm1435, %v1431
      %1465 = vst.msk [vmem:[%s202 + $0xe8] sm:$0xff] %vm1435, %v1432
      %1466 = vst.msk [vmem:[%s202 + $0xf0] sm:$0xff] %vm1435, %v1433
      %1467 = vst.msk [vmem:[%s202 + $0xf8] sm:$0xff] %vm1435, %v1434
      %s1468 = smul.u32 32, %s15
      %p1469 = scmp.lt.s32.totalorder %s1468, 63
      %s1470 = scalar_select %p1469, %s1468, 63
      %s1471 = smul.addr %s1470, 8
      %s1472 = scalar_lea.vmem %s4, %s1471
      // Predicated region
      $region37: #{v1net_forward.10} parent=35 // pred_check
        %p1473 = pneg %p122
      $region38: #{v1net_forward.10} parent=35 // pred_check_branch
        %1475 = sbr.rel (%p1473) target = $region40
      $region39: #{v1net_forward.10} parent=35 // pred_region
        %s1476 = smul.u32 32, %s15
      $region40: #{v1net_forward.10} parent=35 // pred_fallthru
        _
    $region36: #{v1net_forward.10} parent=5 // pred_fallthru
      _
    %p1477 = scmp.le.s32.totalorder 2, %s10
    // Predicated region
    $region41: #{v1net_forward.10} parent=5 // pred_check
      %p1478 = pneg %p1477
    $region42: #{v1net_forward.10} parent=5 // pred_check_branch
      %1480 = sbr.rel (%p1478) target = $region44
    $region43: #{v1net_forward.10} parent=5 // pred_region
      %s1481 = ssub.s32 %s10, 2
      // Predicated region
      $region45: #{v1net_forward.10} parent=43 // pred_check
        %p1482 = pneg %p128
      $region46: #{v1net_forward.10} parent=43 // pred_check_branch
        %1484 = sbr.rel (%p1482) target = $region48
      $region47: #{v1net_forward.10} parent=43 // pred_region
        %s1485 = smul.u32 32, %s16
        %p1486 = scmp.lt.s32.totalorder %s1485, 63
        %s1487 = scalar_select %p1486, %s1485, 63
        %s1488 = smul.addr %s1487, 8
        %s1489 = scalar_lea.vmem %s4, %s1488
      $region48: #{v1net_forward.10} parent=43 // pred_fallthru
        _
    $region44: #{v1net_forward.10} parent=5 // pred_fallthru
      _
  $region6: #{v1net_forward.10} parent=0 // loop_footer
    %s14 = sadd.s32 1, %s10
  $region7: #{v1net_forward.10} parent=0 // loop_footer_branch
    %9 = sbr.rel target = $region3
  $region8: #{v1net_forward.10} parent=0 // loop_exit
    _

// kernel: v1net_forward.11
$region0: #{v1net_forward.11}
  #allocation0 [shape = 'u32[]', space=smem, size = 0x4, offset = 0x4, fixed_abs, tag = 'smem constant byte address 0x4 - core index']
  #allocation1 [shape = 'u32[72,128]{1,0:T(1,128)}', space=vmem, size = 0x9000, scoped, tag = 'internal scratch']
  %s0 = inlined_call_operand.vmem [shape: f32[9,32,256], index: 0, kind: input, shape index: {}]
  %s1 = inlined_call_operand.vmem [shape: f32[32,256], index: 1, kind: output, shape index: {}]
  %s2 = sld [smem:[#allocation0]]
  $region60: #{v1net_forward.11} parent=0
    _
  %s4 = ssub.s32 1, %s2
  %s5 = scalar_select 0, %s4, %s2
  $region1: #{v1net_forward.11} parent=0
    #allocation2 [shape = 'u8[294912]{0}', space=vmem, size = 0x48000, scoped, tag = 'input window, operand 0']
    loop: start=0, step=1, limit=4
    $region2: #{v1net_forward.11} parent=1 // loop_pre_header
      _
    $region3: #{v1net_forward.11} parent=1 // loop_header
      %s7 = sphi 0, %s11
      %p8 = scmp.ge.s32.totalorder %s7, 4
      %s17 = sphi 0, %s19
      %s20 = sphi 0, %s17
      %s21 = sphi 0, %s20
      %s37 = sphi 0, %s21
      %s43 = sphi 0, %s45
      %s46 = sphi 0, %s43
      %s47 = sphi 0, %s46
      %s63 = sphi 0, %s47
    $region4: #{v1net_forward.11} parent=1 // loop_header_branch
      %10 = sbr.rel (%p8) target = $region8
    $region5: #{v1net_forward.11} parent=1 // loop_body
      %s12 = ssub.s32 %s7, 1
      %s13 = ssub.s32 %s7, 2
      %s14 = sadd.s32 %s7, 1
      %s15 = ssub.s32 %s7, %s14
      %p16 = scmp.eq.s32.totalorder %s15, 0
      %s18 = sadd.s32 %s17, 1
      %s19 = scalar_select %p16, %s17, %s18
      %p22 = pneg %p16
      %p23 = scmp.eq.s32.totalorder %s7, 1
      %p24 = por %p22, %p23
      %p25 = scmp.ne.s32.totalorder %s17, %s20
      %p26 = scmp.eq.s32.totalorder %s7, 0
      %p27 = por %p25, %p26
      %p28 = scmp.ne.s32.totalorder %s17, %s20
      %p29 = scmp.eq.s32.totalorder %s12, 1
      %p30 = por %p28, %p29
      %p31 = scmp.ne.s32.totalorder %s20, %s21
      %p32 = scmp.eq.s32.totalorder %s12, 0
      %p33 = por %p31, %p32
      %p34 = scmp.ne.s32.totalorder %s20, %s21
      %p35 = scmp.eq.s32.totalorder %s13, 1
      %p36 = por %p34, %p35
      %p38 = scmp.ne.s32.totalorder %s21, %s37
      %p39 = scmp.eq.s32.totalorder %s13, 0
      %p40 = por %p38, %p39
      %s41 = ssub.s32 %s7, %s14
      %p42 = scmp.eq.s32.totalorder %s41, 0
      %s44 = sadd.s32 %s43, 1
      %s45 = scalar_select %p42, %s43, %s44
      %p48 = pneg %p42
      %p49 = scmp.eq.s32.totalorder %s7, 1
      %p50 = por %p48, %p49
      %p51 = scmp.ne.s32.totalorder %s43, %s46
      %p52 = scmp.eq.s32.totalorder %s7, 0
      %p53 = por %p51, %p52
      %p54 = scmp.ne.s32.totalorder %s43, %s46
      %p55 = scmp.eq.s32.totalorder %s12, 1
      %p56 = por %p54, %p55
      %p57 = scmp.ne.s32.totalorder %s46, %s47
      %p58 = scmp.eq.s32.totalorder %s12, 0
      %p59 = por %p57, %p58
      %p60 = scmp.ne.s32.totalorder %s46, %s47
      %p61 = scmp.eq.s32.totalorder %s13, 1
      %p62 = por %p60, %p61
      %p64 = scmp.ne.s32.totalorder %s47, %s63
      %p65 = scmp.eq.s32.totalorder %s13, 0
      %p66 = por %p64, %p65
      %p67 = scmp.le.s32.totalorder 1, %s7
      %p68 = scmp.lt.s32.totalorder %s7, 3
      %p69 = pnand %p67, %p68
      %p70 = pneg %p69
      // Predicated region
      $region9: #{v1net_forward.11} parent=5 // pred_check
        _
      $region10: #{v1net_forward.11} parent=5 // pred_check_branch
        %72 = sbr.rel (%p69) target = $region12
      $region11: #{v1net_forward.11} parent=5 // pred_region
        %s73 = ssub.s32 %s7, 1
      $region12: #{v1net_forward.11} parent=5 // pred_fallthru
        _
      %p74 = scmp.lt.s32.totalorder %s7, 2
      // Predicated region
      $region13: #{v1net_forward.11} parent=5 // pred_check
        %p75 = pneg %p74
      $region14: #{v1net_forward.11} parent=5 // pred_check_branch
        %77 = sbr.rel (%p75) target = $region16
      $region15: #{v1net_forward.11} parent=5 // pred_region
        // Predicated region
        $region17: #{v1net_forward.11} parent=15 // pred_check
          %p78 = pneg %p27
        $region18: #{v1net_forward.11} parent=15 // pred_check_branch
          %80 = sbr.rel (%p78) target = $region20
        $region19: #{v1net_forward.11} parent=15 // pred_region
          %s81 = sand.u32 %s17, 1
          %s82 = sand.u32 %s17, 1
          %s83 = smul.addr %s82, 288
          %s84 = scalar_lea.vmem [#allocation2], %s83
          %s85 = smul.u32 2, %s7
          %s86 = smul.addr %s85, 2
          %s87 = smul.addr %s86, 8
          %s88 = scalar_lea.vmem %s0, %s87
          // Predicated region
          $region21: #{v1net_forward.11} parent=19 // pred_check
            _
          $region22: #{v1net_forward.11} parent=19 // pred_check_branch
            %90 = sbr.rel (0) target = $region24
          $region23: #{v1net_forward.11} parent=19 // pred_region
            // Predicated region
            $region25: #{v1net_forward.11} parent=23 // pred_check
              _
            $region26: #{v1net_forward.11} parent=23 // pred_check_branch
              %92 = sbr.rel (0) target = $region28
            $region27: #{v1net_forward.11} parent=23 // pred_region
              loop: start=0, step=1, limit=1
              $region29: #{v1net_forward.11} parent=27 // loop_pre_header
                _
              $region30: #{v1net_forward.11} parent=27 // loop_header
                %s94 = sphi 0, %s98
                %p95 = scmp.ge.s32.totalorder %s94, 1
                %s99 = sphi %s88, %s88
                %s100 = sphi %s84, %s84
              $region31: #{v1net_forward.11} parent=27 // loop_header_branch
                %97 = sbr.rel (%p95) target = $region35
              $region32: #{v1net_forward.11} parent=27 // loop_body
                %v101 = vld [vmem:[%s99] sm:$0xff]
                %102 = vst [vmem:[%s100] sm:$0xff] %v101
                %v103 = vld [vmem:[%s99 + $0x8] sm:$0xff]
                %104 = vst [vmem:[%s100 + $0x8] sm:$0xff] %v103
                %v105 = vld [vmem:[%s99 + $0x10] sm:$0xff]
                %106 = vst [vmem:[%s100 + $0x10] sm:$0xff] %v105
                %v107 = vld [vmem:[%s99 + $0x18] sm:$0xff]
                %108 = vst [vmem:[%s100 + $0x18] sm:$0xff] %v107
                %v109 = vld [vmem:[%s99 + $0x40] sm:$0xff]
                %110 = vst [vmem:[%s100 + $0x20] sm:$0xff] %v109
                %v111 = vld [vmem:[%s99 + $0x48] sm:$0xff]
                %112 = vst [vmem:[%s100 + $0x28] sm:$0xff] %v111
                %v113 = vld [vmem:[%s99 + $0x50] sm:$0xff]
                %114 = vst [vmem:[%s100 + $0x30] sm:$0xff] %v113
                %v115 = vld [vmem:[%s99 + $0x58] sm:$0xff]
                %116 = vst [vmem:[%s100 + $0x38] sm:$0xff] %v115
                %v117 = vld [vmem:[%s99 + $0x80] sm:$0xff]
                %118 = vst [vmem:[%s100 + $0x40] sm:$0xff] %v117
                %v119 = vld [vmem:[%s99 + $0x88] sm:$0xff]
                %120 = vst [vmem:[%s100 + $0x48] sm:$0xff] %v119
                %v121 = vld [vmem:[%s99 + $0x90] sm:$0xff]
                %122 = vst [vmem:[%s100 + $0x50] sm:$0xff] %v121
                %v123 = vld [vmem:[%s99 + $0x98] sm:$0xff]
                %124 = vst [vmem:[%s100 + $0x58] sm:$0xff] %v123
                %v125 = vld [vmem:[%s99 + $0xc0] sm:$0xff]
                %126 = vst [vmem:[%s100 + $0x60] sm:$0xff] %v125
                %v127 = vld [vmem:[%s99 + $0xc8] sm:$0xff]
                %128 = vst [vmem:[%s100 + $0x68] sm:$0xff] %v127
                %v129 = vld [vmem:[%s99 + $0xd0] sm:$0xff]
                %130 = vst [vmem:[%s100 + $0x70] sm:$0xff] %v129
                %v131 = vld [vmem:[%s99 + $0xd8] sm:$0xff]
                %132 = vst [vmem:[%s100 + $0x78] sm:$0xff] %v131
                %v133 = vld [vmem:[%s99 + $0x100] sm:$0xff]
                %134 = vst [vmem:[%s100 + $0x80] sm:$0xff] %v133
                %v135 = vld [vmem:[%s99 + $0x108] sm:$0xff]
                %136 = vst [vmem:[%s100 + $0x88] sm:$0xff] %v135
                %v137 = vld [vmem:[%s99 + $0x110] sm:$0xff]
                %138 = vst [vmem:[%s100 + $0x90] sm:$0xff] %v137
                %v139 = vld [vmem:[%s99 + $0x118] sm:$0xff]
                %140 = vst [vmem:[%s100 + $0x98] sm:$0xff] %v139
                %v141 = vld [vmem:[%s99 + $0x140] sm:$0xff]
                %142 = vst [vmem:[%s100 + $0xa0] sm:$0xff] %v141
                %v143 = vld [vmem:[%s99 + $0x148] sm:$0xff]
                %144 = vst [vmem:[%s100 + $0xa8] sm:$0xff] %v143
                %v145 = vld [vmem:[%s99 + $0x150] sm:$0xff]
                %146 = vst [vmem:[%s100 + $0xb0] sm:$0xff] %v145
                %v147 = vld [vmem:[%s99 + $0x158] sm:$0xff]
                %148 = vst [vmem:[%s100 + $0xb8] sm:$0xff] %v147
                %v149 = vld [vmem:[%s99 + $0x180] sm:$0xff]
                %150 = vst [vmem:[%s100 + $0xc0] sm:$0xff] %v149
                %v151 = vld [vmem:[%s99 + $0x188] sm:$0xff]
                %152 = vst [vmem:[%s100 + $0xc8] sm:$0xff] %v151
                %v153 = vld [vmem:[%s99 + $0x190] sm:$0xff]
                %154 = vst [vmem:[%s100 + $0xd0] sm:$0xff] %v153
                %v155 = vld [vmem:[%s99 + $0x198] sm:$0xff]
                %156 = vst [vmem:[%s100 + $0xd8] sm:$0xff] %v155
                %v157 = vld [vmem:[%s99 + $0x1c0] sm:$0xff]
                %158 = vst [vmem:[%s100 + $0xe0] sm:$0xff] %v157
                %v159 = vld [vmem:[%s99 + $0x1c8] sm:$0xff]
                %160 = vst [vmem:[%s100 + $0xe8] sm:$0xff] %v159
                %v161 = vld [vmem:[%s99 + $0x1d0] sm:$0xff]
                %162 = vst [vmem:[%s100 + $0xf0] sm:$0xff] %v161
                %v163 = vld [vmem:[%s99 + $0x1d8] sm:$0xff]
                %164 = vst [vmem:[%s100 + $0xf8] sm:$0xff] %v163
                %v165 = vld [vmem:[%s99 + $0x200] sm:$0xff]
                %166 = vst [vmem:[%s100 + $0x100] sm:$0xff] %v165
                %v167 = vld [vmem:[%s99 + $0x208] sm:$0xff]
                %168 = vst [vmem:[%s100 + $0x108] sm:$0xff] %v167
                %v169 = vld [vmem:[%s99 + $0x210] sm:$0xff]
                %170 = vst [vmem:[%s100 + $0x110] sm:$0xff] %v169
                %v171 = vld [vmem:[%s99 + $0x218] sm:$0xff]
                %172 = vst [vmem:[%s100 + $0x118] sm:$0xff] %v171
              $region33: #{v1net_forward.11} parent=27 // loop_footer
                %s98 = sadd.s32 1, %s94
              $region34: #{v1net_forward.11} parent=27 // loop_footer_branch
                %93 = sbr.rel target = $region30
              $region35: #{v1net_forward.11} parent=27 // loop_exit
                _
            $region28: #{v1net_forward.11} parent=23 // pred_fallthru
              _
            // Predicated region
            $region36: #{v1net_forward.11} parent=23 // pred_check
              _
            $region37: #{v1net_forward.11} parent=23 // pred_check_branch
              %174 = sbr.rel target = $region39
            $region38: #{v1net_forward.11} parent=23 // pred_region
              _
            $region39: #{v1net_forward.11} parent=23 // pred_fallthru
              _
          $region24: #{v1net_forward.11} parent=19 // pred_fallthru
            _
          %175 = vnop
        $region20: #{v1net_forward.11} parent=15 // pred_fallthru
          _
      $region16: #{v1net_forward.11} parent=5 // pred_fallthru
        _
      %p176 = scmp.le.s32.totalorder 1, %s7
      %p177 = scmp.lt.s32.totalorder %s7, 3
      %p178 = pnand %p176, %p177
      %p179 = pneg %p178
      // Predicated region
      $region40: #{v1net_forward.11} parent=5 // pred_check
        _
      $region41: #{v1net_forward.11} parent=5 // pred_check_branch
        %181 = sbr.rel (%p178) target = $region43
      $region42: #{v1net_forward.11} parent=5 // pred_region
        %s182 = ssub.s32 %s7, 1
        %s183 = sand.u32 %s20, 1
        %s184 = sand.u32 %s20, 1
        %s185 = smul.addr %s184, 288
        %s186 = scalar_lea.vmem [#allocation2], %s185
        // Predicated region
        $region44: #{v1net_forward.11} parent=42 // pred_check
          %p187 = pneg %p33
        $region45: #{v1net_forward.11} parent=42 // pred_check_branch
          %189 = sbr.rel (%p187) target = $region47
        $region46: #{v1net_forward.11} parent=42 // pred_region
          _
        $region47: #{v1net_forward.11} parent=42 // pred_fallthru
          _
        %s190 = sand.u32 %s20, 1
        %s191 = sand.u32 %s20, 1
        %s192 = smul.addr %s191, 288
        %s193 = scalar_lea.vmem [#allocation2], %s192
        %p194 = pneg %p33
        %p195 = pneg %p30
        %p196 = pneg %p59
        %p197 = pneg %p56
        %s198 = smul.u32 2, %s12
        %p199 = scmp.lt.s32.totalorder %s198, 3
        %s200 = scalar_select %p199, %s198, 3
        %s201 = smul.addr %s200, 2
        %s202 = smul.addr %s201, 8
        %s203 = scalar_lea.vmem %s1, %s202
        %s204 = smul.u32 2, %s12
        %s205 = smul.u32 2, %s12
        %p206 = scmp.lt.s32.totalorder %s205, 3
        %s207 = scalar_select %p206, %s205, 3
        %s208 = smul.addr %s207, 2
        %s209 = smul.addr %s208, 8
        %s210 = scalar_lea.vmem %s1, %s209
        %s211 = smul.u32 2, %s12
        %v212 = vld [vmem:[%s186] sm:$0xff]
        %v213 = vld [vmem:[%s186 + $0x8] sm:$0xff]
        %v214 = vld [vmem:[%s186 + $0x10] sm:$0xff]
        %v215 = vld [vmem:[%s186 + $0x18] sm:$0xff]
        %v216 = vld [vmem:[%s186 + $0x20] sm:$0xff]
        %v217 = vld [vmem:[%s186 + $0x28] sm:$0xff]
        %v218 = vld [vmem:[%s186 + $0x30] sm:$0xff]
        %v219 = vld [vmem:[%s186 + $0x38] sm:$0xff]
        %v220 = vld [vmem:[%s186 + $0x40] sm:$0xff]
        %v221 = vld [vmem:[%s186 + $0x48] sm:$0xff]
        %v222 = vld [vmem:[%s186 + $0x50] sm:$0xff]
        %v223 = vld [vmem:[%s186 + $0x58] sm:$0xff]
        %v224 = vld [vmem:[%s186 + $0x60] sm:$0xff]
        %v225 = vld [vmem:[%s186 + $0x68] sm:$0xff]
        %v226 = vld [vmem:[%s186 + $0x70] sm:$0xff]
        %v227 = vld [vmem:[%s186 + $0x78] sm:$0xff]
        %v228 = vld [vmem:[%s186 + $0x80] sm:$0xff]
        %v229 = vld [vmem:[%s186 + $0x88] sm:$0xff]
        %v230 = vld [vmem:[%s186 + $0x90] sm:$0xff]
        %v231 = vld [vmem:[%s186 + $0x98] sm:$0xff]
        %v232 = vld [vmem:[%s186 + $0xa0] sm:$0xff]
        %v233 = vld [vmem:[%s186 + $0xa8] sm:$0xff]
        %v234 = vld [vmem:[%s186 + $0xb0] sm:$0xff]
        %v235 = vld [vmem:[%s186 + $0xb8] sm:$0xff]
        %v236 = vld [vmem:[%s186 + $0xc0] sm:$0xff]
        %v237 = vld [vmem:[%s186 + $0xc8] sm:$0xff]
        %v238 = vld [vmem:[%s186 + $0xd0] sm:$0xff]
        %v239 = vld [vmem:[%s186 + $0xd8] sm:$0xff]
        %v240 = vld [vmem:[%s186 + $0xe0] sm:$0xff]
        %v241 = vld [vmem:[%s186 + $0xe8] sm:$0xff]
        %v242 = vld [vmem:[%s186 + $0xf0] sm:$0xff]
        %v243 = vld [vmem:[%s186 + $0xf8] sm:$0xff]
        %v244 = vld [vmem:[%s186 + $0x100] sm:$0xff]
        %v245 = vld [vmem:[%s186 + $0x108] sm:$0xff]
        %v246 = vld [vmem:[%s186 + $0x110] sm:$0xff]
        %v247 = vld [vmem:[%s186 + $0x118] sm:$0xff]
        %v248 = vmax.f32 %v212, %v216
        %v249 = vmax.f32 %v248, %v220
        %v250 = vmax.f32 %v249, %v224
        %v251 = vmax.f32 %v250, %v228
        %v252 = vmax.f32 %v251, %v232
        %v253 = vmax.f32 %v252, %v236
        %v254 = vmax.f32 %v253, %v240
        %v255 = vmax.f32 %v254, %v244
        %v256 = vmax.f32 %v213, %v217
        %v257 = vmax.f32 %v256, %v221
        %v258 = vmax.f32 %v257, %v225
        %v259 = vmax.f32 %v258, %v229
        %v260 = vmax.f32 %v259, %v233
        %v261 = vmax.f32 %v260, %v237
        %v262 = vmax.f32 %v261, %v241
        %v263 = vmax.f32 %v262, %v245
        %v264 = vmax.f32 %v214, %v218
        %v265 = vmax.f32 %v264, %v222
        %v266 = vmax.f32 %v265, %v226
        %v267 = vmax.f32 %v266, %v230
        %v268 = vmax.f32 %v267, %v234
        %v269 = vmax.f32 %v268, %v238
        %v270 = vmax.f32 %v269, %v242
        %v271 = vmax.f32 %v270, %v246
        %v272 = vmax.f32 %v215, %v219
        %v273 = vmax.f32 %v272, %v223
        %v274 = vmax.f32 %v273, %v227
        %v275 = vmax.f32 %v274, %v231
        %v276 = vmax.f32 %v275, %v235
        %v277 = vmax.f32 %v276, %v239
        %v278 = vmax.f32 %v277, %v243
        %v279 = vmax.f32 %v278, %v247
        %280 = vst [vmem:[%s210] sm:$0xff] %v255
        %281 = vst [vmem:[%s210 + $0x8] sm:$0xff] %v263
        %282 = vst [vmem:[%s210 + $0x10] sm:$0xff] %v271
        %283 = vst [vmem:[%s210 + $0x18] sm:$0xff] %v279
        %s284 = smul.u32 2, %s12
        %p285 = scmp.lt.s32.totalorder %s284, 3
        %s286 = scalar_select %p285, %s284, 3
        %s287 = smul.addr %s286, 2
        %s288 = smul.addr %s287, 8
        %s289 = scalar_lea.vmem %s1, %s288
        // Predicated region
        $region48: #{v1net_forward.11} parent=42 // pred_check
          %p290 = pneg %p56
        $region49: #{v1net_forward.11} parent=42 // pred_check_branch
          %292 = sbr.rel (%p290) target = $region51
        $region50: #{v1net_forward.11} parent=42 // pred_region
          %s293 = smul.u32 2, %s12
        $region51: #{v1net_forward.11} parent=42 // pred_fallthru
          _
      $region43: #{v1net_forward.11} parent=5 // pred_fallthru
        _
      %p294 = scmp.le.s32.totalorder 2, %s7
      // Predicated region
      $region52: #{v1net_forward.11} parent=5 // pred_check
        %p295 = pneg %p294
      $region53: #{v1net_forward.11} parent=5 // pred_check_branch
        %297 = sbr.rel (%p295) target = $region55
      $region54: #{v1net_forward.11} parent=5 // pred_region
        %s298 = ssub.s32 %s7, 2
        // Predicated region
        $region56: #{v1net_forward.11} parent=54 // pred_check
          %p299 = pneg %p62
        $region57: #{v1net_forward.11} parent=54 // pred_check_branch
          %301 = sbr.rel (%p299) target = $region59
        $region58: #{v1net_forward.11} parent=54 // pred_region
          %s302 = smul.u32 2, %s13
          %p303 = scmp.lt.s32.totalorder %s302, 3
          %s304 = scalar_select %p303, %s302, 3
          %s305 = smul.addr %s304, 2
          %s306 = smul.addr %s305, 8
          %s307 = scalar_lea.vmem %s1, %s306
        $region59: #{v1net_forward.11} parent=54 // pred_fallthru
          _
      $region55: #{v1net_forward.11} parent=5 // pred_fallthru
        _
    $region6: #{v1net_forward.11} parent=1 // loop_footer
      %s11 = sadd.s32 1, %s7
    $region7: #{v1net_forward.11} parent=1 // loop_footer_branch
      %6 = sbr.rel target = $region3
    $region8: #{v1net_forward.11} parent=1 // loop_exit
      _

// kernel: v1net_forward.14
$region0: #{v1net_forward.14}
  #allocation0 [shape = 'u32[]', space=smem, size = 0x4, offset = 0x4, fixed_abs, tag = 'smem constant byte address 0x4 - core index']
  #allocation1 [shape = 'u32[72,128]{1,0:T(1,128)}', space=vmem, size = 0x9000, scoped, tag = 'internal scratch']
  %s0 = inlined_call_operand.vmem [shape: f32[128,192], index: 0, kind: input, shape index: {}]
  %s1 = inlined_call_operand.vmem [shape: f32[192,8], index: 1, kind: input, shape index: {}]
  %s2 = inlined_call_operand.vmem [shape: f32[1,8], index: 2, kind: input, shape index: {}]
  %s3 = inlined_call_operand.vmem [shape: f32[1,8], index: 3, kind: input, shape index: {}]
  %s4 = inlined_call_operand.vmem [shape: f32[128,8], index: 4, kind: output, shape index: {}]
  %s5 = sld [smem:[#allocation0]]
  $region49: #{v1net_forward.14} parent=0
    _
  %s7 = ssub.s32 1, %s5
  %s8 = scalar_select 0, %s7, %s5
  loop: start=0, step=1, limit=4
  $region2: #{v1net_forward.14} parent=0 // loop_pre_header
    _
  $region3: #{v1net_forward.14} parent=0 // loop_header
    %s10 = sphi 0, %s14
    %p11 = scmp.ge.s32.totalorder %s10, 4
    %s20 = sphi 0, %s22
    %s23 = sphi 0, %s20
    %s24 = sphi 0, %s23
    %s40 = sphi 0, %s24
    %s44 = sphi 0, %s44
    %s46 = sphi 0, %s44
    %s47 = sphi 0, %s46
    %s61 = sphi 0, %s47
    %s65 = sphi 0, %s65
    %s67 = sphi 0, %s65
    %s68 = sphi 0, %s67
    %s82 = sphi 0, %s68
    %s86 = sphi 0, %s86
    %s88 = sphi 0, %s86
    %s89 = sphi 0, %s88
    %s103 = sphi 0, %s89
    %s109 = sphi 0, %s111
    %s112 = sphi 0, %s109
    %s113 = sphi 0, %s112
    %s129 = sphi 0, %s113
  $region4: #{v1net_forward.14} parent=0 // loop_header_branch
    %13 = sbr.rel (%p11) target = $region8
  $region5: #{v1net_forward.14} parent=0 // loop_body
    %s15 = ssub.s32 %s10, 1
    %s16 = ssub.s32 %s10, 2
    %s17 = sadd.s32 %s10, 1
    %s18 = ssub.s32 %s10, %s17
    %p19 = scmp.eq.s32.totalorder %s18, 0
    %s21 = sadd.s32 %s20, 1
    %s22 = scalar_select %p19, %s20, %s21
    %p25 = pneg %p19
    %p26 = scmp.eq.s32.totalorder %s10, 1
    %p27 = por %p25, %p26
    %p28 = scmp.ne.s32.totalorder %s20, %s23
    %p29 = scmp.eq.s32.totalorder %s10, 0
    %p30 = por %p28, %p29
    %p31 = scmp.ne.s32.totalorder %s20, %s23
    %p32 = scmp.eq.s32.totalorder %s15, 1
    %p33 = por %p31, %p32
    %p34 = scmp.ne.s32.totalorder %s23, %s24
    %p35 = scmp.eq.s32.totalorder %s15, 0
    %p36 = por %p34, %p35
    %p37 = scmp.ne.s32.totalorder %s23, %s24
    %p38 = scmp.eq.s32.totalorder %s16, 1
    %p39 = por %p37, %p38
    %p41 = scmp.ne.s32.totalorder %s24, %s40
    %p42 = scmp.eq.s32.totalorder %s16, 0
    %p43 = por %p41, %p42
    %s45 = sadd.s32 %s44, 1
    %p48 = scmp.eq.s32.totalorder %s10, 1
    %p49 = scmp.ne.s32.totalorder %s44, %s46
    %p50 = scmp.eq.s32.totalorder %s10, 0
    %p51 = por %p49, %p50
    %p52 = scmp.ne.s32.totalorder %s44, %s46
    %p53 = scmp.eq.s32.totalorder %s15, 1
    %p54 = por %p52, %p53
    %p55 = scmp.ne.s32.totalorder %s46, %s47
    %p56 = scmp.eq.s32.totalorder %s15, 0
    %p57 = por %p55, %p56
    %p58 = scmp.ne.s32.totalorder %s46, %s47
    %p59 = scmp.eq.s32.totalorder %s16, 1
    %p60 = por %p58, %p59
    %p62 = scmp.ne.s32.totalorder %s47, %s61
    %p63 = scmp.eq.s32.totalorder %s16, 0
    %p64 = por %p62, %p63
    %s66 = sadd.s32 %s65, 1
    %p69 = scmp.eq.s32.totalorder %s10, 1
    %p70 = scmp.ne.s32.totalorder %s65, %s67
    %p71 = scmp.eq.s32.totalorder %s10, 0
    %p72 = por %p70, %p71
    %p73 = scmp.ne.s32.totalorder %s65, %s67
    %p74 = scmp.eq.s32.totalorder %s15, 1
    %p75 = por %p73, %p74
    %p76 = scmp.ne.s32.totalorder %s67, %s68
    %p77 = scmp.eq.s32.totalorder %s15, 0
    %p78 = por %p76, %p77
    %p79 = scmp.ne.s32.totalorder %s67, %s68
    %p80 = scmp.eq.s32.totalorder %s16, 1
    %p81 = por %p79, %p80
    %p83 = scmp.ne.s32.totalorder %s68, %s82
    %p84 = scmp.eq.s32.totalorder %s16, 0
    %p85 = por %p83, %p84
    %s87 = sadd.s32 %s86, 1
    %p90 = scmp.eq.s32.totalorder %s10, 1
    %p91 = scmp.ne.s32.totalorder %s86, %s88
    %p92 = scmp.eq.s32.totalorder %s10, 0
    %p93 = por %p91, %p92
    %p94 = scmp.ne.s32.totalorder %s86, %s88
    %p95 = scmp.eq.s32.totalorder %s15, 1
    %p96 = por %p94, %p95
    %p97 = scmp.ne.s32.totalorder %s88, %s89
    %p98 = scmp.eq.s32.totalorder %s15, 0
    %p99 = por %p97, %p98
    %p100 = scmp.ne.s32.totalorder %s88, %s89
    %p101 = scmp.eq.s32.totalorder %s16, 1
    %p102 = por %p100, %p101
    %p104 = scmp.ne.s32.totalorder %s89, %s103
    %p105 = scmp.eq.s32.totalorder %s16, 0
    %p106 = por %p104, %p105
    %s107 = ssub.s32 %s10, %s17
    %p108 = scmp.eq.s32.totalorder %s107, 0
    %s110 = sadd.s32 %s109, 1
    %s111 = scalar_select %p108, %s109, %s110
    %p114 = pneg %p108
    %p115 = scmp.eq.s32.totalorder %s10, 1
    %p116 = por %p114, %p115
    %p117 = scmp.ne.s32.totalorder %s109, %s112
    %p118 = scmp.eq.s32.totalorder %s10, 0
    %p119 = por %p117, %p118
    %p120 = scmp.ne.s32.totalorder %s109, %s112
    %p121 = scmp.eq.s32.totalorder %s15, 1
    %p122 = por %p120, %p121
    %p123 = scmp.ne.s32.totalorder %s112, %s113
    %p124 = scmp.eq.s32.totalorder %s15, 0
    %p125 = por %p123, %p124
    %p126 = scmp.ne.s32.totalorder %s112, %s113
    %p127 = scmp.eq.s32.totalorder %s16, 1
    %p128 = por %p126, %p127
    %p130 = scmp.ne.s32.totalorder %s113, %s129
    %p131 = scmp.eq.s32.totalorder %s16, 0
    %p132 = por %p130, %p131
    %p133 = scmp.le.s32.totalorder 1, %s10
    %p134 = scmp.lt.s32.totalorder %s10, 3
    %p135 = pnand %p133, %p134
    %p136 = pneg %p135
    // Predicated region
    $region9: #{v1net_forward.14} parent=5 // pred_check
      _
    $region10: #{v1net_forward.14} parent=5 // pred_check_branch
      %138 = sbr.rel (%p135) target = $region12
    $region11: #{v1net_forward.14} parent=5 // pred_region
      %s139 = ssub.s32 %s10, 1
      // Predicated region
      $region13: #{v1net_forward.14} parent=11 // pred_check
        %p140 = pneg %p57
      $region14: #{v1net_forward.14} parent=11 // pred_check_branch
        %142 = sbr.rel (%p140) target = $region16
      $region15: #{v1net_forward.14} parent=11 // pred_region
        _
      $region16: #{v1net_forward.14} parent=11 // pred_fallthru
        _
      // Predicated region
      $region17: #{v1net_forward.14} parent=11 // pred_check
        %p143 = pneg %p78
      $region18: #{v1net_forward.14} parent=11 // pred_check_branch
        %145 = sbr.rel (%p143) target = $region20
      $region19: #{v1net_forward.14} parent=11 // pred_region
        _
      $region20: #{v1net_forward.14} parent=11 // pred_fallthru
        _
      // Predicated region
      $region21: #{v1net_forward.14} parent=11 // pred_check
        %p146 = pneg %p99
      $region22: #{v1net_forward.14} parent=11 // pred_check_branch
        %148 = sbr.rel (%p146) target = $region24
      $region23: #{v1net_forward.14} parent=11 // pred_region
        _
      $region24: #{v1net_forward.14} parent=11 // pred_fallthru
        _
    $region12: #{v1net_forward.14} parent=5 // pred_fallthru
      _
    %p149 = scmp.lt.s32.totalorder %s10, 2
    // Predicated region
    $region25: #{v1net_forward.14} parent=5 // pred_check
      %p150 = pneg %p149
    $region26: #{v1net_forward.14} parent=5 // pred_check_branch
      %152 = sbr.rel (%p150) target = $region28
    $region27: #{v1net_forward.14} parent=5 // pred_region
      // Predicated region
      $region29: #{v1net_forward.14} parent=27 // pred_check
        %p153 = pneg %p30
      $region30: #{v1net_forward.14} parent=27 // pred_check_branch
        %155 = sbr.rel (%p153) target = $region32
      $region31: #{v1net_forward.14} parent=27 // pred_region
        %s156 = smul.u32 8, %s10
        %p157 = scmp.lt.s32.totalorder %s156, 15
        %s158 = scalar_select %p157, %s156, 15
        %s159 = smul.addr %s158, 2
        %s160 = smul.addr %s159, 8
        %s161 = scalar_lea.vmem %s0, %s160
        %s162 = smul.u32 8, %s10
      $region32: #{v1net_forward.14} parent=27 // pred_fallthru
        _
    $region28: #{v1net_forward.14} parent=5 // pred_fallthru
      _
    %p163 = scmp.le.s32.totalorder 1, %s10
    %p164 = scmp.lt.s32.totalorder %s10, 3
    %p165 = pnand %p163, %p164
    %p166 = pneg %p165
    // Predicated region
    $region33: #{v1net_forward.14} parent=5 // pred_check
      _
    $region34: #{v1net_forward.14} parent=5 // pred_check_branch
      %168 = sbr.rel (%p165) target = $region36
    $region35: #{v1net_forward.14} parent=5 // pred_region
      %s169 = ssub.s32 %s10, 1
      %s170 = smul.u32 8, %s15
      %p171 = scmp.lt.s32.totalorder %s170, 15
      %s172 = scalar_select %p171, %s170, 15
      %s173 = smul.addr %s172, 2
      %s174 = smul.addr %s173, 8
      %s175 = scalar_lea.vmem %s0, %s174
      %p176 = pneg %p36
      %p177 = pneg %p33
      %p178 = pneg %p57
      %p179 = pneg %p54
      %p180 = pneg %p78
      %p181 = pneg %p75
      %p182 = pneg %p99
      %p183 = pneg %p96
      %p184 = pneg %p125
      %p185 = pneg %p122
      %s186 = smul.u32 8, %s15
      %p187 = scmp.lt.s32.totalorder %s186, 15
      %s188 = scalar_select %p187, %s186, 15
      %s189 = smul.addr %s188, 8
      %s190 = scalar_lea.vmem %s4, %s189
      %s191 = smul.u32 8, %s15
      %p192 = scmp.lt.s32.totalorder %s191, 15
      %s193 = scalar_select %p192, %s191, 15
      %s194 = smul.addr %s193, 2
      %s195 = smul.addr %s194, 8
      %s196 = scalar_lea.vmem %s0, %s195
      %s197 = smul.u32 8, %s15
      %s198 = smul.u32 8, %s15
      %p199 = scmp.lt.s32.totalorder %s198, 15
      %s200 = scalar_select %p199, %s198, 15
      %s201 = smul.addr %s200, 8
      %s202 = scalar_lea.vmem %s4, %s201
      %s203 = smul.u32 8, %s15
      %v204 = vld [vmem:[%s196] sm:$0xff]
      %v205 = vld [vmem:[%s196 + $0x8] sm:$0xff]
      %v206 = vld [vmem:[%s196 + $0x10] sm:$0xff]
      %v207 = vld [vmem:[%s196 + $0x18] sm:$0xff]
      %v208 = vld [vmem:[%s196 + $0x20] sm:$0xff]
      %v209 = vld [vmem:[%s196 + $0x28] sm:$0xff]
      %v210 = vld [vmem:[%s196 + $0x30] sm:$0xff]
      %v211 = vld [vmem:[%s196 + $0x38] sm:$0xff]
      %v212 = vld [vmem:[%s196 + $0x40] sm:$0xff]
      %v213 = vld [vmem:[%s196 + $0x48] sm:$0xff]
      %v214 = vld [vmem:[%s196 + $0x50] sm:$0xff]
      %v215 = vld [vmem:[%s196 + $0x58] sm:$0xff]
      %v216 = vld [vmem:[%s196 + $0x60] sm:$0xff]
      %v217 = vld [vmem:[%s196 + $0x68] sm:$0xff]
      %v218 = vld [vmem:[%s196 + $0x70] sm:$0xff]
      %v219 = vld [vmem:[%s196 + $0x78] sm:$0xff]
      %v220 = vld [vmem:[%s1] sm:$0xff]
      %v221 = vld [vmem:[%s1 + $0x8] sm:$0xff]
      %v222 = vld [vmem:[%s1 + $0x10] sm:$0xff]
      %v223 = vld [vmem:[%s1 + $0x18] sm:$0xff]
      %v224 = vld [vmem:[%s1 + $0x20] sm:$0xff]
      %v225 = vld [vmem:[%s1 + $0x28] sm:$0xff]
      %v226 = vld [vmem:[%s1 + $0x30] sm:$0xff]
      %v227 = vld [vmem:[%s1 + $0x38] sm:$0xff]
      %v228 = vld [vmem:[%s1 + $0x40] sm:$0xff]
      %v229 = vld [vmem:[%s1 + $0x48] sm:$0xff]
      %v230 = vld [vmem:[%s1 + $0x50] sm:$0xff]
      %v231 = vld [vmem:[%s1 + $0x58] sm:$0xff]
      %v232 = vld [vmem:[%s1 + $0x60] sm:$0xff]
      %v233 = vld [vmem:[%s1 + $0x68] sm:$0xff]
      %v234 = vld [vmem:[%s1 + $0x70] sm:$0xff]
      %v235 = vld [vmem:[%s1 + $0x78] sm:$0xff]
      %v236 = vld [vmem:[%s1 + $0x80] sm:$0xff]
      %v237 = vld [vmem:[%s1 + $0x88] sm:$0xff]
      %v238 = vld [vmem:[%s1 + $0x90] sm:$0xff]
      %v239 = vld [vmem:[%s1 + $0x98] sm:$0xff]
      %v240 = vld [vmem:[%s1 + $0xa0] sm:$0xff]
      %v241 = vld [vmem:[%s1 + $0xa8] sm:$0xff]
      %v242 = vld [vmem:[%s1 + $0xb0] sm:$0xff]
      %v243 = vld [vmem:[%s1 + $0xb8] sm:$0xff]
      %vm244 = vcmask 523264
      %v246 = vsel %vm244, %v205, 0
      %v249 = vsel %vm244, %v207, 0
      %v252 = vsel %vm244, %v209, 0
      %v255 = vsel %vm244, %v211, 0
      %v258 = vsel %vm244, %v213, 0
      %v261 = vsel %vm244, %v215, 0
      %v264 = vsel %vm244, %v217, 0
      %v267 = vsel %vm244, %v219, 0
      %269 = vmatpush.msra.mxu0 %v235
      %270 = vmatpush.msra.mxu0 %v234
      %271 = vmatpush.msra.mxu0 %v233
      %272 = vmatpush.msra.mxu0 %v232
      %273 = vmatpush.msra.mxu0 %v231
      %274 = vmatpush.msra.mxu0 %v230
      %275 = vmatpush.msra.mxu0 %v229
      %276 = vmatpush.msra.mxu0 %v228
      %277 = vmatpush.msra.mxu0 %v227
      %278 = vmatpush.msra.mxu0 %v226
      %279 = vmatpush.msra.mxu0 %v225
      %280 = vmatpush.msra.mxu0 %v224
      %281 = vmatpush.msra.mxu0 %v223
      %282 = vmatpush.msra.mxu0 %v222
      %283 = vmatpush.msra.mxu0 %v221
      %284 = vmatpush.msra.mxu0 %v220
      %285 = vmatmul.f32.gmra.mxu0 %v204
      %v286 = vpop.f32.mrf.mxu0
      %v287 = vadd.f32 0.0, %v286
      %288 = vmatmul.f32.gmra.mxu0 %v206
      %v289 = vpop.f32.mrf.mxu0
      %v290 = vadd.f32 0.0, %v289
      %291 = vmatmul.f32.gmra.mxu0 %v208
      %v292 = vpop.f32.mrf.mxu0
      %v293 = vadd.f32 0.0, %v292
      %294 = vmatmul.f32.gmra.mxu0 %v210
      %v295 = vpop.f32.mrf.mxu0
      %v296 = vadd.f32 0.0, %v295
      %297 = vmatmul.f32.gmra.mxu0 %v212
      %v298 = vpop.f32.mrf.mxu0
      %v299 = vadd.f32 0.0, %v298
      %300 = vmatmul.f32.gmra.mxu0 %v214
      %v301 = vpop.f32.mrf.mxu0
      %v302 = vadd.f32 0.0, %v301
      %303 = vmatmul.f32.gmra.mxu0 %v216
      %v304 = vpop.f32.mrf.mxu0
      %v305 = vadd.f32 0.0, %v304
      %306 = vmatmul.f32.gmra.mxu0 %v218
      %v307 = vpop.f32.mrf.mxu0
      %v308 = vadd.f32 0.0, %v307
      %309 = vdwg.mxu0
      %310 = vmatpush.msra.mxu0 0.0
      %311 = vmatpush.msra.mxu0 0.0
      %312 = vmatpush.msra.mxu0 0.0
      %313 = vmatpush.msra.mxu0 0.0
      %314 = vmatpush.msra.mxu0 0.0
      %315 = vmatpush.msra.mxu0 0.0
      %316 = vmatpush.msra.mxu0 0.0
      %317 = vmatpush.msra.mxu0 0.0
      %318 = vmatpush.msra.mxu0 %v243
      %319 = vmatpush.msra.mxu0 %v242
      %320 = vmatpush.msra.mxu0 %v241
      %321 = vmatpush.msra.mxu0 %v240
      %322 = vmatpush.msra.mxu0 %v239
      %323 = vmatpush.msra.mxu0 %v238
      %324 = vmatpush.msra.mxu0 %v237
      %325 = vmatpush.msra.mxu0 %v236
      %326 = vmatmul.f32.gmra.mxu0 %v246
      %v327 = vpop.f32.mrf.mxu0
      %v328 = vadd.f32 %v287, %v327
      %329 = vmatmul.f32.gmra.mxu0 %v249
      %v330 = vpop.f32.mrf.mxu0
      %v331 = vadd.f32 %v290, %v330
      %332 = vmatmul.f32.gmra.mxu0 %v252
      %v333 = vpop.f32.mrf.mxu0
      %v334 = vadd.f32 %v293, %v333
      %335 = vmatmul.f32.gmra.mxu0 %v255
      %v336 = vpop.f32.mrf.mxu0
      %v337 = vadd.f32 %v296, %v336
      %338 = vmatmul.f32.gmra.mxu0 %v258
      %v339 = vpop.f32.mrf.mxu0
      %v340 = vadd.f32 %v299, %v339
      %341 = vmatmul.f32.gmra.mxu0 %v261
      %v342 = vpop.f32.mrf.mxu0
      %v343 = vadd.f32 %v302, %v342
      %344 = vmatmul.f32.gmra.mxu0 %v264
      %v345 = vpop.f32.mrf.mxu0
      %v346 = vadd.f32 %v305, %v345
      %347 = vmatmul.f32.gmra.mxu0 %v267
      %v348 = vpop.f32.mrf.mxu0
      %v349 = vadd.f32 %v308, %v348
      %350 = vdwg.mxu0
      %v351 = vld [vmem:[%s2] sm:$0x1]
      %v353 = vperm.slane %v351, 0
      %v355 = vmul.f32 %v328, %v353
      %v356 = vmul.f32 %v331, %v353
      %v357 = vmul.f32 %v334, %v353
      %v358 = vmul.f32 %v337, %v353
      %v359 = vmul.f32 %v340, %v353
      %v360 = vmul.f32 %v343, %v353
      %v361 = vmul.f32 %v346, %v353
      %v362 = vmul.f32 %v349, %v353
      %v363 = vld [vmem:[%s3] sm:$0x1]
      %v365 = vperm.slane %v363, 0
      %v367 = vadd.f32 %v355, %v365
      %v368 = vadd.f32 %v356, %v365
      %v369 = vadd.f32 %v357, %v365
      %v370 = vadd.f32 %v358, %v365
      %v371 = vadd.f32 %v359, %v365
      %v372 = vadd.f32 %v360, %v365
      %v373 = vadd.f32 %v361, %v365
      %v374 = vadd.f32 %v362, %v365
      %v375 = vmax.f32 %v367, 0.0
      %v376 = vmax.f32 %v368, 0.0
      %v377 = vmax.f32 %v369, 0.0
      %v378 = vmax.f32 %v370, 0.0
      %v379 = vmax.f32 %v371, 0.0
      %v380 = vmax.f32 %v372, 0.0
      %v381 = vmax.f32 %v373, 0.0
      %v382 = vmax.f32 %v374, 0.0
      %vm383 = vcmask 64512
      %384 = vst.msk [vmem:[%s202] sm:$0xff] %vm383, %v375
      %385 = vst.msk [vmem:[%s202 + $0x8] sm:$0xff] %vm383, %v376
      %386 = vst.msk [vmem:[%s202 + $0x10] sm:$0xff] %vm383, %v377
      %387 = vst.msk [vmem:[%s202 + $0x18] sm:$0xff] %vm383, %v378
      %388 = vst.msk [vmem:[%s202 + $0x20] sm:$0xff] %vm383, %v379
      %389 = vst.msk [vmem:[%s202 + $0x28] sm:$0xff] %vm383, %v380
      %390 = vst.msk [vmem:[%s202 + $0x30] sm:$0xff] %vm383, %v381
      %391 = vst.msk [vmem:[%s202 + $0x38] sm:$0xff] %vm383, %v382
      %s392 = smul.u32 8, %s15
      %p393 = scmp.lt.s32.totalorder %s392, 15
      %s394 = scalar_select %p393, %s392, 15
      %s395 = smul.addr %s394, 8
      %s396 = scalar_lea.vmem %s4, %s395
      // Predicated region
      $region37: #{v1net_forward.14} parent=35 // pred_check
        %p397 = pneg %p122
      $region38: #{v1net_forward.14} parent=35 // pred_check_branch
        %399 = sbr.rel (%p397) target = $region40
      $region39: #{v1net_forward.14} parent=35 // pred_region
        %s400 = smul.u32 8, %s15
      $region40: #{v1net_forward.14} parent=35 // pred_fallthru
        _
    $region36: #{v1net_forward.14} parent=5 // pred_fallthru
      _
    %p401 = scmp.le.s32.totalorder 2, %s10
    // Predicated region
    $region41: #{v1net_forward.14} parent=5 // pred_check
      %p402 = pneg %p401
    $region42: #{v1net_forward.14} parent=5 // pred_check_branch
      %404 = sbr.rel (%p402) target = $region44
    $region43: #{v1net_forward.14} parent=5 // pred_region
      %s405 = ssub.s32 %s10, 2
      // Predicated region
      $region45: #{v1net_forward.14} parent=43 // pred_check
        %p406 = pneg %p128
      $region46: #{v1net_forward.14} parent=43 // pred_check_branch
        %408 = sbr.rel (%p406) target = $region48
      $region47: #{v1net_forward.14} parent=43 // pred_region
        %s409 = smul.u32 8, %s16
        %p410 = scmp.lt.s32.totalorder %s409, 15
        %s411 = scalar_select %p410, %s409, 15
        %s412 = smul.addr %s411, 8
        %s413 = scalar_lea.vmem %s4, %s412
      $region48: #{v1net_forward.14} parent=43 // pred_fallthru
        _
    $region44: #{v1net_forward.14} parent=5 // pred_fallthru
      _
  $region6: #{v1net_forward.14} parent=0 // loop_footer
    %s14 = sadd.s32 1, %s10
  $region7: #{v1net_forward.14} parent=0 // loop_footer_branch
    %9 = sbr.rel target = $region3
  $region8: #{v1net_forward.14} parent=0 // loop_exit
    _

// kernel: v1net_forward.15
$region0: #{v1net_forward.15}
  #allocation0 [shape = 'u32[]', space=smem, size = 0x4, offset = 0x4, fixed_abs, tag = 'smem constant byte address 0x4 - core index']
  #allocation1 [shape = 'u32[72,128]{1,0:T(1,128)}', space=vmem, size = 0x9000, scoped, tag = 'internal scratch']
  %s0 = inlined_call_operand.vmem [shape: f32[128,72], index: 0, kind: input, shape index: {}]
  %s1 = inlined_call_operand.vmem [shape: f32[72,8], index: 1, kind: input, shape index: {}]
  %s2 = inlined_call_operand.vmem [shape: f32[1,8], index: 2, kind: input, shape index: {}]
  %s3 = inlined_call_operand.vmem [shape: f32[1,8], index: 3, kind: input, shape index: {}]
  %s4 = inlined_call_operand.vmem [shape: f32[128,8], index: 4, kind: output, shape index: {}]
  %s5 = sld [smem:[#allocation0]]
  $region49: #{v1net_forward.15} parent=0
    _
  %s7 = ssub.s32 1, %s5
  %s8 = scalar_select 0, %s7, %s5
  loop: start=0, step=1, limit=4
  $region2: #{v1net_forward.15} parent=0 // loop_pre_header
    _
  $region3: #{v1net_forward.15} parent=0 // loop_header
    %s10 = sphi 0, %s14
    %p11 = scmp.ge.s32.totalorder %s10, 4
    %s20 = sphi 0, %s22
    %s23 = sphi 0, %s20
    %s24 = sphi 0, %s23
    %s40 = sphi 0, %s24
    %s44 = sphi 0, %s44
    %s46 = sphi 0, %s44
    %s47 = sphi 0, %s46
    %s61 = sphi 0, %s47
    %s65 = sphi 0, %s65
    %s67 = sphi 0, %s65
    %s68 = sphi 0, %s67
    %s82 = sphi 0, %s68
    %s86 = sphi 0, %s86
    %s88 = sphi 0, %s86
    %s89 = sphi 0, %s88
    %s103 = sphi 0, %s89
    %s109 = sphi 0, %s111
    %s112 = sphi 0, %s109
    %s113 = sphi 0, %s112
    %s129 = sphi 0, %s113
  $region4: #{v1net_forward.15} parent=0 // loop_header_branch
    %13 = sbr.rel (%p11) target = $region8
  $region5: #{v1net_forward.15} parent=0 // loop_body
    %s15 = ssub.s32 %s10, 1
    %s16 = ssub.s32 %s10, 2
    %s17 = sadd.s32 %s10, 1
    %s18 = ssub.s32 %s10, %s17
    %p19 = scmp.eq.s32.totalorder %s18, 0
    %s21 = sadd.s32 %s20, 1
    %s22 = scalar_select %p19, %s20, %s21
    %p25 = pneg %p19
    %p26 = scmp.eq.s32.totalorder %s10, 1
    %p27 = por %p25, %p26
    %p28 = scmp.ne.s32.totalorder %s20, %s23
    %p29 = scmp.eq.s32.totalorder %s10, 0
    %p30 = por %p28, %p29
    %p31 = scmp.ne.s32.totalorder %s20, %s23
    %p32 = scmp.eq.s32.totalorder %s15, 1
    %p33 = por %p31, %p32
    %p34 = scmp.ne.s32.totalorder %s23, %s24
    %p35 = scmp.eq.s32.totalorder %s15, 0
    %p36 = por %p34, %p35
    %p37 = scmp.ne.s32.totalorder %s23, %s24
    %p38 = scmp.eq.s32.totalorder %s16, 1
    %p39 = por %p37, %p38
    %p41 = scmp.ne.s32.totalorder %s24, %s40
    %p42 = scmp.eq.s32.totalorder %s16, 0
    %p43 = por %p41, %p42
    %s45 = sadd.s32 %s44, 1
    %p48 = scmp.eq.s32.totalorder %s10, 1
    %p49 = scmp.ne.s32.totalorder %s44, %s46
    %p50 = scmp.eq.s32.totalorder %s10, 0
    %p51 = por %p49, %p50
    %p52 = scmp.ne.s32.totalorder %s44, %s46
    %p53 = scmp.eq.s32.totalorder %s15, 1
    %p54 = por %p52, %p53
    %p55 = scmp.ne.s32.totalorder %s46, %s47
    %p56 = scmp.eq.s32.totalorder %s15, 0
    %p57 = por %p55, %p56
    %p58 = scmp.ne.s32.totalorder %s46, %s47
    %p59 = scmp.eq.s32.totalorder %s16, 1
    %p60 = por %p58, %p59
    %p62 = scmp.ne.s32.totalorder %s47, %s61
    %p63 = scmp.eq.s32.totalorder %s16, 0
    %p64 = por %p62, %p63
    %s66 = sadd.s32 %s65, 1
    %p69 = scmp.eq.s32.totalorder %s10, 1
    %p70 = scmp.ne.s32.totalorder %s65, %s67
    %p71 = scmp.eq.s32.totalorder %s10, 0
    %p72 = por %p70, %p71
    %p73 = scmp.ne.s32.totalorder %s65, %s67
    %p74 = scmp.eq.s32.totalorder %s15, 1
    %p75 = por %p73, %p74
    %p76 = scmp.ne.s32.totalorder %s67, %s68
    %p77 = scmp.eq.s32.totalorder %s15, 0
    %p78 = por %p76, %p77
    %p79 = scmp.ne.s32.totalorder %s67, %s68
    %p80 = scmp.eq.s32.totalorder %s16, 1
    %p81 = por %p79, %p80
    %p83 = scmp.ne.s32.totalorder %s68, %s82
    %p84 = scmp.eq.s32.totalorder %s16, 0
    %p85 = por %p83, %p84
    %s87 = sadd.s32 %s86, 1
    %p90 = scmp.eq.s32.totalorder %s10, 1
    %p91 = scmp.ne.s32.totalorder %s86, %s88
    %p92 = scmp.eq.s32.totalorder %s10, 0
    %p93 = por %p91, %p92
    %p94 = scmp.ne.s32.totalorder %s86, %s88
    %p95 = scmp.eq.s32.totalorder %s15, 1
    %p96 = por %p94, %p95
    %p97 = scmp.ne.s32.totalorder %s88, %s89
    %p98 = scmp.eq.s32.totalorder %s15, 0
    %p99 = por %p97, %p98
    %p100 = scmp.ne.s32.totalorder %s88, %s89
    %p101 = scmp.eq.s32.totalorder %s16, 1
    %p102 = por %p100, %p101
    %p104 = scmp.ne.s32.totalorder %s89, %s103
    %p105 = scmp.eq.s32.totalorder %s16, 0
    %p106 = por %p104, %p105
    %s107 = ssub.s32 %s10, %s17
    %p108 = scmp.eq.s32.totalorder %s107, 0
    %s110 = sadd.s32 %s109, 1
    %s111 = scalar_select %p108, %s109, %s110
    %p114 = pneg %p108
    %p115 = scmp.eq.s32.totalorder %s10, 1
    %p116 = por %p114, %p115
    %p117 = scmp.ne.s32.totalorder %s109, %s112
    %p118 = scmp.eq.s32.totalorder %s10, 0
    %p119 = por %p117, %p118
    %p120 = scmp.ne.s32.totalorder %s109, %s112
    %p121 = scmp.eq.s32.totalorder %s15, 1
    %p122 = por %p120, %p121
    %p123 = scmp.ne.s32.totalorder %s112, %s113
    %p124 = scmp.eq.s32.totalorder %s15, 0
    %p125 = por %p123, %p124
    %p126 = scmp.ne.s32.totalorder %s112, %s113
    %p127 = scmp.eq.s32.totalorder %s16, 1
    %p128 = por %p126, %p127
    %p130 = scmp.ne.s32.totalorder %s113, %s129
    %p131 = scmp.eq.s32.totalorder %s16, 0
    %p132 = por %p130, %p131
    %p133 = scmp.le.s32.totalorder 1, %s10
    %p134 = scmp.lt.s32.totalorder %s10, 3
    %p135 = pnand %p133, %p134
    %p136 = pneg %p135
    // Predicated region
    $region9: #{v1net_forward.15} parent=5 // pred_check
      _
    $region10: #{v1net_forward.15} parent=5 // pred_check_branch
      %138 = sbr.rel (%p135) target = $region12
    $region11: #{v1net_forward.15} parent=5 // pred_region
      %s139 = ssub.s32 %s10, 1
      // Predicated region
      $region13: #{v1net_forward.15} parent=11 // pred_check
        %p140 = pneg %p57
      $region14: #{v1net_forward.15} parent=11 // pred_check_branch
        %142 = sbr.rel (%p140) target = $region16
      $region15: #{v1net_forward.15} parent=11 // pred_region
        _
      $region16: #{v1net_forward.15} parent=11 // pred_fallthru
        _
      // Predicated region
      $region17: #{v1net_forward.15} parent=11 // pred_check
        %p143 = pneg %p78
      $region18: #{v1net_forward.15} parent=11 // pred_check_branch
        %145 = sbr.rel (%p143) target = $region20
      $region19: #{v1net_forward.15} parent=11 // pred_region
        _
      $region20: #{v1net_forward.15} parent=11 // pred_fallthru
        _
      // Predicated region
      $region21: #{v1net_forward.15} parent=11 // pred_check
        %p146 = pneg %p99
      $region22: #{v1net_forward.15} parent=11 // pred_check_branch
        %148 = sbr.rel (%p146) target = $region24
      $region23: #{v1net_forward.15} parent=11 // pred_region
        _
      $region24: #{v1net_forward.15} parent=11 // pred_fallthru
        _
    $region12: #{v1net_forward.15} parent=5 // pred_fallthru
      _
    %p149 = scmp.lt.s32.totalorder %s10, 2
    // Predicated region
    $region25: #{v1net_forward.15} parent=5 // pred_check
      %p150 = pneg %p149
    $region26: #{v1net_forward.15} parent=5 // pred_check_branch
      %152 = sbr.rel (%p150) target = $region28
    $region27: #{v1net_forward.15} parent=5 // pred_region
      // Predicated region
      $region29: #{v1net_forward.15} parent=27 // pred_check
        %p153 = pneg %p30
      $region30: #{v1net_forward.15} parent=27 // pred_check_branch
        %155 = sbr.rel (%p153) target = $region32
      $region31: #{v1net_forward.15} parent=27 // pred_region
        %s156 = smul.u32 8, %s10
        %p157 = scmp.lt.s32.totalorder %s156, 15
        %s158 = scalar_select %p157, %s156, 15
        %s159 = smul.addr %s158, 8
        %s160 = scalar_lea.vmem %s0, %s159
        %s161 = smul.u32 8, %s10
      $region32: #{v1net_forward.15} parent=27 // pred_fallthru
        _
    $region28: #{v1net_forward.15} parent=5 // pred_fallthru
      _
    %p162 = scmp.le.s32.totalorder 1, %s10
    %p163 = scmp.lt.s32.totalorder %s10, 3
    %p164 = pnand %p162, %p163
    %p165 = pneg %p164
    // Predicated region
    $region33: #{v1net_forward.15} parent=5 // pred_check
      _
    $region34: #{v1net_forward.15} parent=5 // pred_check_branch
      %167 = sbr.rel (%p164) target = $region36
    $region35: #{v1net_forward.15} parent=5 // pred_region
      %s168 = ssub.s32 %s10, 1
      %s169 = smul.u32 8, %s15
      %p170 = scmp.lt.s32.totalorder %s169, 15
      %s171 = scalar_select %p170, %s169, 15
      %s172 = smul.addr %s171, 8
      %s173 = scalar_lea.vmem %s0, %s172
      %p174 = pneg %p36
      %p175 = pneg %p33
      %p176 = pneg %p57
      %p177 = pneg %p54
      %p178 = pneg %p78
      %p179 = pneg %p75
      %p180 = pneg %p99
      %p181 = pneg %p96
      %p182 = pneg %p125
      %p183 = pneg %p122
      %s184 = smul.u32 8, %s15
      %p185 = scmp.lt.s32.totalorder %s184, 15
      %s186 = scalar_select %p185, %s184, 15
      %s187 = smul.addr %s186, 8
      %s188 = scalar_lea.vmem %s4, %s187
      %s189 = smul.u32 8, %s15
      %p190 = scmp.lt.s32.totalorder %s189, 15
      %s191 = scalar_select %p190, %s189, 15
      %s192 = smul.addr %s191, 8
      %s193 = scalar_lea.vmem %s0, %s192
      %s194 = smul.u32 8, %s15
      %s195 = smul.u32 8, %s15
      %p196 = scmp.lt.s32.totalorder %s195, 15
      %s197 = scalar_select %p196, %s195, 15
      %s198 = smul.addr %s197, 8
      %s199 = scalar_lea.vmem %s4, %s198
      %s200 = smul.u32 8, %s15
      %v201 = vld [vmem:[%s193] sm:$0xff]
      %v202 = vld [vmem:[%s193 + $0x8] sm:$0xff]
      %v203 = vld [vmem:[%s193 + $0x10] sm:$0xff]
      %v204 = vld [vmem:[%s193 + $0x18] sm:$0xff]
      %v205 = vld [vmem:[%s193 + $0x20] sm:$0xff]
      %v206 = vld [vmem:[%s193 + $0x28] sm:$0xff]
      %v207 = vld [vmem:[%s193 + $0x30] sm:$0xff]
      %v208 = vld [vmem:[%s193 + $0x38] sm:$0xff]
      %v209 = vld [vmem:[%s1] sm:$0xff]
      %v210 = vld [vmem:[%s1 + $0x8] sm:$0xff]
      %v211 = vld [vmem:[%s1 + $0x10] sm:$0xff]
      %v212 = vld [vmem:[%s1 + $0x18] sm:$0xff]
      %v213 = vld [vmem:[%s1 + $0x20] sm:$0xff]
      %v214 = vld [vmem:[%s1 + $0x28] sm:$0xff]
      %v215 = vld [vmem:[%s1 + $0x30] sm:$0xff]
      %v216 = vld [vmem:[%s1 + $0x38] sm:$0xff]
      %v217 = vld [vmem:[%s1 + $0x40] sm:$0xff]
      %vm218 = vcmask 588800
      %v220 = vsel %vm218, %v201, 0
      %v223 = vsel %vm218, %v202, 0
      %v226 = vsel %vm218, %v203, 0
      %v229 = vsel %vm218, %v204, 0
      %v232 = vsel %vm218, %v205, 0
      %v235 = vsel %vm218, %v206, 0
      %v238 = vsel %vm218, %v207, 0
      %v241 = vsel %vm218, %v208, 0
      %243 = vmatpush.msra.mxu0 0.0
      %244 = vmatpush.msra.mxu0 0.0
      %245 = vmatpush.msra.mxu0 0.0
      %246 = vmatpush.msra.mxu0 0.0
      %247 = vmatpush.msra.mxu0 0.0
      %248 = vmatpush.msra.mxu0 0.0
      %249 = vmatpush.msra.mxu0 0.0
      %250 = vmatpush.msra.mxu0 %v217
      %251 = vmatpush.msra.mxu0 %v216
      %252 = vmatpush.msra.mxu0 %v215
      %253 = vmatpush.msra.mxu0 %v214
      %254 = vmatpush.msra.mxu0 %v213
      %255 = vmatpush.msra.mxu0 %v212
      %256 = vmatpush.msra.mxu0 %v211
      %257 = vmatpush.msra.mxu0 %v210
      %258 = vmatpush.msra.mxu0 %v209
      %259 = vmatmul.f32.gmra.mxu0 %v220
      %v260 = vpop.f32.mrf.mxu0
      %v261 = vadd.f32 0.0, %v260
      %262 = vmatmul.f32.gmra.mxu0 %v223
      %v263 = vpop.f32.mrf.mxu0
      %v264 = vadd.f32 0.0, %v263
      %265 = vmatmul.f32.gmra.mxu0 %v226
      %v266 = vpop.f32.mrf.mxu0
      %v267 = vadd.f32 0.0, %v266
      %268 = vmatmul.f32.gmra.mxu0 %v229
      %v269 = vpop.f32.mrf.mxu0
      %v270 = vadd.f32 0.0, %v269
      %271 = vmatmul.f32.gmra.mxu0 %v232
      %v272 = vpop.f32.mrf.mxu0
      %v273 = vadd.f32 0.0, %v272
      %274 = vmatmul.f32.gmra.mxu0 %v235
      %v275 = vpop.f32.mrf.mxu0
      %v276 = vadd.f32 0.0, %v275
      %277 = vmatmul.f32.gmra.mxu0 %v238
      %v278 = vpop.f32.mrf.mxu0
      %v279 = vadd.f32 0.0, %v278
      %280 = vmatmul.f32.gmra.mxu0 %v241
      %v281 = vpop.f32.mrf.mxu0
      %v282 = vadd.f32 0.0, %v281
      %283 = vdwg.mxu0
      %v284 = vld [vmem:[%s2] sm:$0x1]
      %v286 = vperm.slane %v284, 0
      %v288 = vmul.f32 %v261, %v286
      %v289 = vmul.f32 %v264, %v286
      %v290 = vmul.f32 %v267, %v286
      %v291 = vmul.f32 %v270, %v286
      %v292 = vmul.f32 %v273, %v286
      %v293 = vmul.f32 %v276, %v286
      %v294 = vmul.f32 %v279, %v286
      %v295 = vmul.f32 %v282, %v286
      %v296 = vld [vmem:[%s3] sm:$0x1]
      %v298 = vperm.slane %v296, 0
      %v300 = vadd.f32 %v288, %v298
      %v301 = vadd.f32 %v289, %v298
      %v302 = vadd.f32 %v290, %v298
      %v303 = vadd.f32 %v291, %v298
      %v304 = vadd.f32 %v292, %v298
      %v305 = vadd.f32 %v293, %v298
      %v306 = vadd.f32 %v294, %v298
      %v307 = vadd.f32 %v295, %v298
      %v308 = vmax.f32 %v300, 0.0
      %v309 = vmax.f32 %v301, 0.0
      %v310 = vmax.f32 %v302, 0.0
      %v311 = vmax.f32 %v303, 0.0
      %v312 = vmax.f32 %v304, 0.0
      %v313 = vmax.f32 %v305, 0.0
      %v314 = vmax.f32 %v306, 0.0
      %v315 = vmax.f32 %v307, 0.0
      %vm316 = vcmask 64512
      %317 = vst.msk [vmem:[%s199] sm:$0xff] %vm316, %v308
      %318 = vst.msk [vmem:[%s199 + $0x8] sm:$0xff] %vm316, %v309
      %319 = vst.msk [vmem:[%s199 + $0x10] sm:$0xff] %vm316, %v310
      %320 = vst.msk [vmem:[%s199 + $0x18] sm:$0xff] %vm316, %v311
      %321 = vst.msk [vmem:[%s199 + $0x20] sm:$0xff] %vm316, %v312
      %322 = vst.msk [vmem:[%s199 + $0x28] sm:$0xff] %vm316, %v313
      %323 = vst.msk [vmem:[%s199 + $0x30] sm:$0xff] %vm316, %v314
      %324 = vst.msk [vmem:[%s199 + $0x38] sm:$0xff] %vm316, %v315
      %s325 = smul.u32 8, %s15
      %p326 = scmp.lt.s32.totalorder %s325, 15
      %s327 = scalar_select %p326, %s325, 15
      %s328 = smul.addr %s327, 8
      %s329 = scalar_lea.vmem %s4, %s328
      // Predicated region
      $region37: #{v1net_forward.15} parent=35 // pred_check
        %p330 = pneg %p122
      $region38: #{v1net_forward.15} parent=35 // pred_check_branch
        %332 = sbr.rel (%p330) target = $region40
      $region39: #{v1net_forward.15} parent=35 // pred_region
        %s333 = smul.u32 8, %s15
      $region40: #{v1net_forward.15} parent=35 // pred_fallthru
        _
    $region36: #{v1net_forward.15} parent=5 // pred_fallthru
      _
    %p334 = scmp.le.s32.totalorder 2, %s10
    // Predicated region
    $region41: #{v1net_forward.15} parent=5 // pred_check
      %p335 = pneg %p334
    $region42: #{v1net_forward.15} parent=5 // pred_check_branch
      %337 = sbr.rel (%p335) target = $region44
    $region43: #{v1net_forward.15} parent=5 // pred_region
      %s338 = ssub.s32 %s10, 2
      // Predicated region
      $region45: #{v1net_forward.15} parent=43 // pred_check
        %p339 = pneg %p128
      $region46: #{v1net_forward.15} parent=43 // pred_check_branch
        %341 = sbr.rel (%p339) target = $region48
      $region47: #{v1net_forward.15} parent=43 // pred_region
        %s342 = smul.u32 8, %s16
        %p343 = scmp.lt.s32.totalorder %s342, 15
        %s344 = scalar_select %p343, %s342, 15
        %s345 = smul.addr %s344, 8
        %s346 = scalar_lea.vmem %s4, %s345
      $region48: #{v1net_forward.15} parent=43 // pred_fallthru
        _
    $region44: #{v1net_forward.15} parent=5 // pred_fallthru
      _
  $region6: #{v1net_forward.15} parent=0 // loop_footer
    %s14 = sadd.s32 1, %s10
  $region7: #{v1net_forward.15} parent=0 // loop_footer_branch
    %9 = sbr.rel target = $region3
  $region8: #{v1net_forward.15} parent=0 // loop_exit
    _

// kernel: v1net_forward.13
$region0: #{v1net_forward.13}
  #allocation0 [shape = 'u32[]', space=smem, size = 0x4, offset = 0x4, fixed_abs, tag = 'smem constant byte address 0x4 - core index']
  #allocation1 [shape = 'u32[72,128]{1,0:T(1,128)}', space=vmem, size = 0x9000, scoped, tag = 'internal scratch']
  %s0 = inlined_call_operand.vmem [shape: f32[128,64], index: 0, kind: input, shape index: {}]
  %s1 = inlined_call_operand.vmem [shape: f32[64,32], index: 1, kind: input, shape index: {}]
  %s2 = inlined_call_operand.vmem [shape: f32[1,32], index: 2, kind: input, shape index: {}]
  %s3 = inlined_call_operand.vmem [shape: f32[1,32], index: 3, kind: input, shape index: {}]
  %s4 = inlined_call_operand.vmem [shape: f32[128,32], index: 4, kind: output, shape index: {}]
  %s5 = sld [smem:[#allocation0]]
  $region49: #{v1net_forward.13} parent=0
    _
  %s7 = ssub.s32 1, %s5
  %s8 = scalar_select 0, %s7, %s5
  loop: start=0, step=1, limit=4
  $region2: #{v1net_forward.13} parent=0 // loop_pre_header
    _
  $region3: #{v1net_forward.13} parent=0 // loop_header
    %s10 = sphi 0, %s14
    %p11 = scmp.ge.s32.totalorder %s10, 4
    %s20 = sphi 0, %s22
    %s23 = sphi 0, %s20
    %s24 = sphi 0, %s23
    %s40 = sphi 0, %s24
    %s44 = sphi 0, %s44
    %s46 = sphi 0, %s44
    %s47 = sphi 0, %s46
    %s61 = sphi 0, %s47
    %s65 = sphi 0, %s65
    %s67 = sphi 0, %s65
    %s68 = sphi 0, %s67
    %s82 = sphi 0, %s68
    %s86 = sphi 0, %s86
    %s88 = sphi 0, %s86
    %s89 = sphi 0, %s88
    %s103 = sphi 0, %s89
    %s109 = sphi 0, %s111
    %s112 = sphi 0, %s109
    %s113 = sphi 0, %s112
    %s129 = sphi 0, %s113
  $region4: #{v1net_forward.13} parent=0 // loop_header_branch
    %13 = sbr.rel (%p11) target = $region8
  $region5: #{v1net_forward.13} parent=0 // loop_body
    %s15 = ssub.s32 %s10, 1
    %s16 = ssub.s32 %s10, 2
    %s17 = sadd.s32 %s10, 1
    %s18 = ssub.s32 %s10, %s17
    %p19 = scmp.eq.s32.totalorder %s18, 0
    %s21 = sadd.s32 %s20, 1
    %s22 = scalar_select %p19, %s20, %s21
    %p25 = pneg %p19
    %p26 = scmp.eq.s32.totalorder %s10, 1
    %p27 = por %p25, %p26
    %p28 = scmp.ne.s32.totalorder %s20, %s23
    %p29 = scmp.eq.s32.totalorder %s10, 0
    %p30 = por %p28, %p29
    %p31 = scmp.ne.s32.totalorder %s20, %s23
    %p32 = scmp.eq.s32.totalorder %s15, 1
    %p33 = por %p31, %p32
    %p34 = scmp.ne.s32.totalorder %s23, %s24
    %p35 = scmp.eq.s32.totalorder %s15, 0
    %p36 = por %p34, %p35
    %p37 = scmp.ne.s32.totalorder %s23, %s24
    %p38 = scmp.eq.s32.totalorder %s16, 1
    %p39 = por %p37, %p38
    %p41 = scmp.ne.s32.totalorder %s24, %s40
    %p42 = scmp.eq.s32.totalorder %s16, 0
    %p43 = por %p41, %p42
    %s45 = sadd.s32 %s44, 1
    %p48 = scmp.eq.s32.totalorder %s10, 1
    %p49 = scmp.ne.s32.totalorder %s44, %s46
    %p50 = scmp.eq.s32.totalorder %s10, 0
    %p51 = por %p49, %p50
    %p52 = scmp.ne.s32.totalorder %s44, %s46
    %p53 = scmp.eq.s32.totalorder %s15, 1
    %p54 = por %p52, %p53
    %p55 = scmp.ne.s32.totalorder %s46, %s47
    %p56 = scmp.eq.s32.totalorder %s15, 0
    %p57 = por %p55, %p56
    %p58 = scmp.ne.s32.totalorder %s46, %s47
    %p59 = scmp.eq.s32.totalorder %s16, 1
    %p60 = por %p58, %p59
    %p62 = scmp.ne.s32.totalorder %s47, %s61
    %p63 = scmp.eq.s32.totalorder %s16, 0
    %p64 = por %p62, %p63
    %s66 = sadd.s32 %s65, 1
    %p69 = scmp.eq.s32.totalorder %s10, 1
    %p70 = scmp.ne.s32.totalorder %s65, %s67
    %p71 = scmp.eq.s32.totalorder %s10, 0
    %p72 = por %p70, %p71
    %p73 = scmp.ne.s32.totalorder %s65, %s67
    %p74 = scmp.eq.s32.totalorder %s15, 1
    %p75 = por %p73, %p74
    %p76 = scmp.ne.s32.totalorder %s67, %s68
    %p77 = scmp.eq.s32.totalorder %s15, 0
    %p78 = por %p76, %p77
    %p79 = scmp.ne.s32.totalorder %s67, %s68
    %p80 = scmp.eq.s32.totalorder %s16, 1
    %p81 = por %p79, %p80
    %p83 = scmp.ne.s32.totalorder %s68, %s82
    %p84 = scmp.eq.s32.totalorder %s16, 0
    %p85 = por %p83, %p84
    %s87 = sadd.s32 %s86, 1
    %p90 = scmp.eq.s32.totalorder %s10, 1
    %p91 = scmp.ne.s32.totalorder %s86, %s88
    %p92 = scmp.eq.s32.totalorder %s10, 0
    %p93 = por %p91, %p92
    %p94 = scmp.ne.s32.totalorder %s86, %s88
    %p95 = scmp.eq.s32.totalorder %s15, 1
    %p96 = por %p94, %p95
    %p97 = scmp.ne.s32.totalorder %s88, %s89
    %p98 = scmp.eq.s32.totalorder %s15, 0
    %p99 = por %p97, %p98
    %p100 = scmp.ne.s32.totalorder %s88, %s89
    %p101 = scmp.eq.s32.totalorder %s16, 1
    %p102 = por %p100, %p101
    %p104 = scmp.ne.s32.totalorder %s89, %s103
    %p105 = scmp.eq.s32.totalorder %s16, 0
    %p106 = por %p104, %p105
    %s107 = ssub.s32 %s10, %s17
    %p108 = scmp.eq.s32.totalorder %s107, 0
    %s110 = sadd.s32 %s109, 1
    %s111 = scalar_select %p108, %s109, %s110
    %p114 = pneg %p108
    %p115 = scmp.eq.s32.totalorder %s10, 1
    %p116 = por %p114, %p115
    %p117 = scmp.ne.s32.totalorder %s109, %s112
    %p118 = scmp.eq.s32.totalorder %s10, 0
    %p119 = por %p117, %p118
    %p120 = scmp.ne.s32.totalorder %s109, %s112
    %p121 = scmp.eq.s32.totalorder %s15, 1
    %p122 = por %p120, %p121
    %p123 = scmp.ne.s32.totalorder %s112, %s113
    %p124 = scmp.eq.s32.totalorder %s15, 0
    %p125 = por %p123, %p124
    %p126 = scmp.ne.s32.totalorder %s112, %s113
    %p127 = scmp.eq.s32.totalorder %s16, 1
    %p128 = por %p126, %p127
    %p130 = scmp.ne.s32.totalorder %s113, %s129
    %p131 = scmp.eq.s32.totalorder %s16, 0
    %p132 = por %p130, %p131
    %p133 = scmp.le.s32.totalorder 1, %s10
    %p134 = scmp.lt.s32.totalorder %s10, 3
    %p135 = pnand %p133, %p134
    %p136 = pneg %p135
    // Predicated region
    $region9: #{v1net_forward.13} parent=5 // pred_check
      _
    $region10: #{v1net_forward.13} parent=5 // pred_check_branch
      %138 = sbr.rel (%p135) target = $region12
    $region11: #{v1net_forward.13} parent=5 // pred_region
      %s139 = ssub.s32 %s10, 1
      // Predicated region
      $region13: #{v1net_forward.13} parent=11 // pred_check
        %p140 = pneg %p57
      $region14: #{v1net_forward.13} parent=11 // pred_check_branch
        %142 = sbr.rel (%p140) target = $region16
      $region15: #{v1net_forward.13} parent=11 // pred_region
        _
      $region16: #{v1net_forward.13} parent=11 // pred_fallthru
        _
      // Predicated region
      $region17: #{v1net_forward.13} parent=11 // pred_check
        %p143 = pneg %p78
      $region18: #{v1net_forward.13} parent=11 // pred_check_branch
        %145 = sbr.rel (%p143) target = $region20
      $region19: #{v1net_forward.13} parent=11 // pred_region
        _
      $region20: #{v1net_forward.13} parent=11 // pred_fallthru
        _
      // Predicated region
      $region21: #{v1net_forward.13} parent=11 // pred_check
        %p146 = pneg %p99
      $region22: #{v1net_forward.13} parent=11 // pred_check_branch
        %148 = sbr.rel (%p146) target = $region24
      $region23: #{v1net_forward.13} parent=11 // pred_region
        _
      $region24: #{v1net_forward.13} parent=11 // pred_fallthru
        _
    $region12: #{v1net_forward.13} parent=5 // pred_fallthru
      _
    %p149 = scmp.lt.s32.totalorder %s10, 2
    // Predicated region
    $region25: #{v1net_forward.13} parent=5 // pred_check
      %p150 = pneg %p149
    $region26: #{v1net_forward.13} parent=5 // pred_check_branch
      %152 = sbr.rel (%p150) target = $region28
    $region27: #{v1net_forward.13} parent=5 // pred_region
      // Predicated region
      $region29: #{v1net_forward.13} parent=27 // pred_check
        %p153 = pneg %p30
      $region30: #{v1net_forward.13} parent=27 // pred_check_branch
        %155 = sbr.rel (%p153) target = $region32
      $region31: #{v1net_forward.13} parent=27 // pred_region
        %s156 = smul.u32 8, %s10
        %p157 = scmp.lt.s32.totalorder %s156, 15
        %s158 = scalar_select %p157, %s156, 15
        %s159 = smul.addr %s158, 8
        %s160 = scalar_lea.vmem %s0, %s159
        %s161 = smul.u32 8, %s10
      $region32: #{v1net_forward.13} parent=27 // pred_fallthru
        _
    $region28: #{v1net_forward.13} parent=5 // pred_fallthru
      _
    %p162 = scmp.le.s32.totalorder 1, %s10
    %p163 = scmp.lt.s32.totalorder %s10, 3
    %p164 = pnand %p162, %p163
    %p165 = pneg %p164
    // Predicated region
    $region33: #{v1net_forward.13} parent=5 // pred_check
      _
    $region34: #{v1net_forward.13} parent=5 // pred_check_branch
      %167 = sbr.rel (%p164) target = $region36
    $region35: #{v1net_forward.13} parent=5 // pred_region
      %s168 = ssub.s32 %s10, 1
      %s169 = smul.u32 8, %s15
      %p170 = scmp.lt.s32.totalorder %s169, 15
      %s171 = scalar_select %p170, %s169, 15
      %s172 = smul.addr %s171, 8
      %s173 = scalar_lea.vmem %s0, %s172
      %p174 = pneg %p36
      %p175 = pneg %p33
      %p176 = pneg %p57
      %p177 = pneg %p54
      %p178 = pneg %p78
      %p179 = pneg %p75
      %p180 = pneg %p99
      %p181 = pneg %p96
      %p182 = pneg %p125
      %p183 = pneg %p122
      %s184 = smul.u32 8, %s15
      %p185 = scmp.lt.s32.totalorder %s184, 15
      %s186 = scalar_select %p185, %s184, 15
      %s187 = smul.addr %s186, 8
      %s188 = scalar_lea.vmem %s4, %s187
      %s189 = smul.u32 8, %s15
      %p190 = scmp.lt.s32.totalorder %s189, 15
      %s191 = scalar_select %p190, %s189, 15
      %s192 = smul.addr %s191, 8
      %s193 = scalar_lea.vmem %s0, %s192
      %s194 = smul.u32 8, %s15
      %s195 = smul.u32 8, %s15
      %p196 = scmp.lt.s32.totalorder %s195, 15
      %s197 = scalar_select %p196, %s195, 15
      %s198 = smul.addr %s197, 8
      %s199 = scalar_lea.vmem %s4, %s198
      %s200 = smul.u32 8, %s15
      %v201 = vld [vmem:[%s193] sm:$0xff]
      %v202 = vld [vmem:[%s193 + $0x8] sm:$0xff]
      %v203 = vld [vmem:[%s193 + $0x10] sm:$0xff]
      %v204 = vld [vmem:[%s193 + $0x18] sm:$0xff]
      %v205 = vld [vmem:[%s193 + $0x20] sm:$0xff]
      %v206 = vld [vmem:[%s193 + $0x28] sm:$0xff]
      %v207 = vld [vmem:[%s193 + $0x30] sm:$0xff]
      %v208 = vld [vmem:[%s193 + $0x38] sm:$0xff]
      %v209 = vld [vmem:[%s1] sm:$0xff]
      %v210 = vld [vmem:[%s1 + $0x8] sm:$0xff]
      %v211 = vld [vmem:[%s1 + $0x10] sm:$0xff]
      %v212 = vld [vmem:[%s1 + $0x18] sm:$0xff]
      %v213 = vld [vmem:[%s1 + $0x20] sm:$0xff]
      %v214 = vld [vmem:[%s1 + $0x28] sm:$0xff]
      %v215 = vld [vmem:[%s1 + $0x30] sm:$0xff]
      %v216 = vld [vmem:[%s1 + $0x38] sm:$0xff]
      %vm217 = vcmask 523264
      %v219 = vsel %vm217, %v201, 0
      %v222 = vsel %vm217, %v202, 0
      %v225 = vsel %vm217, %v203, 0
      %v228 = vsel %vm217, %v204, 0
      %v231 = vsel %vm217, %v205, 0
      %v234 = vsel %vm217, %v206, 0
      %v237 = vsel %vm217, %v207, 0
      %v240 = vsel %vm217, %v208, 0
      %242 = vmatpush.msra.mxu0 0.0
      %243 = vmatpush.msra.mxu0 0.0
      %244 = vmatpush.msra.mxu0 0.0
      %245 = vmatpush.msra.mxu0 0.0
      %246 = vmatpush.msra.mxu0 0.0
      %247 = vmatpush.msra.mxu0 0.0
      %248 = vmatpush.msra.mxu0 0.0
      %249 = vmatpush.msra.mxu0 0.0
      %250 = vmatpush.msra.mxu0 %v216
      %251 = vmatpush.msra.mxu0 %v215
      %252 = vmatpush.msra.mxu0 %v214
      %253 = vmatpush.msra.mxu0 %v213
      %254 = vmatpush.msra.mxu0 %v212
      %255 = vmatpush.msra.mxu0 %v211
      %256 = vmatpush.msra.mxu0 %v210
      %257 = vmatpush.msra.mxu0 %v209
      %258 = vmatmul.f32.gmra.mxu0 %v219
      %v259 = vpop.f32.mrf.mxu0
      %v260 = vadd.f32 0.0, %v259
      %261 = vmatmul.f32.gmra.mxu0 %v222
      %v262 = vpop.f32.mrf.mxu0
      %v263 = vadd.f32 0.0, %v262
      %264 = vmatmul.f32.gmra.mxu0 %v225
      %v265 = vpop.f32.mrf.mxu0
      %v266 = vadd.f32 0.0, %v265
      %267 = vmatmul.f32.gmra.mxu0 %v228
      %v268 = vpop.f32.mrf.mxu0
      %v269 = vadd.f32 0.0, %v268
      %270 = vmatmul.f32.gmra.mxu0 %v231
      %v271 = vpop.f32.mrf.mxu0
      %v272 = vadd.f32 0.0, %v271
      %273 = vmatmul.f32.gmra.mxu0 %v234
      %v274 = vpop.f32.mrf.mxu0
      %v275 = vadd.f32 0.0, %v274
      %276 = vmatmul.f32.gmra.mxu0 %v237
      %v277 = vpop.f32.mrf.mxu0
      %v278 = vadd.f32 0.0, %v277
      %279 = vmatmul.f32.gmra.mxu0 %v240
      %v280 = vpop.f32.mrf.mxu0
      %v281 = vadd.f32 0.0, %v280
      %282 = vdwg.mxu0
      %v283 = vld [vmem:[%s2] sm:$0x1]
      %v285 = vperm.slane %v283, 0
      %v287 = vmul.f32 %v260, %v285
      %v288 = vmul.f32 %v263, %v285
      %v289 = vmul.f32 %v266, %v285
      %v290 = vmul.f32 %v269, %v285
      %v291 = vmul.f32 %v272, %v285
      %v292 = vmul.f32 %v275, %v285
      %v293 = vmul.f32 %v278, %v285
      %v294 = vmul.f32 %v281, %v285
      %v295 = vld [vmem:[%s3] sm:$0x1]
      %v297 = vperm.slane %v295, 0
      %v299 = vadd.f32 %v287, %v297
      %v300 = vadd.f32 %v288, %v297
      %v301 = vadd.f32 %v289, %v297
      %v302 = vadd.f32 %v290, %v297
      %v303 = vadd.f32 %v291, %v297
      %v304 = vadd.f32 %v292, %v297
      %v305 = vadd.f32 %v293, %v297
      %v306 = vadd.f32 %v294, %v297
      %vm307 = vcmask 261120
      %308 = vst.msk [vmem:[%s199] sm:$0xff] %vm307, %v299
      %309 = vst.msk [vmem:[%s199 + $0x8] sm:$0xff] %vm307, %v300
      %310 = vst.msk [vmem:[%s199 + $0x10] sm:$0xff] %vm307, %v301
      %311 = vst.msk [vmem:[%s199 + $0x18] sm:$0xff] %vm307, %v302
      %312 = vst.msk [vmem:[%s199 + $0x20] sm:$0xff] %vm307, %v303
      %313 = vst.msk [vmem:[%s199 + $0x28] sm:$0xff] %vm307, %v304
      %314 = vst.msk [vmem:[%s199 + $0x30] sm:$0xff] %vm307, %v305
      %315 = vst.msk [vmem:[%s199 + $0x38] sm:$0xff] %vm307, %v306
      %s316 = smul.u32 8, %s15
      %p317 = scmp.lt.s32.totalorder %s316, 15
      %s318 = scalar_select %p317, %s316, 15
      %s319 = smul.addr %s318, 8
      %s320 = scalar_lea.vmem %s4, %s319
      // Predicated region
      $region37: #{v1net_forward.13} parent=35 // pred_check
        %p321 = pneg %p122
      $region38: #{v1net_forward.13} parent=35 // pred_check_branch
        %323 = sbr.rel (%p321) target = $region40
      $region39: #{v1net_forward.13} parent=35 // pred_region
        %s324 = smul.u32 8, %s15
      $region40: #{v1net_forward.13} parent=35 // pred_fallthru
        _
    $region36: #{v1net_forward.13} parent=5 // pred_fallthru
      _
    %p325 = scmp.le.s32.totalorder 2, %s10
    // Predicated region
    $region41: #{v1net_forward.13} parent=5 // pred_check
      %p326 = pneg %p325
    $region42: #{v1net_forward.13} parent=5 // pred_check_branch
      %328 = sbr.rel (%p326) target = $region44
    $region43: #{v1net_forward.13} parent=5 // pred_region
      %s329 = ssub.s32 %s10, 2
      // Predicated region
      $region45: #{v1net_forward.13} parent=43 // pred_check
        %p330 = pneg %p128
      $region46: #{v1net_forward.13} parent=43 // pred_check_branch
        %332 = sbr.rel (%p330) target = $region48
      $region47: #{v1net_forward.13} parent=43 // pred_region
        %s333 = smul.u32 8, %s16
        %p334 = scmp.lt.s32.totalorder %s333, 15
        %s335 = scalar_select %p334, %s333, 15
        %s336 = smul.addr %s335, 8
        %s337 = scalar_lea.vmem %s4, %s336
      $region48: #{v1net_forward.13} parent=43 // pred_fallthru
        _
    $region44: #{v1net_forward.13} parent=5 // pred_fallthru
      _
  $region6: #{v1net_forward.13} parent=0 // loop_footer
    %s14 = sadd.s32 1, %s10
  $region7: #{v1net_forward.13} parent=0 // loop_footer_branch
    %9 = sbr.rel target = $region3
  $region8: #{v1net_forward.13} parent=0 // loop_exit
    _

// kernel: v1net_forward.16
$region0: #{v1net_forward.16}
  #allocation0 [shape = 'u32[]', space=smem, size = 0x4, offset = 0x4, fixed_abs, tag = 'smem constant byte address 0x4 - core index']
  #allocation1 [shape = 'u32[72,128]{1,0:T(1,128)}', space=vmem, size = 0x9000, scoped, tag = 'internal scratch']
  %s0 = inlined_call_operand.vmem [shape: f32[128,8], index: 0, kind: input, shape index: {}]
  %s1 = inlined_call_operand.vmem [shape: f32[8,32], index: 1, kind: input, shape index: {}]
  %s2 = inlined_call_operand.vmem [shape: f32[1,32], index: 2, kind: input, shape index: {}]
  %s3 = inlined_call_operand.vmem [shape: f32[1,32], index: 3, kind: input, shape index: {}]
  %s4 = inlined_call_operand.vmem [shape: f32[128,32], index: 4, kind: input, shape index: {}]
  %s5 = inlined_call_operand.vmem [shape: f32[128,32], index: 5, kind: output, shape index: {}]
  %s6 = sld [smem:[#allocation0]]
  $region53: #{v1net_forward.16} parent=0
    _
  %s8 = ssub.s32 1, %s6
  %s9 = scalar_select 0, %s8, %s6
  loop: start=0, step=1, limit=4
  $region2: #{v1net_forward.16} parent=0 // loop_pre_header
    _
  $region3: #{v1net_forward.16} parent=0 // loop_header
    %s11 = sphi 0, %s15
    %p12 = scmp.ge.s32.totalorder %s11, 4
    %s21 = sphi 0, %s23
    %s24 = sphi 0, %s21
    %s25 = sphi 0, %s24
    %s41 = sphi 0, %s25
    %s45 = sphi 0, %s45
    %s47 = sphi 0, %s45
    %s48 = sphi 0, %s47
    %s62 = sphi 0, %s48
    %s66 = sphi 0, %s66
    %s68 = sphi 0, %s66
    %s69 = sphi 0, %s68
    %s83 = sphi 0, %s69
    %s87 = sphi 0, %s87
    %s89 = sphi 0, %s87
    %s90 = sphi 0, %s89
    %s104 = sphi 0, %s90
    %s110 = sphi 0, %s112
    %s113 = sphi 0, %s110
    %s114 = sphi 0, %s113
    %s130 = sphi 0, %s114
    %s136 = sphi 0, %s138
    %s139 = sphi 0, %s136
    %s140 = sphi 0, %s139
    %s156 = sphi 0, %s140
  $region4: #{v1net_forward.16} parent=0 // loop_header_branch
    %14 = sbr.rel (%p12) target = $region8
  $region5: #{v1net_forward.16} parent=0 // loop_body
    %s16 = ssub.s32 %s11, 1
    %s17 = ssub.s32 %s11, 2
    %s18 = sadd.s32 %s11, 1
    %s19 = ssub.s32 %s11, %s18
    %p20 = scmp.eq.s32.totalorder %s19, 0
    %s22 = sadd.s32 %s21, 1
    %s23 = scalar_select %p20, %s21, %s22
    %p26 = pneg %p20
    %p27 = scmp.eq.s32.totalorder %s11, 1
    %p28 = por %p26, %p27
    %p29 = scmp.ne.s32.totalorder %s21, %s24
    %p30 = scmp.eq.s32.totalorder %s11, 0
    %p31 = por %p29, %p30
    %p32 = scmp.ne.s32.totalorder %s21, %s24
    %p33 = scmp.eq.s32.totalorder %s16, 1
    %p34 = por %p32, %p33
    %p35 = scmp.ne.s32.totalorder %s24, %s25
    %p36 = scmp.eq.s32.totalorder %s16, 0
    %p37 = por %p35, %p36
    %p38 = scmp.ne.s32.totalorder %s24, %s25
    %p39 = scmp.eq.s32.totalorder %s17, 1
    %p40 = por %p38, %p39
    %p42 = scmp.ne.s32.totalorder %s25, %s41
    %p43 = scmp.eq.s32.totalorder %s17, 0
    %p44 = por %p42, %p43
    %s46 = sadd.s32 %s45, 1
    %p49 = scmp.eq.s32.totalorder %s11, 1
    %p50 = scmp.ne.s32.totalorder %s45, %s47
    %p51 = scmp.eq.s32.totalorder %s11, 0
    %p52 = por %p50, %p51
    %p53 = scmp.ne.s32.totalorder %s45, %s47
    %p54 = scmp.eq.s32.totalorder %s16, 1
    %p55 = por %p53, %p54
    %p56 = scmp.ne.s32.totalorder %s47, %s48
    %p57 = scmp.eq.s32.totalorder %s16, 0
    %p58 = por %p56, %p57
    %p59 = scmp.ne.s32.totalorder %s47, %s48
    %p60 = scmp.eq.s32.totalorder %s17, 1
    %p61 = por %p59, %p60
    %p63 = scmp.ne.s32.totalorder %s48, %s62
    %p64 = scmp.eq.s32.totalorder %s17, 0
    %p65 = por %p63, %p64
    %s67 = sadd.s32 %s66, 1
    %p70 = scmp.eq.s32.totalorder %s11, 1
    %p71 = scmp.ne.s32.totalorder %s66, %s68
    %p72 = scmp.eq.s32.totalorder %s11, 0
    %p73 = por %p71, %p72
    %p74 = scmp.ne.s32.totalorder %s66, %s68
    %p75 = scmp.eq.s32.totalorder %s16, 1
    %p76 = por %p74, %p75
    %p77 = scmp.ne.s32.totalorder %s68, %s69
    %p78 = scmp.eq.s32.totalorder %s16, 0
    %p79 = por %p77, %p78
    %p80 = scmp.ne.s32.totalorder %s68, %s69
    %p81 = scmp.eq.s32.totalorder %s17, 1
    %p82 = por %p80, %p81
    %p84 = scmp.ne.s32.totalorder %s69, %s83
    %p85 = scmp.eq.s32.totalorder %s17, 0
    %p86 = por %p84, %p85
    %s88 = sadd.s32 %s87, 1
    %p91 = scmp.eq.s32.totalorder %s11, 1
    %p92 = scmp.ne.s32.totalorder %s87, %s89
    %p93 = scmp.eq.s32.totalorder %s11, 0
    %p94 = por %p92, %p93
    %p95 = scmp.ne.s32.totalorder %s87, %s89
    %p96 = scmp.eq.s32.totalorder %s16, 1
    %p97 = por %p95, %p96
    %p98 = scmp.ne.s32.totalorder %s89, %s90
    %p99 = scmp.eq.s32.totalorder %s16, 0
    %p100 = por %p98, %p99
    %p101 = scmp.ne.s32.totalorder %s89, %s90
    %p102 = scmp.eq.s32.totalorder %s17, 1
    %p103 = por %p101, %p102
    %p105 = scmp.ne.s32.totalorder %s90, %s104
    %p106 = scmp.eq.s32.totalorder %s17, 0
    %p107 = por %p105, %p106
    %s108 = ssub.s32 %s11, %s18
    %p109 = scmp.eq.s32.totalorder %s108, 0
    %s111 = sadd.s32 %s110, 1
    %s112 = scalar_select %p109, %s110, %s111
    %p115 = pneg %p109
    %p116 = scmp.eq.s32.totalorder %s11, 1
    %p117 = por %p115, %p116
    %p118 = scmp.ne.s32.totalorder %s110, %s113
    %p119 = scmp.eq.s32.totalorder %s11, 0
    %p120 = por %p118, %p119
    %p121 = scmp.ne.s32.totalorder %s110, %s113
    %p122 = scmp.eq.s32.totalorder %s16, 1
    %p123 = por %p121, %p122
    %p124 = scmp.ne.s32.totalorder %s113, %s114
    %p125 = scmp.eq.s32.totalorder %s16, 0
    %p126 = por %p124, %p125
    %p127 = scmp.ne.s32.totalorder %s113, %s114
    %p128 = scmp.eq.s32.totalorder %s17, 1
    %p129 = por %p127, %p128
    %p131 = scmp.ne.s32.totalorder %s114, %s130
    %p132 = scmp.eq.s32.totalorder %s17, 0
    %p133 = por %p131, %p132
    %s134 = ssub.s32 %s11, %s18
    %p135 = scmp.eq.s32.totalorder %s134, 0
    %s137 = sadd.s32 %s136, 1
    %s138 = scalar_select %p135, %s136, %s137
    %p141 = pneg %p135
    %p142 = scmp.eq.s32.totalorder %s11, 1
    %p143 = por %p141, %p142
    %p144 = scmp.ne.s32.totalorder %s136, %s139
    %p145 = scmp.eq.s32.totalorder %s11, 0
    %p146 = por %p144, %p145
    %p147 = scmp.ne.s32.totalorder %s136, %s139
    %p148 = scmp.eq.s32.totalorder %s16, 1
    %p149 = por %p147, %p148
    %p150 = scmp.ne.s32.totalorder %s139, %s140
    %p151 = scmp.eq.s32.totalorder %s16, 0
    %p152 = por %p150, %p151
    %p153 = scmp.ne.s32.totalorder %s139, %s140
    %p154 = scmp.eq.s32.totalorder %s17, 1
    %p155 = por %p153, %p154
    %p157 = scmp.ne.s32.totalorder %s140, %s156
    %p158 = scmp.eq.s32.totalorder %s17, 0
    %p159 = por %p157, %p158
    %p160 = scmp.le.s32.totalorder 1, %s11
    %p161 = scmp.lt.s32.totalorder %s11, 3
    %p162 = pnand %p160, %p161
    %p163 = pneg %p162
    // Predicated region
    $region9: #{v1net_forward.16} parent=5 // pred_check
      _
    $region10: #{v1net_forward.16} parent=5 // pred_check_branch
      %165 = sbr.rel (%p162) target = $region12
    $region11: #{v1net_forward.16} parent=5 // pred_region
      %s166 = ssub.s32 %s11, 1
      // Predicated region
      $region13: #{v1net_forward.16} parent=11 // pred_check
        %p167 = pneg %p58
      $region14: #{v1net_forward.16} parent=11 // pred_check_branch
        %169 = sbr.rel (%p167) target = $region16
      $region15: #{v1net_forward.16} parent=11 // pred_region
        _
      $region16: #{v1net_forward.16} parent=11 // pred_fallthru
        _
      // Predicated region
      $region17: #{v1net_forward.16} parent=11 // pred_check
        %p170 = pneg %p79
      $region18: #{v1net_forward.16} parent=11 // pred_check_branch
        %172 = sbr.rel (%p170) target = $region20
      $region19: #{v1net_forward.16} parent=11 // pred_region
        _
      $region20: #{v1net_forward.16} parent=11 // pred_fallthru
        _
      // Predicated region
      $region21: #{v1net_forward.16} parent=11 // pred_check
        %p173 = pneg %p100
      $region22: #{v1net_forward.16} parent=11 // pred_check_branch
        %175 = sbr.rel (%p173) target = $region24
      $region23: #{v1net_forward.16} parent=11 // pred_region
        _
      $region24: #{v1net_forward.16} parent=11 // pred_fallthru
        _
    $region12: #{v1net_forward.16} parent=5 // pred_fallthru
      _
    %p176 = scmp.lt.s32.totalorder %s11, 2
    // Predicated region
    $region25: #{v1net_forward.16} parent=5 // pred_check
      %p177 = pneg %p176
    $region26: #{v1net_forward.16} parent=5 // pred_check_branch
      %179 = sbr.rel (%p177) target = $region28
    $region27: #{v1net_forward.16} parent=5 // pred_region
      // Predicated region
      $region29: #{v1net_forward.16} parent=27 // pred_check
        %p180 = pneg %p31
      $region30: #{v1net_forward.16} parent=27 // pred_check_branch
        %182 = sbr.rel (%p180) target = $region32
      $region31: #{v1net_forward.16} parent=27 // pred_region
        %s183 = smul.u32 8, %s11
        %p184 = scmp.lt.s32.totalorder %s183, 15
        %s185 = scalar_select %p184, %s183, 15
        %s186 = smul.addr %s185, 8
        %s187 = scalar_lea.vmem %s0, %s186
        %s188 = smul.u32 8, %s11
      $region32: #{v1net_forward.16} parent=27 // pred_fallthru
        _
      // Predicated region
      $region33: #{v1net_forward.16} parent=27 // pred_check
        %p189 = pneg %p120
      $region34: #{v1net_forward.16} parent=27 // pred_check_branch
        %191 = sbr.rel (%p189) target = $region36
      $region35: #{v1net_forward.16} parent=27 // pred_region
        %s192 = smul.u32 8, %s11
        %p193 = scmp.lt.s32.totalorder %s192, 15
        %s194 = scalar_select %p193, %s192, 15
        %s195 = smul.addr %s194, 8
        %s196 = scalar_lea.vmem %s4, %s195
        %s197 = smul.u32 8, %s11
      $region36: #{v1net_forward.16} parent=27 // pred_fallthru
        _
    $region28: #{v1net_forward.16} parent=5 // pred_fallthru
      _
    %p198 = scmp.le.s32.totalorder 1, %s11
    %p199 = scmp.lt.s32.totalorder %s11, 3
    %p200 = pnand %p198, %p199
    %p201 = pneg %p200
    // Predicated region
    $region37: #{v1net_forward.16} parent=5 // pred_check
      _
    $region38: #{v1net_forward.16} parent=5 // pred_check_branch
      %203 = sbr.rel (%p200) target = $region40
    $region39: #{v1net_forward.16} parent=5 // pred_region
      %s204 = ssub.s32 %s11, 1
      %s205 = smul.u32 8, %s16
      %p206 = scmp.lt.s32.totalorder %s205, 15
      %s207 = scalar_select %p206, %s205, 15
      %s208 = smul.addr %s207, 8
      %s209 = scalar_lea.vmem %s0, %s208
      %p210 = pneg %p37
      %p211 = pneg %p34
      %p212 = pneg %p58
      %p213 = pneg %p55
      %p214 = pneg %p79
      %p215 = pneg %p76
      %p216 = pneg %p100
      %p217 = pneg %p97
      %s218 = smul.u32 8, %s16
      %p219 = scmp.lt.s32.totalorder %s218, 15
      %s220 = scalar_select %p219, %s218, 15
      %s221 = smul.addr %s220, 8
      %s222 = scalar_lea.vmem %s4, %s221
      %p223 = pneg %p126
      %p224 = pneg %p123
      %p225 = pneg %p152
      %p226 = pneg %p149
      %s227 = smul.u32 8, %s16
      %p228 = scmp.lt.s32.totalorder %s227, 15
      %s229 = scalar_select %p228, %s227, 15
      %s230 = smul.addr %s229, 8
      %s231 = scalar_lea.vmem %s5, %s230
      %s232 = smul.u32 8, %s16
      %p233 = scmp.lt.s32.totalorder %s232, 15
      %s234 = scalar_select %p233, %s232, 15
      %s235 = smul.addr %s234, 8
      %s236 = scalar_lea.vmem %s0, %s235
      %s237 = smul.u32 8, %s16
      %s238 = smul.u32 8, %s16
      %p239 = scmp.lt.s32.totalorder %s238, 15
      %s240 = scalar_select %p239, %s238, 15
      %s241 = smul.addr %s240, 8
      %s242 = scalar_lea.vmem %s4, %s241
      %s243 = smul.u32 8, %s16
      %s244 = smul.u32 8, %s16
      %p245 = scmp.lt.s32.totalorder %s244, 15
      %s246 = scalar_select %p245, %s244, 15
      %s247 = smul.addr %s246, 8
      %s248 = scalar_lea.vmem %s5, %s247
      %s249 = smul.u32 8, %s16
      %v250 = vld [vmem:[%s236] sm:$0xff]
      %v251 = vld [vmem:[%s236 + $0x8] sm:$0xff]
      %v252 = vld [vmem:[%s236 + $0x10] sm:$0xff]
      %v253 = vld [vmem:[%s236 + $0x18] sm:$0xff]
      %v254 = vld [vmem:[%s236 + $0x20] sm:$0xff]
      %v255 = vld [vmem:[%s236 + $0x28] sm:$0xff]
      %v256 = vld [vmem:[%s236 + $0x30] sm:$0xff]
      %v257 = vld [vmem:[%s236 + $0x38] sm:$0xff]
      %v258 = vld [vmem:[%s1] sm:$0xff]
      %vm259 = vcmask 64512
      %v261 = vsel %vm259, %v250, 0
      %v264 = vsel %vm259, %v251, 0
      %v267 = vsel %vm259, %v252, 0
      %v270 = vsel %vm259, %v253, 0
      %v273 = vsel %vm259, %v254, 0
      %v276 = vsel %vm259, %v255, 0
      %v279 = vsel %vm259, %v256, 0
      %v282 = vsel %vm259, %v257, 0
      %284 = vmatpush.msra.mxu0 0.0
      %285 = vmatpush.msra.mxu0 0.0
      %286 = vmatpush.msra.mxu0 0.0
      %287 = vmatpush.msra.mxu0 0.0
      %288 = vmatpush.msra.mxu0 0.0
      %289 = vmatpush.msra.mxu0 0.0
      %290 = vmatpush.msra.mxu0 0.0
      %291 = vmatpush.msra.mxu0 0.0
      %292 = vmatpush.msra.mxu0 0.0
      %293 = vmatpush.msra.mxu0 0.0
      %294 = vmatpush.msra.mxu0 0.0
      %295 = vmatpush.msra.mxu0 0.0
      %296 = vmatpush.msra.mxu0 0.0
      %297 = vmatpush.msra.mxu0 0.0
      %298 = vmatpush.msra.mxu0 0.0
      %299 = vmatpush.msra.mxu0 %v258
      %300 = vmatmul.f32.gmra.mxu0 %v261
      %v301 = vpop.f32.mrf.mxu0
      %v302 = vadd.f32 0.0, %v301
      %303 = vmatmul.f32.gmra.mxu0 %v264
      %v304 = vpop.f32.mrf.mxu0
      %v305 = vadd.f32 0.0, %v304
      %306 = vmatmul.f32.gmra.mxu0 %v267
      %v307 = vpop.f32.mrf.mxu0
      %v308 = vadd.f32 0.0, %v307
      %309 = vmatmul.f32.gmra.mxu0 %v270
      %v310 = vpop.f32.mrf.mxu0
      %v311 = vadd.f32 0.0, %v310
      %312 = vmatmul.f32.gmra.mxu0 %v273
      %v313 = vpop.f32.mrf.mxu0
      %v314 = vadd.f32 0.0, %v313
      %315 = vmatmul.f32.gmra.mxu0 %v276
      %v316 = vpop.f32.mrf.mxu0
      %v317 = vadd.f32 0.0, %v316
      %318 = vmatmul.f32.gmra.mxu0 %v279
      %v319 = vpop.f32.mrf.mxu0
      %v320 = vadd.f32 0.0, %v319
      %321 = vmatmul.f32.gmra.mxu0 %v282
      %v322 = vpop.f32.mrf.mxu0
      %v323 = vadd.f32 0.0, %v322
      %324 = vdwg.mxu0
      %v325 = vld [vmem:[%s2] sm:$0x1]
      %v327 = vperm.slane %v325, 0
      %v329 = vmul.f32 %v302, %v327
      %v330 = vmul.f32 %v305, %v327
      %v331 = vmul.f32 %v308, %v327
      %v332 = vmul.f32 %v311, %v327
      %v333 = vmul.f32 %v314, %v327
      %v334 = vmul.f32 %v317, %v327
      %v335 = vmul.f32 %v320, %v327
      %v336 = vmul.f32 %v323, %v327
      %v337 = vld [vmem:[%s3] sm:$0x1]
      %v339 = vperm.slane %v337, 0
      %v341 = vadd.f32 %v329, %v339
      %v342 = vadd.f32 %v330, %v339
      %v343 = vadd.f32 %v331, %v339
      %v344 = vadd.f32 %v332, %v339
      %v345 = vadd.f32 %v333, %v339
      %v346 = vadd.f32 %v334, %v339
      %v347 = vadd.f32 %v335, %v339
      %v348 = vadd.f32 %v336, %v339
      %v349 = vld [vmem:[%s242] sm:$0xff]
      %v350 = vld [vmem:[%s242 + $0x8] sm:$0xff]
      %v351 = vld [vmem:[%s242 + $0x10] sm:$0xff]
      %v352 = vld [vmem:[%s242 + $0x18] sm:$0xff]
      %v353 = vld [vmem:[%s242 + $0x20] sm:$0xff]
      %v354 = vld [vmem:[%s242 + $0x28] sm:$0xff]
      %v355 = vld [vmem:[%s242 + $0x30] sm:$0xff]
      %v356 = vld [vmem:[%s242 + $0x38] sm:$0xff]
      %v357 = vadd.f32 %v341, %v349
      %v358 = vadd.f32 %v342, %v350
      %v359 = vadd.f32 %v343, %v351
      %v360 = vadd.f32 %v344, %v352
      %v361 = vadd.f32 %v345, %v353
      %v362 = vadd.f32 %v346, %v354
      %v363 = vadd.f32 %v347, %v355
      %v364 = vadd.f32 %v348, %v356
      %v365 = vmax.f32 %v357, 0.0
      %v366 = vmax.f32 %v358, 0.0
      %v367 = vmax.f32 %v359, 0.0
      %v368 = vmax.f32 %v360, 0.0
      %v369 = vmax.f32 %v361, 0.0
      %v370 = vmax.f32 %v362, 0.0
      %v371 = vmax.f32 %v363, 0.0
      %v372 = vmax.f32 %v364, 0.0
      %vm373 = vcmask 261120
      %374 = vst.msk [vmem:[%s248] sm:$0xff] %vm373, %v365
      %375 = vst.msk [vmem:[%s248 + $0x8] sm:$0xff] %vm373, %v366
      %376 = vst.msk [vmem:[%s248 + $0x10] sm:$0xff] %vm373, %v367
      %377 = vst.msk [vmem:[%s248 + $0x18] sm:$0xff] %vm373, %v368
      %378 = vst.msk [vmem:[%s248 + $0x20] sm:$0xff] %vm373, %v369
      %379 = vst.msk [vmem:[%s248 + $0x28] sm:$0xff] %vm373, %v370
      %380 = vst.msk [vmem:[%s248 + $0x30] sm:$0xff] %vm373, %v371
      %381 = vst.msk [vmem:[%s248 + $0x38] sm:$0xff] %vm373, %v372
      %s382 = smul.u32 8, %s16
      %p383 = scmp.lt.s32.totalorder %s382, 15
      %s384 = scalar_select %p383, %s382, 15
      %s385 = smul.addr %s384, 8
      %s386 = scalar_lea.vmem %s5, %s385
      // Predicated region
      $region41: #{v1net_forward.16} parent=39 // pred_check
        %p387 = pneg %p149
      $region42: #{v1net_forward.16} parent=39 // pred_check_branch
        %389 = sbr.rel (%p387) target = $region44
      $region43: #{v1net_forward.16} parent=39 // pred_region
        %s390 = smul.u32 8, %s16
      $region44: #{v1net_forward.16} parent=39 // pred_fallthru
        _
    $region40: #{v1net_forward.16} parent=5 // pred_fallthru
      _
    %p391 = scmp.le.s32.totalorder 2, %s11
    // Predicated region
    $region45: #{v1net_forward.16} parent=5 // pred_check
      %p392 = pneg %p391
    $region46: #{v1net_forward.16} parent=5 // pred_check_branch
      %394 = sbr.rel (%p392) target = $region48
    $region47: #{v1net_forward.16} parent=5 // pred_region
      %s395 = ssub.s32 %s11, 2
      // Predicated region
      $region49: #{v1net_forward.16} parent=47 // pred_check
        %p396 = pneg %p155
      $region50: #{v1net_forward.16} parent=47 // pred_check_branch
        %398 = sbr.rel (%p396) target = $region52
      $region51: #{v1net_forward.16} parent=47 // pred_region
        %s399 = smul.u32 8, %s17
        %p400 = scmp.lt.s32.totalorder %s399, 15
        %s401 = scalar_select %p400, %s399, 15
        %s402 = smul.addr %s401, 8
        %s403 = scalar_lea.vmem %s5, %s402
      $region52: #{v1net_forward.16} parent=47 // pred_fallthru
        _
    $region48: #{v1net_forward.16} parent=5 // pred_fallthru
      _
  $region6: #{v1net_forward.16} parent=0 // loop_footer
    %s15 = sadd.s32 1, %s11
  $region7: #{v1net_forward.16} parent=0 // loop_footer_branch
    %10 = sbr.rel target = $region3
  $region8: #{v1net_forward.16} parent=0 // loop_exit
    _

// kernel: v1net_forward.17
$region0: #{v1net_forward.17}
  #allocation0 [shape = 'u32[]', space=smem, size = 0x4, offset = 0x4, fixed_abs, tag = 'smem constant byte address 0x4 - core index']
  #allocation1 [shape = 'u32[72,128]{1,0:T(1,128)}', space=vmem, size = 0x9000, scoped, tag = 'internal scratch']
  %s0 = inlined_call_operand.vmem [shape: f32[128,96], index: 0, kind: input, shape index: {}]
  %s1 = inlined_call_operand.vmem [shape: f32[96,8], index: 1, kind: input, shape index: {}]
  %s2 = inlined_call_operand.vmem [shape: f32[1,8], index: 2, kind: input, shape index: {}]
  %s3 = inlined_call_operand.vmem [shape: f32[1,8], index: 3, kind: input, shape index: {}]
  %s4 = inlined_call_operand.vmem [shape: f32[128,8], index: 4, kind: output, shape index: {}]
  %s5 = sld [smem:[#allocation0]]
  $region49: #{v1net_forward.17} parent=0
    _
  %s7 = ssub.s32 1, %s5
  %s8 = scalar_select 0, %s7, %s5
  loop: start=0, step=1, limit=4
  $region2: #{v1net_forward.17} parent=0 // loop_pre_header
    _
  $region3: #{v1net_forward.17} parent=0 // loop_header
    %s10 = sphi 0, %s14
    %p11 = scmp.ge.s32.totalorder %s10, 4
    %s20 = sphi 0, %s22
    %s23 = sphi 0, %s20
    %s24 = sphi 0, %s23
    %s40 = sphi 0, %s24
    %s44 = sphi 0, %s44
    %s46 = sphi 0, %s44
    %s47 = sphi 0, %s46
    %s61 = sphi 0, %s47
    %s65 = sphi 0, %s65
    %s67 = sphi 0, %s65
    %s68 = sphi 0, %s67
    %s82 = sphi 0, %s68
    %s86 = sphi 0, %s86
    %s88 = sphi 0, %s86
    %s89 = sphi 0, %s88
    %s103 = sphi 0, %s89
    %s109 = sphi 0, %s111
    %s112 = sphi 0, %s109
    %s113 = sphi 0, %s112
    %s129 = sphi 0, %s113
  $region4: #{v1net_forward.17} parent=0 // loop_header_branch
    %13 = sbr.rel (%p11) target = $region8
  $region5: #{v1net_forward.17} parent=0 // loop_body
    %s15 = ssub.s32 %s10, 1
    %s16 = ssub.s32 %s10, 2
    %s17 = sadd.s32 %s10, 1
    %s18 = ssub.s32 %s10, %s17
    %p19 = scmp.eq.s32.totalorder %s18, 0
    %s21 = sadd.s32 %s20, 1
    %s22 = scalar_select %p19, %s20, %s21
    %p25 = pneg %p19
    %p26 = scmp.eq.s32.totalorder %s10, 1
    %p27 = por %p25, %p26
    %p28 = scmp.ne.s32.totalorder %s20, %s23
    %p29 = scmp.eq.s32.totalorder %s10, 0
    %p30 = por %p28, %p29
    %p31 = scmp.ne.s32.totalorder %s20, %s23
    %p32 = scmp.eq.s32.totalorder %s15, 1
    %p33 = por %p31, %p32
    %p34 = scmp.ne.s32.totalorder %s23, %s24
    %p35 = scmp.eq.s32.totalorder %s15, 0
    %p36 = por %p34, %p35
    %p37 = scmp.ne.s32.totalorder %s23, %s24
    %p38 = scmp.eq.s32.totalorder %s16, 1
    %p39 = por %p37, %p38
    %p41 = scmp.ne.s32.totalorder %s24, %s40
    %p42 = scmp.eq.s32.totalorder %s16, 0
    %p43 = por %p41, %p42
    %s45 = sadd.s32 %s44, 1
    %p48 = scmp.eq.s32.totalorder %s10, 1
    %p49 = scmp.ne.s32.totalorder %s44, %s46
    %p50 = scmp.eq.s32.totalorder %s10, 0
    %p51 = por %p49, %p50
    %p52 = scmp.ne.s32.totalorder %s44, %s46
    %p53 = scmp.eq.s32.totalorder %s15, 1
    %p54 = por %p52, %p53
    %p55 = scmp.ne.s32.totalorder %s46, %s47
    %p56 = scmp.eq.s32.totalorder %s15, 0
    %p57 = por %p55, %p56
    %p58 = scmp.ne.s32.totalorder %s46, %s47
    %p59 = scmp.eq.s32.totalorder %s16, 1
    %p60 = por %p58, %p59
    %p62 = scmp.ne.s32.totalorder %s47, %s61
    %p63 = scmp.eq.s32.totalorder %s16, 0
    %p64 = por %p62, %p63
    %s66 = sadd.s32 %s65, 1
    %p69 = scmp.eq.s32.totalorder %s10, 1
    %p70 = scmp.ne.s32.totalorder %s65, %s67
    %p71 = scmp.eq.s32.totalorder %s10, 0
    %p72 = por %p70, %p71
    %p73 = scmp.ne.s32.totalorder %s65, %s67
    %p74 = scmp.eq.s32.totalorder %s15, 1
    %p75 = por %p73, %p74
    %p76 = scmp.ne.s32.totalorder %s67, %s68
    %p77 = scmp.eq.s32.totalorder %s15, 0
    %p78 = por %p76, %p77
    %p79 = scmp.ne.s32.totalorder %s67, %s68
    %p80 = scmp.eq.s32.totalorder %s16, 1
    %p81 = por %p79, %p80
    %p83 = scmp.ne.s32.totalorder %s68, %s82
    %p84 = scmp.eq.s32.totalorder %s16, 0
    %p85 = por %p83, %p84
    %s87 = sadd.s32 %s86, 1
    %p90 = scmp.eq.s32.totalorder %s10, 1
    %p91 = scmp.ne.s32.totalorder %s86, %s88
    %p92 = scmp.eq.s32.totalorder %s10, 0
    %p93 = por %p91, %p92
    %p94 = scmp.ne.s32.totalorder %s86, %s88
    %p95 = scmp.eq.s32.totalorder %s15, 1
    %p96 = por %p94, %p95
    %p97 = scmp.ne.s32.totalorder %s88, %s89
    %p98 = scmp.eq.s32.totalorder %s15, 0
    %p99 = por %p97, %p98
    %p100 = scmp.ne.s32.totalorder %s88, %s89
    %p101 = scmp.eq.s32.totalorder %s16, 1
    %p102 = por %p100, %p101
    %p104 = scmp.ne.s32.totalorder %s89, %s103
    %p105 = scmp.eq.s32.totalorder %s16, 0
    %p106 = por %p104, %p105
    %s107 = ssub.s32 %s10, %s17
    %p108 = scmp.eq.s32.totalorder %s107, 0
    %s110 = sadd.s32 %s109, 1
    %s111 = scalar_select %p108, %s109, %s110
    %p114 = pneg %p108
    %p115 = scmp.eq.s32.totalorder %s10, 1
    %p116 = por %p114, %p115
    %p117 = scmp.ne.s32.totalorder %s109, %s112
    %p118 = scmp.eq.s32.totalorder %s10, 0
    %p119 = por %p117, %p118
    %p120 = scmp.ne.s32.totalorder %s109, %s112
    %p121 = scmp.eq.s32.totalorder %s15, 1
    %p122 = por %p120, %p121
    %p123 = scmp.ne.s32.totalorder %s112, %s113
    %p124 = scmp.eq.s32.totalorder %s15, 0
    %p125 = por %p123, %p124
    %p126 = scmp.ne.s32.totalorder %s112, %s113
    %p127 = scmp.eq.s32.totalorder %s16, 1
    %p128 = por %p126, %p127
    %p130 = scmp.ne.s32.totalorder %s113, %s129
    %p131 = scmp.eq.s32.totalorder %s16, 0
    %p132 = por %p130, %p131
    %p133 = scmp.le.s32.totalorder 1, %s10
    %p134 = scmp.lt.s32.totalorder %s10, 3
    %p135 = pnand %p133, %p134
    %p136 = pneg %p135
    // Predicated region
    $region9: #{v1net_forward.17} parent=5 // pred_check
      _
    $region10: #{v1net_forward.17} parent=5 // pred_check_branch
      %138 = sbr.rel (%p135) target = $region12
    $region11: #{v1net_forward.17} parent=5 // pred_region
      %s139 = ssub.s32 %s10, 1
      // Predicated region
      $region13: #{v1net_forward.17} parent=11 // pred_check
        %p140 = pneg %p57
      $region14: #{v1net_forward.17} parent=11 // pred_check_branch
        %142 = sbr.rel (%p140) target = $region16
      $region15: #{v1net_forward.17} parent=11 // pred_region
        _
      $region16: #{v1net_forward.17} parent=11 // pred_fallthru
        _
      // Predicated region
      $region17: #{v1net_forward.17} parent=11 // pred_check
        %p143 = pneg %p78
      $region18: #{v1net_forward.17} parent=11 // pred_check_branch
        %145 = sbr.rel (%p143) target = $region20
      $region19: #{v1net_forward.17} parent=11 // pred_region
        _
      $region20: #{v1net_forward.17} parent=11 // pred_fallthru
        _
      // Predicated region
      $region21: #{v1net_forward.17} parent=11 // pred_check
        %p146 = pneg %p99
      $region22: #{v1net_forward.17} parent=11 // pred_check_branch
        %148 = sbr.rel (%p146) target = $region24
      $region23: #{v1net_forward.17} parent=11 // pred_region
        _
      $region24: #{v1net_forward.17} parent=11 // pred_fallthru
        _
    $region12: #{v1net_forward.17} parent=5 // pred_fallthru
      _
    %p149 = scmp.lt.s32.totalorder %s10, 2
    // Predicated region
    $region25: #{v1net_forward.17} parent=5 // pred_check
      %p150 = pneg %p149
    $region26: #{v1net_forward.17} parent=5 // pred_check_branch
      %152 = sbr.rel (%p150) target = $region28
    $region27: #{v1net_forward.17} parent=5 // pred_region
      // Predicated region
      $region29: #{v1net_forward.17} parent=27 // pred_check
        %p153 = pneg %p30
      $region30: #{v1net_forward.17} parent=27 // pred_check_branch
        %155 = sbr.rel (%p153) target = $region32
      $region31: #{v1net_forward.17} parent=27 // pred_region
        %s156 = smul.u32 8, %s10
        %p157 = scmp.lt.s32.totalorder %s156, 15
        %s158 = scalar_select %p157, %s156, 15
        %s159 = smul.addr %s158, 8
        %s160 = scalar_lea.vmem %s0, %s159
        %s161 = smul.u32 8, %s10
      $region32: #{v1net_forward.17} parent=27 // pred_fallthru
        _
    $region28: #{v1net_forward.17} parent=5 // pred_fallthru
      _
    %p162 = scmp.le.s32.totalorder 1, %s10
    %p163 = scmp.lt.s32.totalorder %s10, 3
    %p164 = pnand %p162, %p163
    %p165 = pneg %p164
    // Predicated region
    $region33: #{v1net_forward.17} parent=5 // pred_check
      _
    $region34: #{v1net_forward.17} parent=5 // pred_check_branch
      %167 = sbr.rel (%p164) target = $region36
    $region35: #{v1net_forward.17} parent=5 // pred_region
      %s168 = ssub.s32 %s10, 1
      %s169 = smul.u32 8, %s15
      %p170 = scmp.lt.s32.totalorder %s169, 15
      %s171 = scalar_select %p170, %s169, 15
      %s172 = smul.addr %s171, 8
      %s173 = scalar_lea.vmem %s0, %s172
      %p174 = pneg %p36
      %p175 = pneg %p33
      %p176 = pneg %p57
      %p177 = pneg %p54
      %p178 = pneg %p78
      %p179 = pneg %p75
      %p180 = pneg %p99
      %p181 = pneg %p96
      %p182 = pneg %p125
      %p183 = pneg %p122
      %s184 = smul.u32 8, %s15
      %p185 = scmp.lt.s32.totalorder %s184, 15
      %s186 = scalar_select %p185, %s184, 15
      %s187 = smul.addr %s186, 8
      %s188 = scalar_lea.vmem %s4, %s187
      %s189 = smul.u32 8, %s15
      %p190 = scmp.lt.s32.totalorder %s189, 15
      %s191 = scalar_select %p190, %s189, 15
      %s192 = smul.addr %s191, 8
      %s193 = scalar_lea.vmem %s0, %s192
      %s194 = smul.u32 8, %s15
      %s195 = smul.u32 8, %s15
      %p196 = scmp.lt.s32.totalorder %s195, 15
      %s197 = scalar_select %p196, %s195, 15
      %s198 = smul.addr %s197, 8
      %s199 = scalar_lea.vmem %s4, %s198
      %s200 = smul.u32 8, %s15
      %v201 = vld [vmem:[%s193] sm:$0xff]
      %v202 = vld [vmem:[%s193 + $0x8] sm:$0xff]
      %v203 = vld [vmem:[%s193 + $0x10] sm:$0xff]
      %v204 = vld [vmem:[%s193 + $0x18] sm:$0xff]
      %v205 = vld [vmem:[%s193 + $0x20] sm:$0xff]
      %v206 = vld [vmem:[%s193 + $0x28] sm:$0xff]
      %v207 = vld [vmem:[%s193 + $0x30] sm:$0xff]
      %v208 = vld [vmem:[%s193 + $0x38] sm:$0xff]
      %v209 = vld [vmem:[%s1] sm:$0xff]
      %v210 = vld [vmem:[%s1 + $0x8] sm:$0xff]
      %v211 = vld [vmem:[%s1 + $0x10] sm:$0xff]
      %v212 = vld [vmem:[%s1 + $0x18] sm:$0xff]
      %v213 = vld [vmem:[%s1 + $0x20] sm:$0xff]
      %v214 = vld [vmem:[%s1 + $0x28] sm:$0xff]
      %v215 = vld [vmem:[%s1 + $0x30] sm:$0xff]
      %v216 = vld [vmem:[%s1 + $0x38] sm:$0xff]
      %v217 = vld [vmem:[%s1 + $0x40] sm:$0xff]
      %v218 = vld [vmem:[%s1 + $0x48] sm:$0xff]
      %v219 = vld [vmem:[%s1 + $0x50] sm:$0xff]
      %v220 = vld [vmem:[%s1 + $0x58] sm:$0xff]
      %vm221 = vcmask 785408
      %v223 = vsel %vm221, %v201, 0
      %v226 = vsel %vm221, %v202, 0
      %v229 = vsel %vm221, %v203, 0
      %v232 = vsel %vm221, %v204, 0
      %v235 = vsel %vm221, %v205, 0
      %v238 = vsel %vm221, %v206, 0
      %v241 = vsel %vm221, %v207, 0
      %v244 = vsel %vm221, %v208, 0
      %246 = vmatpush.msra.mxu0 0.0
      %247 = vmatpush.msra.mxu0 0.0
      %248 = vmatpush.msra.mxu0 0.0
      %249 = vmatpush.msra.mxu0 0.0
      %250 = vmatpush.msra.mxu0 %v220
      %251 = vmatpush.msra.mxu0 %v219
      %252 = vmatpush.msra.mxu0 %v218
      %253 = vmatpush.msra.mxu0 %v217
      %254 = vmatpush.msra.mxu0 %v216
      %255 = vmatpush.msra.mxu0 %v215
      %256 = vmatpush.msra.mxu0 %v214
      %257 = vmatpush.msra.mxu0 %v213
      %258 = vmatpush.msra.mxu0 %v212
      %259 = vmatpush.msra.mxu0 %v211
      %260 = vmatpush.msra.mxu0 %v210
      %261 = vmatpush.msra.mxu0 %v209
      %262 = vmatmul.f32.gmra.mxu0 %v223
      %v263 = vpop.f32.mrf.mxu0
      %v264 = vadd.f32 0.0, %v263
      %265 = vmatmul.f32.gmra.mxu0 %v226
      %v266 = vpop.f32.mrf.mxu0
      %v267 = vadd.f32 0.0, %v266
      %268 = vmatmul.f32.gmra.mxu0 %v229
      %v269 = vpop.f32.mrf.mxu0
      %v270 = vadd.f32 0.0, %v269
      %271 = vmatmul.f32.gmra.mxu0 %v232
      %v272 = vpop.f32.mrf.mxu0
      %v273 = vadd.f32 0.0, %v272
      %274 = vmatmul.f32.gmra.mxu0 %v235
      %v275 = vpop.f32.mrf.mxu0
      %v276 = vadd.f32 0.0, %v275
      %277 = vmatmul.f32.gmra.mxu0 %v238
      %v278 = vpop.f32.mrf.mxu0
      %v279 = vadd.f32 0.0, %v278
      %280 = vmatmul.f32.gmra.mxu0 %v241
      %v281 = vpop.f32.mrf.mxu0
      %v282 = vadd.f32 0.0, %v281
      %283 = vmatmul.f32.gmra.mxu0 %v244
      %v284 = vpop.f32.mrf.mxu0
      %v285 = vadd.f32 0.0, %v284
      %286 = vdwg.mxu0
      %v287 = vld [vmem:[%s2] sm:$0x1]
      %v289 = vperm.slane %v287, 0
      %v291 = vmul.f32 %v264, %v289
      %v292 = vmul.f32 %v267, %v289
      %v293 = vmul.f32 %v270, %v289
      %v294 = vmul.f32 %v273, %v289
      %v295 = vmul.f32 %v276, %v289
      %v296 = vmul.f32 %v279, %v289
      %v297 = vmul.f32 %v282, %v289
      %v298 = vmul.f32 %v285, %v289
      %v299 = vld [vmem:[%s3] sm:$0x1]
      %v301 = vperm.slane %v299, 0
      %v303 = vadd.f32 %v291, %v301
      %v304 = vadd.f32 %v292, %v301
      %v305 = vadd.f32 %v293, %v301
      %v306 = vadd.f32 %v294, %v301
      %v307 = vadd.f32 %v295, %v301
      %v308 = vadd.f32 %v296, %v301
      %v309 = vadd.f32 %v297, %v301
      %v310 = vadd.f32 %v298, %v301
      %v311 = vmax.f32 %v303, 0.0
      %v312 = vmax.f32 %v304, 0.0
      %v313 = vmax.f32 %v305, 0.0
      %v314 = vmax.f32 %v306, 0.0
      %v315 = vmax.f32 %v307, 0.0
      %v316 = vmax.f32 %v308, 0.0
      %v317 = vmax.f32 %v309, 0.0
      %v318 = vmax.f32 %v310, 0.0
      %vm319 = vcmask 64512
      %320 = vst.msk [vmem:[%s199] sm:$0xff] %vm319, %v311
      %321 = vst.msk [vmem:[%s199 + $0x8] sm:$0xff] %vm319, %v312
      %322 = vst.msk [vmem:[%s199 + $0x10] sm:$0xff] %vm319, %v313
      %323 = vst.msk [vmem:[%s199 + $0x18] sm:$0xff] %vm319, %v314
      %324 = vst.msk [vmem:[%s199 + $0x20] sm:$0xff] %vm319, %v315
      %325 = vst.msk [vmem:[%s199 + $0x28] sm:$0xff] %vm319, %v316
      %326 = vst.msk [vmem:[%s199 + $0x30] sm:$0xff] %vm319, %v317
      %327 = vst.msk [vmem:[%s199 + $0x38] sm:$0xff] %vm319, %v318
      %s328 = smul.u32 8, %s15
      %p329 = scmp.lt.s32.totalorder %s328, 15
      %s330 = scalar_select %p329, %s328, 15
      %s331 = smul.addr %s330, 8
      %s332 = scalar_lea.vmem %s4, %s331
      // Predicated region
      $region37: #{v1net_forward.17} parent=35 // pred_check
        %p333 = pneg %p122
      $region38: #{v1net_forward.17} parent=35 // pred_check_branch
        %335 = sbr.rel (%p333) target = $region40
      $region39: #{v1net_forward.17} parent=35 // pred_region
        %s336 = smul.u32 8, %s15
      $region40: #{v1net_forward.17} parent=35 // pred_fallthru
        _
    $region36: #{v1net_forward.17} parent=5 // pred_fallthru
      _
    %p337 = scmp.le.s32.totalorder 2, %s10
    // Predicated region
    $region41: #{v1net_forward.17} parent=5 // pred_check
      %p338 = pneg %p337
    $region42: #{v1net_forward.17} parent=5 // pred_check_branch
      %340 = sbr.rel (%p338) target = $region44
    $region43: #{v1net_forward.17} parent=5 // pred_region
      %s341 = ssub.s32 %s10, 2
      // Predicated region
      $region45: #{v1net_forward.17} parent=43 // pred_check
        %p342 = pneg %p128
      $region46: #{v1net_forward.17} parent=43 // pred_check_branch
        %344 = sbr.rel (%p342) target = $region48
      $region47: #{v1net_forward.17} parent=43 // pred_region
        %s345 = smul.u32 8, %s16
        %p346 = scmp.lt.s32.totalorder %s345, 15
        %s347 = scalar_select %p346, %s345, 15
        %s348 = smul.addr %s347, 8
        %s349 = scalar_lea.vmem %s4, %s348
      $region48: #{v1net_forward.17} parent=43 // pred_fallthru
        _
    $region44: #{v1net_forward.17} parent=5 // pred_fallthru
      _
  $region6: #{v1net_forward.17} parent=0 // loop_footer
    %s14 = sadd.s32 1, %s10
  $region7: #{v1net_forward.17} parent=0 // loop_footer_branch
    %9 = sbr.rel target = $region3
  $region8: #{v1net_forward.17} parent=0 // loop_exit
    _

// kernel: v1net_forward.12
$region0: #{v1net_forward.12}
  #allocation0 [shape = 'u32[]', space=smem, size = 0x4, offset = 0x4, fixed_abs, tag = 'smem constant byte address 0x4 - core index']
  #allocation1 [shape = 'u32[72,128]{1,0:T(1,128)}', space=vmem, size = 0x9000, scoped, tag = 'internal scratch']
  %s0 = inlined_call_operand.vmem [shape: f32[128,64], index: 0, kind: input, shape index: {}]
  %s1 = inlined_call_operand.vmem [shape: f32[64,32], index: 1, kind: input, shape index: {}]
  %s2 = inlined_call_operand.vmem [shape: f32[1,32], index: 2, kind: input, shape index: {}]
  %s3 = inlined_call_operand.vmem [shape: f32[1,32], index: 3, kind: input, shape index: {}]
  %s4 = inlined_call_operand.vmem [shape: f32[128,32], index: 4, kind: output, shape index: {}]
  %s5 = sld [smem:[#allocation0]]
  $region49: #{v1net_forward.12} parent=0
    _
  %s7 = ssub.s32 1, %s5
  %s8 = scalar_select 0, %s7, %s5
  loop: start=0, step=1, limit=4
  $region2: #{v1net_forward.12} parent=0 // loop_pre_header
    _
  $region3: #{v1net_forward.12} parent=0 // loop_header
    %s10 = sphi 0, %s14
    %p11 = scmp.ge.s32.totalorder %s10, 4
    %s20 = sphi 0, %s22
    %s23 = sphi 0, %s20
    %s24 = sphi 0, %s23
    %s40 = sphi 0, %s24
    %s44 = sphi 0, %s44
    %s46 = sphi 0, %s44
    %s47 = sphi 0, %s46
    %s61 = sphi 0, %s47
    %s65 = sphi 0, %s65
    %s67 = sphi 0, %s65
    %s68 = sphi 0, %s67
    %s82 = sphi 0, %s68
    %s86 = sphi 0, %s86
    %s88 = sphi 0, %s86
    %s89 = sphi 0, %s88
    %s103 = sphi 0, %s89
    %s109 = sphi 0, %s111
    %s112 = sphi 0, %s109
    %s113 = sphi 0, %s112
    %s129 = sphi 0, %s113
  $region4: #{v1net_forward.12} parent=0 // loop_header_branch
    %13 = sbr.rel (%p11) target = $region8
  $region5: #{v1net_forward.12} parent=0 // loop_body
    %s15 = ssub.s32 %s10, 1
    %s16 = ssub.s32 %s10, 2
    %s17 = sadd.s32 %s10, 1
    %s18 = ssub.s32 %s10, %s17
    %p19 = scmp.eq.s32.totalorder %s18, 0
    %s21 = sadd.s32 %s20, 1
    %s22 = scalar_select %p19, %s20, %s21
    %p25 = pneg %p19
    %p26 = scmp.eq.s32.totalorder %s10, 1
    %p27 = por %p25, %p26
    %p28 = scmp.ne.s32.totalorder %s20, %s23
    %p29 = scmp.eq.s32.totalorder %s10, 0
    %p30 = por %p28, %p29
    %p31 = scmp.ne.s32.totalorder %s20, %s23
    %p32 = scmp.eq.s32.totalorder %s15, 1
    %p33 = por %p31, %p32
    %p34 = scmp.ne.s32.totalorder %s23, %s24
    %p35 = scmp.eq.s32.totalorder %s15, 0
    %p36 = por %p34, %p35
    %p37 = scmp.ne.s32.totalorder %s23, %s24
    %p38 = scmp.eq.s32.totalorder %s16, 1
    %p39 = por %p37, %p38
    %p41 = scmp.ne.s32.totalorder %s24, %s40
    %p42 = scmp.eq.s32.totalorder %s16, 0
    %p43 = por %p41, %p42
    %s45 = sadd.s32 %s44, 1
    %p48 = scmp.eq.s32.totalorder %s10, 1
    %p49 = scmp.ne.s32.totalorder %s44, %s46
    %p50 = scmp.eq.s32.totalorder %s10, 0
    %p51 = por %p49, %p50
    %p52 = scmp.ne.s32.totalorder %s44, %s46
    %p53 = scmp.eq.s32.totalorder %s15, 1
    %p54 = por %p52, %p53
    %p55 = scmp.ne.s32.totalorder %s46, %s47
    %p56 = scmp.eq.s32.totalorder %s15, 0
    %p57 = por %p55, %p56
    %p58 = scmp.ne.s32.totalorder %s46, %s47
    %p59 = scmp.eq.s32.totalorder %s16, 1
    %p60 = por %p58, %p59
    %p62 = scmp.ne.s32.totalorder %s47, %s61
    %p63 = scmp.eq.s32.totalorder %s16, 0
    %p64 = por %p62, %p63
    %s66 = sadd.s32 %s65, 1
    %p69 = scmp.eq.s32.totalorder %s10, 1
    %p70 = scmp.ne.s32.totalorder %s65, %s67
    %p71 = scmp.eq.s32.totalorder %s10, 0
    %p72 = por %p70, %p71
    %p73 = scmp.ne.s32.totalorder %s65, %s67
    %p74 = scmp.eq.s32.totalorder %s15, 1
    %p75 = por %p73, %p74
    %p76 = scmp.ne.s32.totalorder %s67, %s68
    %p77 = scmp.eq.s32.totalorder %s15, 0
    %p78 = por %p76, %p77
    %p79 = scmp.ne.s32.totalorder %s67, %s68
    %p80 = scmp.eq.s32.totalorder %s16, 1
    %p81 = por %p79, %p80
    %p83 = scmp.ne.s32.totalorder %s68, %s82
    %p84 = scmp.eq.s32.totalorder %s16, 0
    %p85 = por %p83, %p84
    %s87 = sadd.s32 %s86, 1
    %p90 = scmp.eq.s32.totalorder %s10, 1
    %p91 = scmp.ne.s32.totalorder %s86, %s88
    %p92 = scmp.eq.s32.totalorder %s10, 0
    %p93 = por %p91, %p92
    %p94 = scmp.ne.s32.totalorder %s86, %s88
    %p95 = scmp.eq.s32.totalorder %s15, 1
    %p96 = por %p94, %p95
    %p97 = scmp.ne.s32.totalorder %s88, %s89
    %p98 = scmp.eq.s32.totalorder %s15, 0
    %p99 = por %p97, %p98
    %p100 = scmp.ne.s32.totalorder %s88, %s89
    %p101 = scmp.eq.s32.totalorder %s16, 1
    %p102 = por %p100, %p101
    %p104 = scmp.ne.s32.totalorder %s89, %s103
    %p105 = scmp.eq.s32.totalorder %s16, 0
    %p106 = por %p104, %p105
    %s107 = ssub.s32 %s10, %s17
    %p108 = scmp.eq.s32.totalorder %s107, 0
    %s110 = sadd.s32 %s109, 1
    %s111 = scalar_select %p108, %s109, %s110
    %p114 = pneg %p108
    %p115 = scmp.eq.s32.totalorder %s10, 1
    %p116 = por %p114, %p115
    %p117 = scmp.ne.s32.totalorder %s109, %s112
    %p118 = scmp.eq.s32.totalorder %s10, 0
    %p119 = por %p117, %p118
    %p120 = scmp.ne.s32.totalorder %s109, %s112
    %p121 = scmp.eq.s32.totalorder %s15, 1
    %p122 = por %p120, %p121
    %p123 = scmp.ne.s32.totalorder %s112, %s113
    %p124 = scmp.eq.s32.totalorder %s15, 0
    %p125 = por %p123, %p124
    %p126 = scmp.ne.s32.totalorder %s112, %s113
    %p127 = scmp.eq.s32.totalorder %s16, 1
    %p128 = por %p126, %p127
    %p130 = scmp.ne.s32.totalorder %s113, %s129
    %p131 = scmp.eq.s32.totalorder %s16, 0
    %p132 = por %p130, %p131
    %p133 = scmp.le.s32.totalorder 1, %s10
    %p134 = scmp.lt.s32.totalorder %s10, 3
    %p135 = pnand %p133, %p134
    %p136 = pneg %p135
    // Predicated region
    $region9: #{v1net_forward.12} parent=5 // pred_check
      _
    $region10: #{v1net_forward.12} parent=5 // pred_check_branch
      %138 = sbr.rel (%p135) target = $region12
    $region11: #{v1net_forward.12} parent=5 // pred_region
      %s139 = ssub.s32 %s10, 1
      // Predicated region
      $region13: #{v1net_forward.12} parent=11 // pred_check
        %p140 = pneg %p57
      $region14: #{v1net_forward.12} parent=11 // pred_check_branch
        %142 = sbr.rel (%p140) target = $region16
      $region15: #{v1net_forward.12} parent=11 // pred_region
        _
      $region16: #{v1net_forward.12} parent=11 // pred_fallthru
        _
      // Predicated region
      $region17: #{v1net_forward.12} parent=11 // pred_check
        %p143 = pneg %p78
      $region18: #{v1net_forward.12} parent=11 // pred_check_branch
        %145 = sbr.rel (%p143) target = $region20
      $region19: #{v1net_forward.12} parent=11 // pred_region
        _
      $region20: #{v1net_forward.12} parent=11 // pred_fallthru
        _
      // Predicated region
      $region21: #{v1net_forward.12} parent=11 // pred_check
        %p146 = pneg %p99
      $region22: #{v1net_forward.12} parent=11 // pred_check_branch
        %148 = sbr.rel (%p146) target = $region24
      $region23: #{v1net_forward.12} parent=11 // pred_region
        _
      $region24: #{v1net_forward.12} parent=11 // pred_fallthru
        _
    $region12: #{v1net_forward.12} parent=5 // pred_fallthru
      _
    %p149 = scmp.lt.s32.totalorder %s10, 2
    // Predicated region
    $region25: #{v1net_forward.12} parent=5 // pred_check
      %p150 = pneg %p149
    $region26: #{v1net_forward.12} parent=5 // pred_check_branch
      %152 = sbr.rel (%p150) target = $region28
    $region27: #{v1net_forward.12} parent=5 // pred_region
      // Predicated region
      $region29: #{v1net_forward.12} parent=27 // pred_check
        %p153 = pneg %p30
      $region30: #{v1net_forward.12} parent=27 // pred_check_branch
        %155 = sbr.rel (%p153) target = $region32
      $region31: #{v1net_forward.12} parent=27 // pred_region
        %s156 = smul.u32 8, %s10
        %p157 = scmp.lt.s32.totalorder %s156, 15
        %s158 = scalar_select %p157, %s156, 15
        %s159 = smul.addr %s158, 8
        %s160 = scalar_lea.vmem %s0, %s159
        %s161 = smul.u32 8, %s10
      $region32: #{v1net_forward.12} parent=27 // pred_fallthru
        _
    $region28: #{v1net_forward.12} parent=5 // pred_fallthru
      _
    %p162 = scmp.le.s32.totalorder 1, %s10
    %p163 = scmp.lt.s32.totalorder %s10, 3
    %p164 = pnand %p162, %p163
    %p165 = pneg %p164
    // Predicated region
    $region33: #{v1net_forward.12} parent=5 // pred_check
      _
    $region34: #{v1net_forward.12} parent=5 // pred_check_branch
      %167 = sbr.rel (%p164) target = $region36
    $region35: #{v1net_forward.12} parent=5 // pred_region
      %s168 = ssub.s32 %s10, 1
      %s169 = smul.u32 8, %s15
      %p170 = scmp.lt.s32.totalorder %s169, 15
      %s171 = scalar_select %p170, %s169, 15
      %s172 = smul.addr %s171, 8
      %s173 = scalar_lea.vmem %s0, %s172
      %p174 = pneg %p36
      %p175 = pneg %p33
      %p176 = pneg %p57
      %p177 = pneg %p54
      %p178 = pneg %p78
      %p179 = pneg %p75
      %p180 = pneg %p99
      %p181 = pneg %p96
      %p182 = pneg %p125
      %p183 = pneg %p122
      %s184 = smul.u32 8, %s15
      %p185 = scmp.lt.s32.totalorder %s184, 15
      %s186 = scalar_select %p185, %s184, 15
      %s187 = smul.addr %s186, 8
      %s188 = scalar_lea.vmem %s4, %s187
      %s189 = smul.u32 8, %s15
      %p190 = scmp.lt.s32.totalorder %s189, 15
      %s191 = scalar_select %p190, %s189, 15
      %s192 = smul.addr %s191, 8
      %s193 = scalar_lea.vmem %s0, %s192
      %s194 = smul.u32 8, %s15
      %s195 = smul.u32 8, %s15
      %p196 = scmp.lt.s32.totalorder %s195, 15
      %s197 = scalar_select %p196, %s195, 15
      %s198 = smul.addr %s197, 8
      %s199 = scalar_lea.vmem %s4, %s198
      %s200 = smul.u32 8, %s15
      %v201 = vld [vmem:[%s193] sm:$0xff]
      %v202 = vld [vmem:[%s193 + $0x8] sm:$0xff]
      %v203 = vld [vmem:[%s193 + $0x10] sm:$0xff]
      %v204 = vld [vmem:[%s193 + $0x18] sm:$0xff]
      %v205 = vld [vmem:[%s193 + $0x20] sm:$0xff]
      %v206 = vld [vmem:[%s193 + $0x28] sm:$0xff]
      %v207 = vld [vmem:[%s193 + $0x30] sm:$0xff]
      %v208 = vld [vmem:[%s193 + $0x38] sm:$0xff]
      %v209 = vld [vmem:[%s1] sm:$0xff]
      %v210 = vld [vmem:[%s1 + $0x8] sm:$0xff]
      %v211 = vld [vmem:[%s1 + $0x10] sm:$0xff]
      %v212 = vld [vmem:[%s1 + $0x18] sm:$0xff]
      %v213 = vld [vmem:[%s1 + $0x20] sm:$0xff]
      %v214 = vld [vmem:[%s1 + $0x28] sm:$0xff]
      %v215 = vld [vmem:[%s1 + $0x30] sm:$0xff]
      %v216 = vld [vmem:[%s1 + $0x38] sm:$0xff]
      %vm217 = vcmask 523264
      %v219 = vsel %vm217, %v201, 0
      %v222 = vsel %vm217, %v202, 0
      %v225 = vsel %vm217, %v203, 0
      %v228 = vsel %vm217, %v204, 0
      %v231 = vsel %vm217, %v205, 0
      %v234 = vsel %vm217, %v206, 0
      %v237 = vsel %vm217, %v207, 0
      %v240 = vsel %vm217, %v208, 0
      %242 = vmatpush.msra.mxu0 0.0
      %243 = vmatpush.msra.mxu0 0.0
      %244 = vmatpush.msra.mxu0 0.0
      %245 = vmatpush.msra.mxu0 0.0
      %246 = vmatpush.msra.mxu0 0.0
      %247 = vmatpush.msra.mxu0 0.0
      %248 = vmatpush.msra.mxu0 0.0
      %249 = vmatpush.msra.mxu0 0.0
      %250 = vmatpush.msra.mxu0 %v216
      %251 = vmatpush.msra.mxu0 %v215
      %252 = vmatpush.msra.mxu0 %v214
      %253 = vmatpush.msra.mxu0 %v213
      %254 = vmatpush.msra.mxu0 %v212
      %255 = vmatpush.msra.mxu0 %v211
      %256 = vmatpush.msra.mxu0 %v210
      %257 = vmatpush.msra.mxu0 %v209
      %258 = vmatmul.f32.gmra.mxu0 %v219
      %v259 = vpop.f32.mrf.mxu0
      %v260 = vadd.f32 0.0, %v259
      %261 = vmatmul.f32.gmra.mxu0 %v222
      %v262 = vpop.f32.mrf.mxu0
      %v263 = vadd.f32 0.0, %v262
      %264 = vmatmul.f32.gmra.mxu0 %v225
      %v265 = vpop.f32.mrf.mxu0
      %v266 = vadd.f32 0.0, %v265
      %267 = vmatmul.f32.gmra.mxu0 %v228
      %v268 = vpop.f32.mrf.mxu0
      %v269 = vadd.f32 0.0, %v268
      %270 = vmatmul.f32.gmra.mxu0 %v231
      %v271 = vpop.f32.mrf.mxu0
      %v272 = vadd.f32 0.0, %v271
      %273 = vmatmul.f32.gmra.mxu0 %v234
      %v274 = vpop.f32.mrf.mxu0
      %v275 = vadd.f32 0.0, %v274
      %276 = vmatmul.f32.gmra.mxu0 %v237
      %v277 = vpop.f32.mrf.mxu0
      %v278 = vadd.f32 0.0, %v277
      %279 = vmatmul.f32.gmra.mxu0 %v240
      %v280 = vpop.f32.mrf.mxu0
      %v281 = vadd.f32 0.0, %v280
      %282 = vdwg.mxu0
      %v283 = vld [vmem:[%s2] sm:$0x1]
      %v285 = vperm.slane %v283, 0
      %v287 = vmul.f32 %v260, %v285
      %v288 = vmul.f32 %v263, %v285
      %v289 = vmul.f32 %v266, %v285
      %v290 = vmul.f32 %v269, %v285
      %v291 = vmul.f32 %v272, %v285
      %v292 = vmul.f32 %v275, %v285
      %v293 = vmul.f32 %v278, %v285
      %v294 = vmul.f32 %v281, %v285
      %v295 = vld [vmem:[%s3] sm:$0x1]
      %v297 = vperm.slane %v295, 0
      %v299 = vadd.f32 %v287, %v297
      %v300 = vadd.f32 %v288, %v297
      %v301 = vadd.f32 %v289, %v297
      %v302 = vadd.f32 %v290, %v297
      %v303 = vadd.f32 %v291, %v297
      %v304 = vadd.f32 %v292, %v297
      %v305 = vadd.f32 %v293, %v297
      %v306 = vadd.f32 %v294, %v297
      %vm307 = vcmp.ge.f32.partialorder %v299, 0.0
      %vm308 = vcmp.ge.f32.partialorder %v300, 0.0
      %vm309 = vcmp.ge.f32.partialorder %v301, 0.0
      %vm310 = vcmp.ge.f32.partialorder %v302, 0.0
      %vm311 = vcmp.ge.f32.partialorder %v303, 0.0
      %vm312 = vcmp.ge.f32.partialorder %v304, 0.0
      %vm313 = vcmp.ge.f32.partialorder %v305, 0.0
      %vm314 = vcmp.ge.f32.partialorder %v306, 0.0
      %v315 = vmul.f32 %v299, 0.01
      %v316 = vmul.f32 %v300, 0.01
      %v317 = vmul.f32 %v301, 0.01
      %v318 = vmul.f32 %v302, 0.01
      %v319 = vmul.f32 %v303, 0.01
      %v320 = vmul.f32 %v304, 0.01
      %v321 = vmul.f32 %v305, 0.01
      %v322 = vmul.f32 %v306, 0.01
      %v323 = vsel %vm307, %v299, %v315
      %v324 = vsel %vm308, %v300, %v316
      %v325 = vsel %vm309, %v301, %v317
      %v326 = vsel %vm310, %v302, %v318
      %v327 = vsel %vm311, %v303, %v319
      %v328 = vsel %vm312, %v304, %v320
      %v329 = vsel %vm313, %v305, %v321
      %v330 = vsel %vm314, %v306, %v322
      %vm331 = vcmask 261120
      %332 = vst.msk [vmem:[%s199] sm:$0xff] %vm331, %v323
      %333 = vst.msk [vmem:[%s199 + $0x8] sm:$0xff] %vm331, %v324
      %334 = vst.msk [vmem:[%s199 + $0x10] sm:$0xff] %vm331, %v325
      %335 = vst.msk [vmem:[%s199 + $0x18] sm:$0xff] %vm331, %v326
      %336 = vst.msk [vmem:[%s199 + $0x20] sm:$0xff] %vm331, %v327
      %337 = vst.msk [vmem:[%s199 + $0x28] sm:$0xff] %vm331, %v328
      %338 = vst.msk [vmem:[%s199 + $0x30] sm:$0xff] %vm331, %v329
      %339 = vst.msk [vmem:[%s199 + $0x38] sm:$0xff] %vm331, %v330
      %s340 = smul.u32 8, %s15
      %p341 = scmp.lt.s32.totalorder %s340, 15
      %s342 = scalar_select %p341, %s340, 15
      %s343 = smul.addr %s342, 8
      %s344 = scalar_lea.vmem %s4, %s343
      // Predicated region
      $region37: #{v1net_forward.12} parent=35 // pred_check
        %p345 = pneg %p122
      $region38: #{v1net_forward.12} parent=35 // pred_check_branch
        %347 = sbr.rel (%p345) target = $region40
      $region39: #{v1net_forward.12} parent=35 // pred_region
        %s348 = smul.u32 8, %s15
      $region40: #{v1net_forward.12} parent=35 // pred_fallthru
        _
    $region36: #{v1net_forward.12} parent=5 // pred_fallthru
      _
    %p349 = scmp.le.s32.totalorder 2, %s10
    // Predicated region
    $region41: #{v1net_forward.12} parent=5 // pred_check
      %p350 = pneg %p349
    $region42: #{v1net_forward.12} parent=5 // pred_check_branch
      %352 = sbr.rel (%p350) target = $region44
    $region43: #{v1net_forward.12} parent=5 // pred_region
      %s353 = ssub.s32 %s10, 2
      // Predicated region
      $region45: #{v1net_forward.12} parent=43 // pred_check
        %p354 = pneg %p128
      $region46: #{v1net_forward.12} parent=43 // pred_check_branch
        %356 = sbr.rel (%p354) target = $region48
      $region47: #{v1net_forward.12} parent=43 // pred_region
        %s357 = smul.u32 8, %s16
        %p358 = scmp.lt.s32.totalorder %s357, 15
        %s359 = scalar_select %p358, %s357, 15
        %s360 = smul.addr %s359, 8
        %s361 = scalar_lea.vmem %s4, %s360
      $region48: #{v1net_forward.12} parent=43 // pred_fallthru
        _
    $region44: #{v1net_forward.12} parent=5 // pred_fallthru
      _
  $region6: #{v1net_forward.12} parent=0 // loop_footer
    %s14 = sadd.s32 1, %s10
  $region7: #{v1net_forward.12} parent=0 // loop_footer_branch
    %9 = sbr.rel target = $region3
  $region8: #{v1net_forward.12} parent=0 // loop_exit
    _

</llo_original>
